<compile_context>
chip_gen: v6e
topology: v6e:2x2x1
jax: 0.10.0
libtpu: 0.0.40
codegen_flags: <defaults>
</compile_context>

<pallas_src>
import jax
import jax.numpy as jnp
import numpy as np
from jax import lax
from jax.experimental import pallas as pl
from jax.experimental.pallas import tpu as pltpu

# ----------------------- config (small synthetic shapes) ---------------------
B = 2      # batch
L = 8      # sequence length (pad_size)
E = 32     # config.embed
H = 32     # config.hidden_size
H2 = 64    # config.hidden_size2
C = 4      # config.num_classes
V = 100    # config.n_vocab


# ------------------------- fused forward-pass kernel -------------------------
def _fused_kernel(x_ref, wih_f_ref, whh_f_ref, b_f_ref,
                  wih_b_ref, whh_b_ref, b_b_ref,
                  w_attn_ref, w1_ref, b1_ref, wc_ref, bc_ref,
                  out_ref):
    """x_ref: (L*B, E) time-major flattened embeddings (row index = t*B + b)."""
    x = x_ref[...]                                           # (L*B, E)

    # Hoisted input projections (bias folded in): one MXU matmul per direction.
    xg_f = jnp.dot(x, wih_f_ref[...],
                   preferred_element_type=jnp.float32) + b_f_ref[...]   # (L*B, 4H)
    xg_b = jnp.dot(x, wih_b_ref[...],
                   preferred_element_type=jnp.float32) + b_b_ref[...]   # (L*B, 4H)

    whh_f = whh_f_ref[...]                                   # (H, 4H)
    whh_b = whh_b_ref[...]                                   # (H, 4H)

    def cell(xg_t, h, c, whh):
        # PyTorch gate order: i, f, g, o
        gates = xg_t + jnp.dot(h, whh, preferred_element_type=jnp.float32)
        i = jax.nn.sigmoid(gates[:, 0 * H:1 * H])
        f = jax.nn.sigmoid(gates[:, 1 * H:2 * H])
        g = jnp.tanh(gates[:, 2 * H:3 * H])
        o = jax.nn.sigmoid(gates[:, 3 * H:4 * H])
        c_new = f * c + i * g
        h_new = o * jnp.tanh(c_new)
        return h_new, c_new

    zeros = jnp.zeros((B, H), jnp.float32)

    # Forward direction (fully unrolled, static contiguous slices).
    h, c = zeros, zeros
    hf = []
    for t in range(L):
        h, c = cell(xg_f[t * B:(t + 1) * B, :], h, c, whh_f)
        hf.append(h)

    # Backward direction.
    h, c = zeros, zeros
    hb = [None] * L
    for t in range(L - 1, -1, -1):
        h, c = cell(xg_b[t * B:(t + 1) * B, :], h, c, whh_b)
        hb[t] = h

    # ---------------- attention over the sequence (softmax along L) ----------
    w_attn = w_attn_ref[...]                                 # (1, 2H)
    wf = w_attn[:, 0:H]                                      # (1, H) fwd half
    wb = w_attn[:, H:2 * H]                                  # (1, H) bwd half
    scores = []
    for t in range(L):
        s_t = (jnp.sum(jnp.tanh(hf[t]) * wf, axis=-1, keepdims=True)
               + jnp.sum(jnp.tanh(hb[t]) * wb, axis=-1, keepdims=True))
        scores.append(s_t)                                   # (B, 1)

    m = scores[0]
    for t in range(1, L):
        m = jnp.maximum(m, scores[t])
    es = [jnp.exp(s - m) for s in scores]
    denom = es[0]
    for t in range(1, L):
        denom = denom + es[t]
    inv = pl.reciprocal(denom, approx=True)                  # (B, 1)

    ctx_f = jnp.zeros((B, H), jnp.float32)
    ctx_b = jnp.zeros((B, H), jnp.float32)
    for t in range(L):
        a_t = es[t] * inv                                    # (B, 1)
        ctx_f = ctx_f + a_t * hf[t]
        ctx_b = ctx_b + a_t * hb[t]
    ctx_f = jnp.maximum(ctx_f, 0.0)                          # relu (elementwise)
    ctx_b = jnp.maximum(ctx_b, 0.0)

    # fc1 (2H -> H2) with its weight split into fwd/bwd halves (no concat),
    # then fc (H2 -> C).
    w1 = w1_ref[...]                                         # (2H, H2)
    out1 = (jnp.dot(ctx_f, w1[0:H, :], preferred_element_type=jnp.float32)
            + jnp.dot(ctx_b, w1[H:2 * H, :], preferred_element_type=jnp.float32)
            + b1_ref[...])                                   # (B, H2)
    out2 = jnp.dot(out1, wc_ref[...],
                   preferred_element_type=jnp.float32) + bc_ref[...]   # (B, C)
    out_ref[...] = out2.astype(out_ref.dtype)


def fused_forward(x_flat, wih_f, whh_f, b_f, wih_b, whh_b, b_b,
                  w_attn, w1, b1, wc, bc):
    """Single fused pallas_call (no grid): everything lives in VMEM."""
    vmem = pltpu.MemorySpace.VMEM
    return pl.pallas_call(
        _fused_kernel,
        out_shape=jax.ShapeDtypeStruct((B, C), jnp.float32),
        in_specs=[pl.BlockSpec(memory_space=vmem) for _ in range(12)],
        out_specs=pl.BlockSpec(memory_space=vmem),
    )(x_flat, wih_f, whh_f, b_f, wih_b, whh_b, b_b, w_attn, w1, b1, wc, bc)


# --------------------------------- model --------------------------------------
def init_params(key):
    ks = jax.random.split(key, 12)
    s = 1.0 / np.sqrt(H)
    u = lambda k, shape, scale=s: jax.random.uniform(
        k, shape, jnp.float32, -scale, scale)
    emb = jax.random.normal(ks[0], (V, E), jnp.float32) * 0.1
    emb = emb.at[V - 1].set(0.0)  # padding_idx = n_vocab - 1
    params = dict(
        embedding=emb,
        # forward-direction LSTM weights (stored pre-transposed: (in, 4H));
        # b = b_ih + b_hh pre-fused.
        wih_f=u(ks[1], (E, 4 * H)), whh_f=u(ks[2], (H, 4 * H)),
        b_f=u(ks[3], (1, 4 * H)),
        # backward-direction LSTM weights
        wih_b=u(ks[4], (E, 4 * H)), whh_b=u(ks[5], (H, 4 * H)),
        b_b=u(ks[6], (1, 4 * H)),
        # attention vector w (nn.Parameter of size 2H); random (non-zero) init
        w_attn=jax.random.normal(ks[7], (1, 2 * H), jnp.float32) * 0.1,
        # fc1: Linear(2H, H2); fc: Linear(H2, C) -- stored as (in, out)
        w1=u(ks[8], (2 * H, H2), 1.0 / np.sqrt(2 * H)),
        b1=u(ks[9], (1, H2), 1.0 / np.sqrt(2 * H)),
        wc=u(ks[10], (H2, C), 1.0 / np.sqrt(H2)),
        bc=u(ks[11], (1, C), 1.0 / np.sqrt(H2)),
    )
    return params


@jax.jit
def model_forward(tokens, params):
    # Embedding gather (XLA glue).  Produced time-major & flattened so the
    # kernel's per-timestep slices [t*B:(t+1)*B] are contiguous and static.
    x_flat = params["embedding"][tokens.T].reshape(L * B, E)   # (L*B, E)
    return fused_forward(
        x_flat, params["wih_f"], params["whh_f"], params["b_f"],
        params["wih_b"], params["whh_b"], params["b_b"],
        params["w_attn"], params["w1"], params["b1"],
        params["wc"], params["bc"])


# --------------------------- pure-JAX reference --------------------------------
def _ref_lstm_scan(x_tm, wih, whh, b, reverse):
    def cell(carry, x_t):
        h, c = carry
        gates = (x_t @ wih + h @ whh + b)
        i, f, g, o = jnp.split(gates, 4, axis=-1)
        i, f, o = jax.nn.sigmoid(i), jax.nn.sigmoid(f), jax.nn.sigmoid(o)
        g = jnp.tanh(g)
        c = f * c + i * g
        h = o * jnp.tanh(c)
        return (h, c), h
    h0 = jnp.zeros((B, H), jnp.float32)
    c0 = jnp.zeros((B, H), jnp.float32)
    xs = x_tm[::-1] if reverse else x_tm
    _, hs = lax.scan(cell, (h0, c0), xs)
    return hs[::-1] if reverse else hs


def model_forward_ref(tokens, params):
    emb = params["embedding"][tokens]
    x_tm = jnp.transpose(emb, (1, 0, 2))
    h_f = _ref_lstm_scan(x_tm, params["wih_f"], params["whh_f"],
                         params["b_f"], False)
    h_b = _ref_lstm_scan(x_tm, params["wih_b"], params["whh_b"],
                         params["b_b"], True)
    H_all = jnp.concatenate(
        [jnp.transpose(h_f, (1, 0, 2)), jnp.transpose(h_b, (1, 0, 2))], axis=-1)
    M = jnp.tanh(H_all)
    alpha = jax.nn.softmax(jnp.einsum("bld,d->bl", M, params["w_attn"][0]),
                           axis=1)[..., None]
    out = jnp.sum(H_all * alpha, axis=1)
    out = jax.nn.relu(out)
    out = out @ params["w1"] + params["b1"][0]
    out = out @ params["wc"] + params["bc"][0]
    return out


# ----------------------------------- main --------------------------------------
if __name__ == "__main__":
    key = jax.random.PRNGKey(0)
    pkey, tkey = jax.random.split(key)
    params = init_params(pkey)
    tokens = jax.random.randint(tkey, (B, L), 0, V, dtype=jnp.int32)

    out = model_forward(tokens, params)
    out = jax.block_until_ready(out)

    ref = jax.block_until_ready(model_forward_ref(tokens, params))
    np.testing.assert_allclose(np.asarray(out), np.asarray(ref),
                               rtol=1e-2, atol=1e-2)
    assert out.shape == (B, C)
    print("KERNEL_OK")
</pallas_src>

<mosaic_0001>
module attributes {stable_mosaic.version = 11 : i64} {
  func.func @_fused_kernel(%arg0: memref<16x32xf32, #tpu.memory_space<vmem>>, %arg1: memref<32x128xf32, #tpu.memory_space<vmem>>, %arg2: memref<32x128xf32, #tpu.memory_space<vmem>>, %arg3: memref<1x128xf32, #tpu.memory_space<vmem>>, %arg4: memref<32x128xf32, #tpu.memory_space<vmem>>, %arg5: memref<32x128xf32, #tpu.memory_space<vmem>>, %arg6: memref<1x128xf32, #tpu.memory_space<vmem>>, %arg7: memref<1x64xf32, #tpu.memory_space<vmem>>, %arg8: memref<64x64xf32, #tpu.memory_space<vmem>>, %arg9: memref<1x64xf32, #tpu.memory_space<vmem>>, %arg10: memref<64x4xf32, #tpu.memory_space<vmem>>, %arg11: memref<1x4xf32, #tpu.memory_space<vmem>>, %arg12: memref<2x4xf32, #tpu.memory_space<vmem>>) attributes {dimension_semantics = [], scalar_prefetch = 0 : i64, scratch_operands = 0 : i64, tpu.core_type = #tpu.core_type<tc>} {
    %c0 = arith.constant 0 : index
    %c0_0 = arith.constant 0 : index
    %0 = vector.load %arg0[%c0, %c0_0] : memref<16x32xf32, #tpu.memory_space<vmem>>, vector<16x32xf32>
    %c0_1 = arith.constant 0 : index
    %c0_2 = arith.constant 0 : index
    %1 = vector.load %arg1[%c0_1, %c0_2] : memref<32x128xf32, #tpu.memory_space<vmem>>, vector<32x128xf32>
    %cst = arith.constant dense<0.000000e+00> : vector<16x128xf32>
    %2 = tpu.matmul %0, %1, %cst {dimension_numbers = #tpu.dot_dimension_numbers<[1], [0], [0], [1], [0, 0, 1, 1], [], []>} : vector<16x32xf32>, vector<32x128xf32>, vector<16x128xf32> -> vector<16x128xf32>
    %c0_3 = arith.constant 0 : index
    %c0_4 = arith.constant 0 : index
    %3 = vector.load %arg3[%c0_3, %c0_4] : memref<1x128xf32, #tpu.memory_space<vmem>>, vector<1x128xf32>
    %4 = vector.broadcast %3 : vector<1x128xf32> to vector<16x128xf32>
    %5 = arith.addf %2, %4 : vector<16x128xf32>
    %c0_5 = arith.constant 0 : index
    %c0_6 = arith.constant 0 : index
    %6 = vector.load %arg4[%c0_5, %c0_6] : memref<32x128xf32, #tpu.memory_space<vmem>>, vector<32x128xf32>
    %cst_7 = arith.constant dense<0.000000e+00> : vector<16x128xf32>
    %7 = tpu.matmul %0, %6, %cst_7 {dimension_numbers = #tpu.dot_dimension_numbers<[1], [0], [0], [1], [0, 0, 1, 1], [], []>} : vector<16x32xf32>, vector<32x128xf32>, vector<16x128xf32> -> vector<16x128xf32>
    %c0_8 = arith.constant 0 : index
    %c0_9 = arith.constant 0 : index
    %8 = vector.load %arg6[%c0_8, %c0_9] : memref<1x128xf32, #tpu.memory_space<vmem>>, vector<1x128xf32>
    %9 = vector.broadcast %8 : vector<1x128xf32> to vector<16x128xf32>
    %10 = arith.addf %7, %9 : vector<16x128xf32>
    %c0_10 = arith.constant 0 : index
    %c0_11 = arith.constant 0 : index
    %11 = vector.load %arg2[%c0_10, %c0_11] : memref<32x128xf32, #tpu.memory_space<vmem>>, vector<32x128xf32>
    %c0_12 = arith.constant 0 : index
    %c0_13 = arith.constant 0 : index
    %12 = vector.load %arg5[%c0_12, %c0_13] : memref<32x128xf32, #tpu.memory_space<vmem>>, vector<32x128xf32>
    %cst_14 = arith.constant 0.000000e+00 : f32
    %13 = vector.broadcast %cst_14 : f32 to vector<2x32xf32>
    %14 = vector.extract_strided_slice %5 {offsets = [0, 0], sizes = [2, 128], strides = [1, 1]} : vector<16x128xf32> to vector<2x128xf32>
    %cst_15 = arith.constant dense<0.000000e+00> : vector<2x128xf32>
    %15 = tpu.matmul %13, %11, %cst_15 {dimension_numbers = #tpu.dot_dimension_numbers<[1], [0], [0], [1], [0, 0, 1, 1], [], []>} : vector<2x32xf32>, vector<32x128xf32>, vector<2x128xf32> -> vector<2x128xf32>
    %16 = arith.addf %14, %15 : vector<2x128xf32>
    %17 = vector.extract_strided_slice %16 {offsets = [0, 0], sizes = [2, 32], strides = [1, 1]} : vector<2x128xf32> to vector<2x32xf32>
    %18 = arith.negf %17 : vector<2x32xf32>
    %19 = math.exp %18 : vector<2x32xf32>
    %cst_16 = arith.constant 1.000000e+00 : f32
    %20 = vector.broadcast %cst_16 : f32 to vector<2x32xf32>
    %21 = arith.addf %20, %19 : vector<2x32xf32>
    %22 = arith.divf %20, %21 : vector<2x32xf32>
    %23 = vector.extract_strided_slice %16 {offsets = [0, 32], sizes = [2, 32], strides = [1, 1]} : vector<2x128xf32> to vector<2x32xf32>
    %24 = arith.negf %23 : vector<2x32xf32>
    %25 = math.exp %24 : vector<2x32xf32>
    %cst_17 = arith.constant 1.000000e+00 : f32
    %26 = vector.broadcast %cst_17 : f32 to vector<2x32xf32>
    %27 = arith.addf %26, %25 : vector<2x32xf32>
    %28 = arith.divf %26, %27 : vector<2x32xf32>
    %29 = vector.extract_strided_slice %16 {offsets = [0, 64], sizes = [2, 32], strides = [1, 1]} : vector<2x128xf32> to vector<2x32xf32>
    %30 = math.tanh %29 : vector<2x32xf32>
    %31 = vector.extract_strided_slice %16 {offsets = [0, 96], sizes = [2, 32], strides = [1, 1]} : vector<2x128xf32> to vector<2x32xf32>
    %32 = arith.negf %31 : vector<2x32xf32>
    %33 = math.exp %32 : vector<2x32xf32>
    %cst_18 = arith.constant 1.000000e+00 : f32
    %34 = vector.broadcast %cst_18 : f32 to vector<2x32xf32>
    %35 = arith.addf %34, %33 : vector<2x32xf32>
    %36 = arith.divf %34, %35 : vector<2x32xf32>
    %37 = arith.mulf %28, %13 : vector<2x32xf32>
    %38 = arith.mulf %22, %30 : vector<2x32xf32>
    %39 = arith.addf %37, %38 : vector<2x32xf32>
    %40 = math.tanh %39 : vector<2x32xf32>
    %41 = arith.mulf %36, %40 : vector<2x32xf32>
    %42 = vector.extract_strided_slice %5 {offsets = [2, 0], sizes = [2, 128], strides = [1, 1]} : vector<16x128xf32> to vector<2x128xf32>
    %cst_19 = arith.constant dense<0.000000e+00> : vector<2x128xf32>
    %43 = tpu.matmul %41, %11, %cst_19 {dimension_numbers = #tpu.dot_dimension_numbers<[1], [0], [0], [1], [0, 0, 1, 1], [], []>} : vector<2x32xf32>, vector<32x128xf32>, vector<2x128xf32> -> vector<2x128xf32>
    %44 = arith.addf %42, %43 : vector<2x128xf32>
    %45 = vector.extract_strided_slice %44 {offsets = [0, 0], sizes = [2, 32], strides = [1, 1]} : vector<2x128xf32> to vector<2x32xf32>
    %46 = arith.negf %45 : vector<2x32xf32>
    %47 = math.exp %46 : vector<2x32xf32>
    %cst_20 = arith.constant 1.000000e+00 : f32
    %48 = vector.broadcast %cst_20 : f32 to vector<2x32xf32>
    %49 = arith.addf %48, %47 : vector<2x32xf32>
    %50 = arith.divf %48, %49 : vector<2x32xf32>
    %51 = vector.extract_strided_slice %44 {offsets = [0, 32], sizes = [2, 32], strides = [1, 1]} : vector<2x128xf32> to vector<2x32xf32>
    %52 = arith.negf %51 : vector<2x32xf32>
    %53 = math.exp %52 : vector<2x32xf32>
    %cst_21 = arith.constant 1.000000e+00 : f32
    %54 = vector.broadcast %cst_21 : f32 to vector<2x32xf32>
    %55 = arith.addf %54, %53 : vector<2x32xf32>
    %56 = arith.divf %54, %55 : vector<2x32xf32>
    %57 = vector.extract_strided_slice %44 {offsets = [0, 64], sizes = [2, 32], strides = [1, 1]} : vector<2x128xf32> to vector<2x32xf32>
    %58 = math.tanh %57 : vector<2x32xf32>
    %59 = vector.extract_strided_slice %44 {offsets = [0, 96], sizes = [2, 32], strides = [1, 1]} : vector<2x128xf32> to vector<2x32xf32>
    %60 = arith.negf %59 : vector<2x32xf32>
    %61 = math.exp %60 : vector<2x32xf32>
    %cst_22 = arith.constant 1.000000e+00 : f32
    %62 = vector.broadcast %cst_22 : f32 to vector<2x32xf32>
    %63 = arith.addf %62, %61 : vector<2x32xf32>
    %64 = arith.divf %62, %63 : vector<2x32xf32>
    %65 = arith.mulf %56, %39 : vector<2x32xf32>
    %66 = arith.mulf %50, %58 : vector<2x32xf32>
    %67 = arith.addf %65, %66 : vector<2x32xf32>
    %68 = math.tanh %67 : vector<2x32xf32>
    %69 = arith.mulf %64, %68 : vector<2x32xf32>
    %70 = vector.extract_strided_slice %5 {offsets = [4, 0], sizes = [2, 128], strides = [1, 1]} : vector<16x128xf32> to vector<2x128xf32>
    %cst_23 = arith.constant dense<0.000000e+00> : vector<2x128xf32>
    %71 = tpu.matmul %69, %11, %cst_23 {dimension_numbers = #tpu.dot_dimension_numbers<[1], [0], [0], [1], [0, 0, 1, 1], [], []>} : vector<2x32xf32>, vector<32x128xf32>, vector<2x128xf32> -> vector<2x128xf32>
    %72 = arith.addf %70, %71 : vector<2x128xf32>
    %73 = vector.extract_strided_slice %72 {offsets = [0, 0], sizes = [2, 32], strides = [1, 1]} : vector<2x128xf32> to vector<2x32xf32>
    %74 = arith.negf %73 : vector<2x32xf32>
    %75 = math.exp %74 : vector<2x32xf32>
    %cst_24 = arith.constant 1.000000e+00 : f32
    %76 = vector.broadcast %cst_24 : f32 to vector<2x32xf32>
    %77 = arith.addf %76, %75 : vector<2x32xf32>
    %78 = arith.divf %76, %77 : vector<2x32xf32>
    %79 = vector.extract_strided_slice %72 {offsets = [0, 32], sizes = [2, 32], strides = [1, 1]} : vector<2x128xf32> to vector<2x32xf32>
    %80 = arith.negf %79 : vector<2x32xf32>
    %81 = math.exp %80 : vector<2x32xf32>
    %cst_25 = arith.constant 1.000000e+00 : f32
    %82 = vector.broadcast %cst_25 : f32 to vector<2x32xf32>
    %83 = arith.addf %82, %81 : vector<2x32xf32>
    %84 = arith.divf %82, %83 : vector<2x32xf32>
    %85 = vector.extract_strided_slice %72 {offsets = [0, 64], sizes = [2, 32], strides = [1, 1]} : vector<2x128xf32> to vector<2x32xf32>
    %86 = math.tanh %85 : vector<2x32xf32>
    %87 = vector.extract_strided_slice %72 {offsets = [0, 96], sizes = [2, 32], strides = [1, 1]} : vector<2x128xf32> to vector<2x32xf32>
    %88 = arith.negf %87 : vector<2x32xf32>
    %89 = math.exp %88 : vector<2x32xf32>
    %cst_26 = arith.constant 1.000000e+00 : f32
    %90 = vector.broadcast %cst_26 : f32 to vector<2x32xf32>
    %91 = arith.addf %90, %89 : vector<2x32xf32>
    %92 = arith.divf %90, %91 : vector<2x32xf32>
    %93 = arith.mulf %84, %67 : vector<2x32xf32>
    %94 = arith.mulf %78, %86 : vector<2x32xf32>
    %95 = arith.addf %93, %94 : vector<2x32xf32>
    %96 = math.tanh %95 : vector<2x32xf32>
    %97 = arith.mulf %92, %96 : vector<2x32xf32>
    %98 = vector.extract_strided_slice %5 {offsets = [6, 0], sizes = [2, 128], strides = [1, 1]} : vector<16x128xf32> to vector<2x128xf32>
    %cst_27 = arith.constant dense<0.000000e+00> : vector<2x128xf32>
    %99 = tpu.matmul %97, %11, %cst_27 {dimension_numbers = #tpu.dot_dimension_numbers<[1], [0], [0], [1], [0, 0, 1, 1], [], []>} : vector<2x32xf32>, vector<32x128xf32>, vector<2x128xf32> -> vector<2x128xf32>
    %100 = arith.addf %98, %99 : vector<2x128xf32>
    %101 = vector.extract_strided_slice %100 {offsets = [0, 0], sizes = [2, 32], strides = [1, 1]} : vector<2x128xf32> to vector<2x32xf32>
    %102 = arith.negf %101 : vector<2x32xf32>
    %103 = math.exp %102 : vector<2x32xf32>
    %cst_28 = arith.constant 1.000000e+00 : f32
    %104 = vector.broadcast %cst_28 : f32 to vector<2x32xf32>
    %105 = arith.addf %104, %103 : vector<2x32xf32>
    %106 = arith.divf %104, %105 : vector<2x32xf32>
    %107 = vector.extract_strided_slice %100 {offsets = [0, 32], sizes = [2, 32], strides = [1, 1]} : vector<2x128xf32> to vector<2x32xf32>
    %108 = arith.negf %107 : vector<2x32xf32>
    %109 = math.exp %108 : vector<2x32xf32>
    %cst_29 = arith.constant 1.000000e+00 : f32
    %110 = vector.broadcast %cst_29 : f32 to vector<2x32xf32>
    %111 = arith.addf %110, %109 : vector<2x32xf32>
    %112 = arith.divf %110, %111 : vector<2x32xf32>
    %113 = vector.extract_strided_slice %100 {offsets = [0, 64], sizes = [2, 32], strides = [1, 1]} : vector<2x128xf32> to vector<2x32xf32>
    %114 = math.tanh %113 : vector<2x32xf32>
    %115 = vector.extract_strided_slice %100 {offsets = [0, 96], sizes = [2, 32], strides = [1, 1]} : vector<2x128xf32> to vector<2x32xf32>
    %116 = arith.negf %115 : vector<2x32xf32>
    %117 = math.exp %116 : vector<2x32xf32>
    %cst_30 = arith.constant 1.000000e+00 : f32
    %118 = vector.broadcast %cst_30 : f32 to vector<2x32xf32>
    %119 = arith.addf %118, %117 : vector<2x32xf32>
    %120 = arith.divf %118, %119 : vector<2x32xf32>
    %121 = arith.mulf %112, %95 : vector<2x32xf32>
    %122 = arith.mulf %106, %114 : vector<2x32xf32>
    %123 = arith.addf %121, %122 : vector<2x32xf32>
    %124 = math.tanh %123 : vector<2x32xf32>
    %125 = arith.mulf %120, %124 : vector<2x32xf32>
    %126 = vector.extract_strided_slice %5 {offsets = [8, 0], sizes = [2, 128], strides = [1, 1]} : vector<16x128xf32> to vector<2x128xf32>
    %cst_31 = arith.constant dense<0.000000e+00> : vector<2x128xf32>
    %127 = tpu.matmul %125, %11, %cst_31 {dimension_numbers = #tpu.dot_dimension_numbers<[1], [0], [0], [1], [0, 0, 1, 1], [], []>} : vector<2x32xf32>, vector<32x128xf32>, vector<2x128xf32> -> vector<2x128xf32>
    %128 = arith.addf %126, %127 : vector<2x128xf32>
    %129 = vector.extract_strided_slice %128 {offsets = [0, 0], sizes = [2, 32], strides = [1, 1]} : vector<2x128xf32> to vector<2x32xf32>
    %130 = arith.negf %129 : vector<2x32xf32>
    %131 = math.exp %130 : vector<2x32xf32>
    %cst_32 = arith.constant 1.000000e+00 : f32
    %132 = vector.broadcast %cst_32 : f32 to vector<2x32xf32>
    %133 = arith.addf %132, %131 : vector<2x32xf32>
    %134 = arith.divf %132, %133 : vector<2x32xf32>
    %135 = vector.extract_strided_slice %128 {offsets = [0, 32], sizes = [2, 32], strides = [1, 1]} : vector<2x128xf32> to vector<2x32xf32>
    %136 = arith.negf %135 : vector<2x32xf32>
    %137 = math.exp %136 : vector<2x32xf32>
    %cst_33 = arith.constant 1.000000e+00 : f32
    %138 = vector.broadcast %cst_33 : f32 to vector<2x32xf32>
    %139 = arith.addf %138, %137 : vector<2x32xf32>
    %140 = arith.divf %138, %139 : vector<2x32xf32>
    %141 = vector.extract_strided_slice %128 {offsets = [0, 64], sizes = [2, 32], strides = [1, 1]} : vector<2x128xf32> to vector<2x32xf32>
    %142 = math.tanh %141 : vector<2x32xf32>
    %143 = vector.extract_strided_slice %128 {offsets = [0, 96], sizes = [2, 32], strides = [1, 1]} : vector<2x128xf32> to vector<2x32xf32>
    %144 = arith.negf %143 : vector<2x32xf32>
    %145 = math.exp %144 : vector<2x32xf32>
    %cst_34 = arith.constant 1.000000e+00 : f32
    %146 = vector.broadcast %cst_34 : f32 to vector<2x32xf32>
    %147 = arith.addf %146, %145 : vector<2x32xf32>
    %148 = arith.divf %146, %147 : vector<2x32xf32>
    %149 = arith.mulf %140, %123 : vector<2x32xf32>
    %150 = arith.mulf %134, %142 : vector<2x32xf32>
    %151 = arith.addf %149, %150 : vector<2x32xf32>
    %152 = math.tanh %151 : vector<2x32xf32>
    %153 = arith.mulf %148, %152 : vector<2x32xf32>
    %154 = vector.extract_strided_slice %5 {offsets = [10, 0], sizes = [2, 128], strides = [1, 1]} : vector<16x128xf32> to vector<2x128xf32>
    %cst_35 = arith.constant dense<0.000000e+00> : vector<2x128xf32>
    %155 = tpu.matmul %153, %11, %cst_35 {dimension_numbers = #tpu.dot_dimension_numbers<[1], [0], [0], [1], [0, 0, 1, 1], [], []>} : vector<2x32xf32>, vector<32x128xf32>, vector<2x128xf32> -> vector<2x128xf32>
    %156 = arith.addf %154, %155 : vector<2x128xf32>
    %157 = vector.extract_strided_slice %156 {offsets = [0, 0], sizes = [2, 32], strides = [1, 1]} : vector<2x128xf32> to vector<2x32xf32>
    %158 = arith.negf %157 : vector<2x32xf32>
    %159 = math.exp %158 : vector<2x32xf32>
    %cst_36 = arith.constant 1.000000e+00 : f32
    %160 = vector.broadcast %cst_36 : f32 to vector<2x32xf32>
    %161 = arith.addf %160, %159 : vector<2x32xf32>
    %162 = arith.divf %160, %161 : vector<2x32xf32>
    %163 = vector.extract_strided_slice %156 {offsets = [0, 32], sizes = [2, 32], strides = [1, 1]} : vector<2x128xf32> to vector<2x32xf32>
    %164 = arith.negf %163 : vector<2x32xf32>
    %165 = math.exp %164 : vector<2x32xf32>
    %cst_37 = arith.constant 1.000000e+00 : f32
    %166 = vector.broadcast %cst_37 : f32 to vector<2x32xf32>
    %167 = arith.addf %166, %165 : vector<2x32xf32>
    %168 = arith.divf %166, %167 : vector<2x32xf32>
    %169 = vector.extract_strided_slice %156 {offsets = [0, 64], sizes = [2, 32], strides = [1, 1]} : vector<2x128xf32> to vector<2x32xf32>
    %170 = math.tanh %169 : vector<2x32xf32>
    %171 = vector.extract_strided_slice %156 {offsets = [0, 96], sizes = [2, 32], strides = [1, 1]} : vector<2x128xf32> to vector<2x32xf32>
    %172 = arith.negf %171 : vector<2x32xf32>
    %173 = math.exp %172 : vector<2x32xf32>
    %cst_38 = arith.constant 1.000000e+00 : f32
    %174 = vector.broadcast %cst_38 : f32 to vector<2x32xf32>
    %175 = arith.addf %174, %173 : vector<2x32xf32>
    %176 = arith.divf %174, %175 : vector<2x32xf32>
    %177 = arith.mulf %168, %151 : vector<2x32xf32>
    %178 = arith.mulf %162, %170 : vector<2x32xf32>
    %179 = arith.addf %177, %178 : vector<2x32xf32>
    %180 = math.tanh %179 : vector<2x32xf32>
    %181 = arith.mulf %176, %180 : vector<2x32xf32>
    %182 = vector.extract_strided_slice %5 {offsets = [12, 0], sizes = [2, 128], strides = [1, 1]} : vector<16x128xf32> to vector<2x128xf32>
    %cst_39 = arith.constant dense<0.000000e+00> : vector<2x128xf32>
    %183 = tpu.matmul %181, %11, %cst_39 {dimension_numbers = #tpu.dot_dimension_numbers<[1], [0], [0], [1], [0, 0, 1, 1], [], []>} : vector<2x32xf32>, vector<32x128xf32>, vector<2x128xf32> -> vector<2x128xf32>
    %184 = arith.addf %182, %183 : vector<2x128xf32>
    %185 = vector.extract_strided_slice %184 {offsets = [0, 0], sizes = [2, 32], strides = [1, 1]} : vector<2x128xf32> to vector<2x32xf32>
    %186 = arith.negf %185 : vector<2x32xf32>
    %187 = math.exp %186 : vector<2x32xf32>
    %cst_40 = arith.constant 1.000000e+00 : f32
    %188 = vector.broadcast %cst_40 : f32 to vector<2x32xf32>
    %189 = arith.addf %188, %187 : vector<2x32xf32>
    %190 = arith.divf %188, %189 : vector<2x32xf32>
    %191 = vector.extract_strided_slice %184 {offsets = [0, 32], sizes = [2, 32], strides = [1, 1]} : vector<2x128xf32> to vector<2x32xf32>
    %192 = arith.negf %191 : vector<2x32xf32>
    %193 = math.exp %192 : vector<2x32xf32>
    %cst_41 = arith.constant 1.000000e+00 : f32
    %194 = vector.broadcast %cst_41 : f32 to vector<2x32xf32>
    %195 = arith.addf %194, %193 : vector<2x32xf32>
    %196 = arith.divf %194, %195 : vector<2x32xf32>
    %197 = vector.extract_strided_slice %184 {offsets = [0, 64], sizes = [2, 32], strides = [1, 1]} : vector<2x128xf32> to vector<2x32xf32>
    %198 = math.tanh %197 : vector<2x32xf32>
    %199 = vector.extract_strided_slice %184 {offsets = [0, 96], sizes = [2, 32], strides = [1, 1]} : vector<2x128xf32> to vector<2x32xf32>
    %200 = arith.negf %199 : vector<2x32xf32>
    %201 = math.exp %200 : vector<2x32xf32>
    %cst_42 = arith.constant 1.000000e+00 : f32
    %202 = vector.broadcast %cst_42 : f32 to vector<2x32xf32>
    %203 = arith.addf %202, %201 : vector<2x32xf32>
    %204 = arith.divf %202, %203 : vector<2x32xf32>
    %205 = arith.mulf %196, %179 : vector<2x32xf32>
    %206 = arith.mulf %190, %198 : vector<2x32xf32>
    %207 = arith.addf %205, %206 : vector<2x32xf32>
    %208 = math.tanh %207 : vector<2x32xf32>
    %209 = arith.mulf %204, %208 : vector<2x32xf32>
    %210 = vector.extract_strided_slice %5 {offsets = [14, 0], sizes = [2, 128], strides = [1, 1]} : vector<16x128xf32> to vector<2x128xf32>
    %cst_43 = arith.constant dense<0.000000e+00> : vector<2x128xf32>
    %211 = tpu.matmul %209, %11, %cst_43 {dimension_numbers = #tpu.dot_dimension_numbers<[1], [0], [0], [1], [0, 0, 1, 1], [], []>} : vector<2x32xf32>, vector<32x128xf32>, vector<2x128xf32> -> vector<2x128xf32>
    %212 = arith.addf %210, %211 : vector<2x128xf32>
    %213 = vector.extract_strided_slice %212 {offsets = [0, 0], sizes = [2, 32], strides = [1, 1]} : vector<2x128xf32> to vector<2x32xf32>
    %214 = arith.negf %213 : vector<2x32xf32>
    %215 = math.exp %214 : vector<2x32xf32>
    %cst_44 = arith.constant 1.000000e+00 : f32
    %216 = vector.broadcast %cst_44 : f32 to vector<2x32xf32>
    %217 = arith.addf %216, %215 : vector<2x32xf32>
    %218 = arith.divf %216, %217 : vector<2x32xf32>
    %219 = vector.extract_strided_slice %212 {offsets = [0, 32], sizes = [2, 32], strides = [1, 1]} : vector<2x128xf32> to vector<2x32xf32>
    %220 = arith.negf %219 : vector<2x32xf32>
    %221 = math.exp %220 : vector<2x32xf32>
    %cst_45 = arith.constant 1.000000e+00 : f32
    %222 = vector.broadcast %cst_45 : f32 to vector<2x32xf32>
    %223 = arith.addf %222, %221 : vector<2x32xf32>
    %224 = arith.divf %222, %223 : vector<2x32xf32>
    %225 = vector.extract_strided_slice %212 {offsets = [0, 64], sizes = [2, 32], strides = [1, 1]} : vector<2x128xf32> to vector<2x32xf32>
    %226 = math.tanh %225 : vector<2x32xf32>
    %227 = vector.extract_strided_slice %212 {offsets = [0, 96], sizes = [2, 32], strides = [1, 1]} : vector<2x128xf32> to vector<2x32xf32>
    %228 = arith.negf %227 : vector<2x32xf32>
    %229 = math.exp %228 : vector<2x32xf32>
    %cst_46 = arith.constant 1.000000e+00 : f32
    %230 = vector.broadcast %cst_46 : f32 to vector<2x32xf32>
    %231 = arith.addf %230, %229 : vector<2x32xf32>
    %232 = arith.divf %230, %231 : vector<2x32xf32>
    %233 = arith.mulf %224, %207 : vector<2x32xf32>
    %234 = arith.mulf %218, %226 : vector<2x32xf32>
    %235 = arith.addf %233, %234 : vector<2x32xf32>
    %236 = math.tanh %235 : vector<2x32xf32>
    %237 = arith.mulf %232, %236 : vector<2x32xf32>
    %238 = vector.extract_strided_slice %10 {offsets = [14, 0], sizes = [2, 128], strides = [1, 1]} : vector<16x128xf32> to vector<2x128xf32>
    %cst_47 = arith.constant dense<0.000000e+00> : vector<2x128xf32>
    %239 = tpu.matmul %13, %12, %cst_47 {dimension_numbers = #tpu.dot_dimension_numbers<[1], [0], [0], [1], [0, 0, 1, 1], [], []>} : vector<2x32xf32>, vector<32x128xf32>, vector<2x128xf32> -> vector<2x128xf32>
    %240 = arith.addf %238, %239 : vector<2x128xf32>
    %241 = vector.extract_strided_slice %240 {offsets = [0, 0], sizes = [2, 32], strides = [1, 1]} : vector<2x128xf32> to vector<2x32xf32>
    %242 = arith.negf %241 : vector<2x32xf32>
    %243 = math.exp %242 : vector<2x32xf32>
    %cst_48 = arith.constant 1.000000e+00 : f32
    %244 = vector.broadcast %cst_48 : f32 to vector<2x32xf32>
    %245 = arith.addf %244, %243 : vector<2x32xf32>
    %246 = arith.divf %244, %245 : vector<2x32xf32>
    %247 = vector.extract_strided_slice %240 {offsets = [0, 32], sizes = [2, 32], strides = [1, 1]} : vector<2x128xf32> to vector<2x32xf32>
    %248 = arith.negf %247 : vector<2x32xf32>
    %249 = math.exp %248 : vector<2x32xf32>
    %cst_49 = arith.constant 1.000000e+00 : f32
    %250 = vector.broadcast %cst_49 : f32 to vector<2x32xf32>
    %251 = arith.addf %250, %249 : vector<2x32xf32>
    %252 = arith.divf %250, %251 : vector<2x32xf32>
    %253 = vector.extract_strided_slice %240 {offsets = [0, 64], sizes = [2, 32], strides = [1, 1]} : vector<2x128xf32> to vector<2x32xf32>
    %254 = math.tanh %253 : vector<2x32xf32>
    %255 = vector.extract_strided_slice %240 {offsets = [0, 96], sizes = [2, 32], strides = [1, 1]} : vector<2x128xf32> to vector<2x32xf32>
    %256 = arith.negf %255 : vector<2x32xf32>
    %257 = math.exp %256 : vector<2x32xf32>
    %cst_50 = arith.constant 1.000000e+00 : f32
    %258 = vector.broadcast %cst_50 : f32 to vector<2x32xf32>
    %259 = arith.addf %258, %257 : vector<2x32xf32>
    %260 = arith.divf %258, %259 : vector<2x32xf32>
    %261 = arith.mulf %252, %13 : vector<2x32xf32>
    %262 = arith.mulf %246, %254 : vector<2x32xf32>
    %263 = arith.addf %261, %262 : vector<2x32xf32>
    %264 = math.tanh %263 : vector<2x32xf32>
    %265 = arith.mulf %260, %264 : vector<2x32xf32>
    %266 = vector.extract_strided_slice %10 {offsets = [12, 0], sizes = [2, 128], strides = [1, 1]} : vector<16x128xf32> to vector<2x128xf32>
    %cst_51 = arith.constant dense<0.000000e+00> : vector<2x128xf32>
    %267 = tpu.matmul %265, %12, %cst_51 {dimension_numbers = #tpu.dot_dimension_numbers<[1], [0], [0], [1], [0, 0, 1, 1], [], []>} : vector<2x32xf32>, vector<32x128xf32>, vector<2x128xf32> -> vector<2x128xf32>
    %268 = arith.addf %266, %267 : vector<2x128xf32>
    %269 = vector.extract_strided_slice %268 {offsets = [0, 0], sizes = [2, 32], strides = [1, 1]} : vector<2x128xf32> to vector<2x32xf32>
    %270 = arith.negf %269 : vector<2x32xf32>
    %271 = math.exp %270 : vector<2x32xf32>
    %cst_52 = arith.constant 1.000000e+00 : f32
    %272 = vector.broadcast %cst_52 : f32 to vector<2x32xf32>
    %273 = arith.addf %272, %271 : vector<2x32xf32>
    %274 = arith.divf %272, %273 : vector<2x32xf32>
    %275 = vector.extract_strided_slice %268 {offsets = [0, 32], sizes = [2, 32], strides = [1, 1]} : vector<2x128xf32> to vector<2x32xf32>
    %276 = arith.negf %275 : vector<2x32xf32>
    %277 = math.exp %276 : vector<2x32xf32>
    %cst_53 = arith.constant 1.000000e+00 : f32
    %278 = vector.broadcast %cst_53 : f32 to vector<2x32xf32>
    %279 = arith.addf %278, %277 : vector<2x32xf32>
    %280 = arith.divf %278, %279 : vector<2x32xf32>
    %281 = vector.extract_strided_slice %268 {offsets = [0, 64], sizes = [2, 32], strides = [1, 1]} : vector<2x128xf32> to vector<2x32xf32>
    %282 = math.tanh %281 : vector<2x32xf32>
    %283 = vector.extract_strided_slice %268 {offsets = [0, 96], sizes = [2, 32], strides = [1, 1]} : vector<2x128xf32> to vector<2x32xf32>
    %284 = arith.negf %283 : vector<2x32xf32>
    %285 = math.exp %284 : vector<2x32xf32>
    %cst_54 = arith.constant 1.000000e+00 : f32
    %286 = vector.broadcast %cst_54 : f32 to vector<2x32xf32>
    %287 = arith.addf %286, %285 : vector<2x32xf32>
    %288 = arith.divf %286, %287 : vector<2x32xf32>
    %289 = arith.mulf %280, %263 : vector<2x32xf32>
    %290 = arith.mulf %274, %282 : vector<2x32xf32>
    %291 = arith.addf %289, %290 : vector<2x32xf32>
    %292 = math.tanh %291 : vector<2x32xf32>
    %293 = arith.mulf %288, %292 : vector<2x32xf32>
    %294 = vector.extract_strided_slice %10 {offsets = [10, 0], sizes = [2, 128], strides = [1, 1]} : vector<16x128xf32> to vector<2x128xf32>
    %cst_55 = arith.constant dense<0.000000e+00> : vector<2x128xf32>
    %295 = tpu.matmul %293, %12, %cst_55 {dimension_numbers = #tpu.dot_dimension_numbers<[1], [0], [0], [1], [0, 0, 1, 1], [], []>} : vector<2x32xf32>, vector<32x128xf32>, vector<2x128xf32> -> vector<2x128xf32>
    %296 = arith.addf %294, %295 : vector<2x128xf32>
    %297 = vector.extract_strided_slice %296 {offsets = [0, 0], sizes = [2, 32], strides = [1, 1]} : vector<2x128xf32> to vector<2x32xf32>
    %298 = arith.negf %297 : vector<2x32xf32>
    %299 = math.exp %298 : vector<2x32xf32>
    %cst_56 = arith.constant 1.000000e+00 : f32
    %300 = vector.broadcast %cst_56 : f32 to vector<2x32xf32>
    %301 = arith.addf %300, %299 : vector<2x32xf32>
    %302 = arith.divf %300, %301 : vector<2x32xf32>
    %303 = vector.extract_strided_slice %296 {offsets = [0, 32], sizes = [2, 32], strides = [1, 1]} : vector<2x128xf32> to vector<2x32xf32>
    %304 = arith.negf %303 : vector<2x32xf32>
    %305 = math.exp %304 : vector<2x32xf32>
    %cst_57 = arith.constant 1.000000e+00 : f32
    %306 = vector.broadcast %cst_57 : f32 to vector<2x32xf32>
    %307 = arith.addf %306, %305 : vector<2x32xf32>
    %308 = arith.divf %306, %307 : vector<2x32xf32>
    %309 = vector.extract_strided_slice %296 {offsets = [0, 64], sizes = [2, 32], strides = [1, 1]} : vector<2x128xf32> to vector<2x32xf32>
    %310 = math.tanh %309 : vector<2x32xf32>
    %311 = vector.extract_strided_slice %296 {offsets = [0, 96], sizes = [2, 32], strides = [1, 1]} : vector<2x128xf32> to vector<2x32xf32>
    %312 = arith.negf %311 : vector<2x32xf32>
    %313 = math.exp %312 : vector<2x32xf32>
    %cst_58 = arith.constant 1.000000e+00 : f32
    %314 = vector.broadcast %cst_58 : f32 to vector<2x32xf32>
    %315 = arith.addf %314, %313 : vector<2x32xf32>
    %316 = arith.divf %314, %315 : vector<2x32xf32>
    %317 = arith.mulf %308, %291 : vector<2x32xf32>
    %318 = arith.mulf %302, %310 : vector<2x32xf32>
    %319 = arith.addf %317, %318 : vector<2x32xf32>
    %320 = math.tanh %319 : vector<2x32xf32>
    %321 = arith.mulf %316, %320 : vector<2x32xf32>
    %322 = vector.extract_strided_slice %10 {offsets = [8, 0], sizes = [2, 128], strides = [1, 1]} : vector<16x128xf32> to vector<2x128xf32>
    %cst_59 = arith.constant dense<0.000000e+00> : vector<2x128xf32>
    %323 = tpu.matmul %321, %12, %cst_59 {dimension_numbers = #tpu.dot_dimension_numbers<[1], [0], [0], [1], [0, 0, 1, 1], [], []>} : vector<2x32xf32>, vector<32x128xf32>, vector<2x128xf32> -> vector<2x128xf32>
    %324 = arith.addf %322, %323 : vector<2x128xf32>
    %325 = vector.extract_strided_slice %324 {offsets = [0, 0], sizes = [2, 32], strides = [1, 1]} : vector<2x128xf32> to vector<2x32xf32>
    %326 = arith.negf %325 : vector<2x32xf32>
    %327 = math.exp %326 : vector<2x32xf32>
    %cst_60 = arith.constant 1.000000e+00 : f32
    %328 = vector.broadcast %cst_60 : f32 to vector<2x32xf32>
    %329 = arith.addf %328, %327 : vector<2x32xf32>
    %330 = arith.divf %328, %329 : vector<2x32xf32>
    %331 = vector.extract_strided_slice %324 {offsets = [0, 32], sizes = [2, 32], strides = [1, 1]} : vector<2x128xf32> to vector<2x32xf32>
    %332 = arith.negf %331 : vector<2x32xf32>
    %333 = math.exp %332 : vector<2x32xf32>
    %cst_61 = arith.constant 1.000000e+00 : f32
    %334 = vector.broadcast %cst_61 : f32 to vector<2x32xf32>
    %335 = arith.addf %334, %333 : vector<2x32xf32>
    %336 = arith.divf %334, %335 : vector<2x32xf32>
    %337 = vector.extract_strided_slice %324 {offsets = [0, 64], sizes = [2, 32], strides = [1, 1]} : vector<2x128xf32> to vector<2x32xf32>
    %338 = math.tanh %337 : vector<2x32xf32>
    %339 = vector.extract_strided_slice %324 {offsets = [0, 96], sizes = [2, 32], strides = [1, 1]} : vector<2x128xf32> to vector<2x32xf32>
    %340 = arith.negf %339 : vector<2x32xf32>
    %341 = math.exp %340 : vector<2x32xf32>
    %cst_62 = arith.constant 1.000000e+00 : f32
    %342 = vector.broadcast %cst_62 : f32 to vector<2x32xf32>
    %343 = arith.addf %342, %341 : vector<2x32xf32>
    %344 = arith.divf %342, %343 : vector<2x32xf32>
    %345 = arith.mulf %336, %319 : vector<2x32xf32>
    %346 = arith.mulf %330, %338 : vector<2x32xf32>
    %347 = arith.addf %345, %346 : vector<2x32xf32>
    %348 = math.tanh %347 : vector<2x32xf32>
    %349 = arith.mulf %344, %348 : vector<2x32xf32>
    %350 = vector.extract_strided_slice %10 {offsets = [6, 0], sizes = [2, 128], strides = [1, 1]} : vector<16x128xf32> to vector<2x128xf32>
    %cst_63 = arith.constant dense<0.000000e+00> : vector<2x128xf32>
    %351 = tpu.matmul %349, %12, %cst_63 {dimension_numbers = #tpu.dot_dimension_numbers<[1], [0], [0], [1], [0, 0, 1, 1], [], []>} : vector<2x32xf32>, vector<32x128xf32>, vector<2x128xf32> -> vector<2x128xf32>
    %352 = arith.addf %350, %351 : vector<2x128xf32>
    %353 = vector.extract_strided_slice %352 {offsets = [0, 0], sizes = [2, 32], strides = [1, 1]} : vector<2x128xf32> to vector<2x32xf32>
    %354 = arith.negf %353 : vector<2x32xf32>
    %355 = math.exp %354 : vector<2x32xf32>
    %cst_64 = arith.constant 1.000000e+00 : f32
    %356 = vector.broadcast %cst_64 : f32 to vector<2x32xf32>
    %357 = arith.addf %356, %355 : vector<2x32xf32>
    %358 = arith.divf %356, %357 : vector<2x32xf32>
    %359 = vector.extract_strided_slice %352 {offsets = [0, 32], sizes = [2, 32], strides = [1, 1]} : vector<2x128xf32> to vector<2x32xf32>
    %360 = arith.negf %359 : vector<2x32xf32>
    %361 = math.exp %360 : vector<2x32xf32>
    %cst_65 = arith.constant 1.000000e+00 : f32
    %362 = vector.broadcast %cst_65 : f32 to vector<2x32xf32>
    %363 = arith.addf %362, %361 : vector<2x32xf32>
    %364 = arith.divf %362, %363 : vector<2x32xf32>
    %365 = vector.extract_strided_slice %352 {offsets = [0, 64], sizes = [2, 32], strides = [1, 1]} : vector<2x128xf32> to vector<2x32xf32>
    %366 = math.tanh %365 : vector<2x32xf32>
    %367 = vector.extract_strided_slice %352 {offsets = [0, 96], sizes = [2, 32], strides = [1, 1]} : vector<2x128xf32> to vector<2x32xf32>
    %368 = arith.negf %367 : vector<2x32xf32>
    %369 = math.exp %368 : vector<2x32xf32>
    %cst_66 = arith.constant 1.000000e+00 : f32
    %370 = vector.broadcast %cst_66 : f32 to vector<2x32xf32>
    %371 = arith.addf %370, %369 : vector<2x32xf32>
    %372 = arith.divf %370, %371 : vector<2x32xf32>
    %373 = arith.mulf %364, %347 : vector<2x32xf32>
    %374 = arith.mulf %358, %366 : vector<2x32xf32>
    %375 = arith.addf %373, %374 : vector<2x32xf32>
    %376 = math.tanh %375 : vector<2x32xf32>
    %377 = arith.mulf %372, %376 : vector<2x32xf32>
    %378 = vector.extract_strided_slice %10 {offsets = [4, 0], sizes = [2, 128], strides = [1, 1]} : vector<16x128xf32> to vector<2x128xf32>
    %cst_67 = arith.constant dense<0.000000e+00> : vector<2x128xf32>
    %379 = tpu.matmul %377, %12, %cst_67 {dimension_numbers = #tpu.dot_dimension_numbers<[1], [0], [0], [1], [0, 0, 1, 1], [], []>} : vector<2x32xf32>, vector<32x128xf32>, vector<2x128xf32> -> vector<2x128xf32>
    %380 = arith.addf %378, %379 : vector<2x128xf32>
    %381 = vector.extract_strided_slice %380 {offsets = [0, 0], sizes = [2, 32], strides = [1, 1]} : vector<2x128xf32> to vector<2x32xf32>
    %382 = arith.negf %381 : vector<2x32xf32>
    %383 = math.exp %382 : vector<2x32xf32>
    %cst_68 = arith.constant 1.000000e+00 : f32
    %384 = vector.broadcast %cst_68 : f32 to vector<2x32xf32>
    %385 = arith.addf %384, %383 : vector<2x32xf32>
    %386 = arith.divf %384, %385 : vector<2x32xf32>
    %387 = vector.extract_strided_slice %380 {offsets = [0, 32], sizes = [2, 32], strides = [1, 1]} : vector<2x128xf32> to vector<2x32xf32>
    %388 = arith.negf %387 : vector<2x32xf32>
    %389 = math.exp %388 : vector<2x32xf32>
    %cst_69 = arith.constant 1.000000e+00 : f32
    %390 = vector.broadcast %cst_69 : f32 to vector<2x32xf32>
    %391 = arith.addf %390, %389 : vector<2x32xf32>
    %392 = arith.divf %390, %391 : vector<2x32xf32>
    %393 = vector.extract_strided_slice %380 {offsets = [0, 64], sizes = [2, 32], strides = [1, 1]} : vector<2x128xf32> to vector<2x32xf32>
    %394 = math.tanh %393 : vector<2x32xf32>
    %395 = vector.extract_strided_slice %380 {offsets = [0, 96], sizes = [2, 32], strides = [1, 1]} : vector<2x128xf32> to vector<2x32xf32>
    %396 = arith.negf %395 : vector<2x32xf32>
    %397 = math.exp %396 : vector<2x32xf32>
    %cst_70 = arith.constant 1.000000e+00 : f32
    %398 = vector.broadcast %cst_70 : f32 to vector<2x32xf32>
    %399 = arith.addf %398, %397 : vector<2x32xf32>
    %400 = arith.divf %398, %399 : vector<2x32xf32>
    %401 = arith.mulf %392, %375 : vector<2x32xf32>
    %402 = arith.mulf %386, %394 : vector<2x32xf32>
    %403 = arith.addf %401, %402 : vector<2x32xf32>
    %404 = math.tanh %403 : vector<2x32xf32>
    %405 = arith.mulf %400, %404 : vector<2x32xf32>
    %406 = vector.extract_strided_slice %10 {offsets = [2, 0], sizes = [2, 128], strides = [1, 1]} : vector<16x128xf32> to vector<2x128xf32>
    %cst_71 = arith.constant dense<0.000000e+00> : vector<2x128xf32>
    %407 = tpu.matmul %405, %12, %cst_71 {dimension_numbers = #tpu.dot_dimension_numbers<[1], [0], [0], [1], [0, 0, 1, 1], [], []>} : vector<2x32xf32>, vector<32x128xf32>, vector<2x128xf32> -> vector<2x128xf32>
    %408 = arith.addf %406, %407 : vector<2x128xf32>
    %409 = vector.extract_strided_slice %408 {offsets = [0, 0], sizes = [2, 32], strides = [1, 1]} : vector<2x128xf32> to vector<2x32xf32>
    %410 = arith.negf %409 : vector<2x32xf32>
    %411 = math.exp %410 : vector<2x32xf32>
    %cst_72 = arith.constant 1.000000e+00 : f32
    %412 = vector.broadcast %cst_72 : f32 to vector<2x32xf32>
    %413 = arith.addf %412, %411 : vector<2x32xf32>
    %414 = arith.divf %412, %413 : vector<2x32xf32>
    %415 = vector.extract_strided_slice %408 {offsets = [0, 32], sizes = [2, 32], strides = [1, 1]} : vector<2x128xf32> to vector<2x32xf32>
    %416 = arith.negf %415 : vector<2x32xf32>
    %417 = math.exp %416 : vector<2x32xf32>
    %cst_73 = arith.constant 1.000000e+00 : f32
    %418 = vector.broadcast %cst_73 : f32 to vector<2x32xf32>
    %419 = arith.addf %418, %417 : vector<2x32xf32>
    %420 = arith.divf %418, %419 : vector<2x32xf32>
    %421 = vector.extract_strided_slice %408 {offsets = [0, 64], sizes = [2, 32], strides = [1, 1]} : vector<2x128xf32> to vector<2x32xf32>
    %422 = math.tanh %421 : vector<2x32xf32>
    %423 = vector.extract_strided_slice %408 {offsets = [0, 96], sizes = [2, 32], strides = [1, 1]} : vector<2x128xf32> to vector<2x32xf32>
    %424 = arith.negf %423 : vector<2x32xf32>
    %425 = math.exp %424 : vector<2x32xf32>
    %cst_74 = arith.constant 1.000000e+00 : f32
    %426 = vector.broadcast %cst_74 : f32 to vector<2x32xf32>
    %427 = arith.addf %426, %425 : vector<2x32xf32>
    %428 = arith.divf %426, %427 : vector<2x32xf32>
    %429 = arith.mulf %420, %403 : vector<2x32xf32>
    %430 = arith.mulf %414, %422 : vector<2x32xf32>
    %431 = arith.addf %429, %430 : vector<2x32xf32>
    %432 = math.tanh %431 : vector<2x32xf32>
    %433 = arith.mulf %428, %432 : vector<2x32xf32>
    %434 = vector.extract_strided_slice %10 {offsets = [0, 0], sizes = [2, 128], strides = [1, 1]} : vector<16x128xf32> to vector<2x128xf32>
    %cst_75 = arith.constant dense<0.000000e+00> : vector<2x128xf32>
    %435 = tpu.matmul %433, %12, %cst_75 {dimension_numbers = #tpu.dot_dimension_numbers<[1], [0], [0], [1], [0, 0, 1, 1], [], []>} : vector<2x32xf32>, vector<32x128xf32>, vector<2x128xf32> -> vector<2x128xf32>
    %436 = arith.addf %434, %435 : vector<2x128xf32>
    %437 = vector.extract_strided_slice %436 {offsets = [0, 0], sizes = [2, 32], strides = [1, 1]} : vector<2x128xf32> to vector<2x32xf32>
    %438 = arith.negf %437 : vector<2x32xf32>
    %439 = math.exp %438 : vector<2x32xf32>
    %cst_76 = arith.constant 1.000000e+00 : f32
    %440 = vector.broadcast %cst_76 : f32 to vector<2x32xf32>
    %441 = arith.addf %440, %439 : vector<2x32xf32>
    %442 = arith.divf %440, %441 : vector<2x32xf32>
    %443 = vector.extract_strided_slice %436 {offsets = [0, 32], sizes = [2, 32], strides = [1, 1]} : vector<2x128xf32> to vector<2x32xf32>
    %444 = arith.negf %443 : vector<2x32xf32>
    %445 = math.exp %444 : vector<2x32xf32>
    %cst_77 = arith.constant 1.000000e+00 : f32
    %446 = vector.broadcast %cst_77 : f32 to vector<2x32xf32>
    %447 = arith.addf %446, %445 : vector<2x32xf32>
    %448 = arith.divf %446, %447 : vector<2x32xf32>
    %449 = vector.extract_strided_slice %436 {offsets = [0, 64], sizes = [2, 32], strides = [1, 1]} : vector<2x128xf32> to vector<2x32xf32>
    %450 = math.tanh %449 : vector<2x32xf32>
    %451 = vector.extract_strided_slice %436 {offsets = [0, 96], sizes = [2, 32], strides = [1, 1]} : vector<2x128xf32> to vector<2x32xf32>
    %452 = arith.negf %451 : vector<2x32xf32>
    %453 = math.exp %452 : vector<2x32xf32>
    %cst_78 = arith.constant 1.000000e+00 : f32
    %454 = vector.broadcast %cst_78 : f32 to vector<2x32xf32>
    %455 = arith.addf %454, %453 : vector<2x32xf32>
    %456 = arith.divf %454, %455 : vector<2x32xf32>
    %457 = arith.mulf %448, %431 : vector<2x32xf32>
    %458 = arith.mulf %442, %450 : vector<2x32xf32>
    %459 = arith.addf %457, %458 : vector<2x32xf32>
    %460 = math.tanh %459 : vector<2x32xf32>
    %461 = arith.mulf %456, %460 : vector<2x32xf32>
    %c0_79 = arith.constant 0 : index
    %c0_80 = arith.constant 0 : index
    %462 = vector.load %arg7[%c0_79, %c0_80] : memref<1x64xf32, #tpu.memory_space<vmem>>, vector<1x64xf32>
    %463 = vector.extract_strided_slice %462 {offsets = [0, 0], sizes = [1, 32], strides = [1, 1]} : vector<1x64xf32> to vector<1x32xf32>
    %464 = vector.extract_strided_slice %462 {offsets = [0, 32], sizes = [1, 32], strides = [1, 1]} : vector<1x64xf32> to vector<1x32xf32>
    %465 = math.tanh %41 : vector<2x32xf32>
    %466 = vector.broadcast %463 : vector<1x32xf32> to vector<2x32xf32>
    %467 = arith.mulf %465, %466 : vector<2x32xf32>
    %cst_81 = arith.constant dense<0.000000e+00> : vector<2xf32>
    %468 = vector.multi_reduction <add>, %467, %cst_81 [1] : vector<2x32xf32> to vector<2xf32>
    %469 = vector.shape_cast %468 : vector<2xf32> to vector<2x1xf32>
    %470 = math.tanh %461 : vector<2x32xf32>
    %471 = vector.broadcast %464 : vector<1x32xf32> to vector<2x32xf32>
    %472 = arith.mulf %470, %471 : vector<2x32xf32>
    %cst_82 = arith.constant dense<0.000000e+00> : vector<2xf32>
    %473 = vector.multi_reduction <add>, %472, %cst_82 [1] : vector<2x32xf32> to vector<2xf32>
    %474 = vector.shape_cast %473 : vector<2xf32> to vector<2x1xf32>
    %475 = arith.addf %469, %474 : vector<2x1xf32>
    %476 = math.tanh %69 : vector<2x32xf32>
    %477 = vector.broadcast %463 : vector<1x32xf32> to vector<2x32xf32>
    %478 = arith.mulf %476, %477 : vector<2x32xf32>
    %cst_83 = arith.constant dense<0.000000e+00> : vector<2xf32>
    %479 = vector.multi_reduction <add>, %478, %cst_83 [1] : vector<2x32xf32> to vector<2xf32>
    %480 = vector.shape_cast %479 : vector<2xf32> to vector<2x1xf32>
    %481 = math.tanh %433 : vector<2x32xf32>
    %482 = vector.broadcast %464 : vector<1x32xf32> to vector<2x32xf32>
    %483 = arith.mulf %481, %482 : vector<2x32xf32>
    %cst_84 = arith.constant dense<0.000000e+00> : vector<2xf32>
    %484 = vector.multi_reduction <add>, %483, %cst_84 [1] : vector<2x32xf32> to vector<2xf32>
    %485 = vector.shape_cast %484 : vector<2xf32> to vector<2x1xf32>
    %486 = arith.addf %480, %485 : vector<2x1xf32>
    %487 = math.tanh %97 : vector<2x32xf32>
    %488 = vector.broadcast %463 : vector<1x32xf32> to vector<2x32xf32>
    %489 = arith.mulf %487, %488 : vector<2x32xf32>
    %cst_85 = arith.constant dense<0.000000e+00> : vector<2xf32>
    %490 = vector.multi_reduction <add>, %489, %cst_85 [1] : vector<2x32xf32> to vector<2xf32>
    %491 = vector.shape_cast %490 : vector<2xf32> to vector<2x1xf32>
    %492 = math.tanh %405 : vector<2x32xf32>
    %493 = vector.broadcast %464 : vector<1x32xf32> to vector<2x32xf32>
    %494 = arith.mulf %492, %493 : vector<2x32xf32>
    %cst_86 = arith.constant dense<0.000000e+00> : vector<2xf32>
    %495 = vector.multi_reduction <add>, %494, %cst_86 [1] : vector<2x32xf32> to vector<2xf32>
    %496 = vector.shape_cast %495 : vector<2xf32> to vector<2x1xf32>
    %497 = arith.addf %491, %496 : vector<2x1xf32>
    %498 = math.tanh %125 : vector<2x32xf32>
    %499 = vector.broadcast %463 : vector<1x32xf32> to vector<2x32xf32>
    %500 = arith.mulf %498, %499 : vector<2x32xf32>
    %cst_87 = arith.constant dense<0.000000e+00> : vector<2xf32>
    %501 = vector.multi_reduction <add>, %500, %cst_87 [1] : vector<2x32xf32> to vector<2xf32>
    %502 = vector.shape_cast %501 : vector<2xf32> to vector<2x1xf32>
    %503 = math.tanh %377 : vector<2x32xf32>
    %504 = vector.broadcast %464 : vector<1x32xf32> to vector<2x32xf32>
    %505 = arith.mulf %503, %504 : vector<2x32xf32>
    %cst_88 = arith.constant dense<0.000000e+00> : vector<2xf32>
    %506 = vector.multi_reduction <add>, %505, %cst_88 [1] : vector<2x32xf32> to vector<2xf32>
    %507 = vector.shape_cast %506 : vector<2xf32> to vector<2x1xf32>
    %508 = arith.addf %502, %507 : vector<2x1xf32>
    %509 = math.tanh %153 : vector<2x32xf32>
    %510 = vector.broadcast %463 : vector<1x32xf32> to vector<2x32xf32>
    %511 = arith.mulf %509, %510 : vector<2x32xf32>
    %cst_89 = arith.constant dense<0.000000e+00> : vector<2xf32>
    %512 = vector.multi_reduction <add>, %511, %cst_89 [1] : vector<2x32xf32> to vector<2xf32>
    %513 = vector.shape_cast %512 : vector<2xf32> to vector<2x1xf32>
    %514 = math.tanh %349 : vector<2x32xf32>
    %515 = vector.broadcast %464 : vector<1x32xf32> to vector<2x32xf32>
    %516 = arith.mulf %514, %515 : vector<2x32xf32>
    %cst_90 = arith.constant dense<0.000000e+00> : vector<2xf32>
    %517 = vector.multi_reduction <add>, %516, %cst_90 [1] : vector<2x32xf32> to vector<2xf32>
    %518 = vector.shape_cast %517 : vector<2xf32> to vector<2x1xf32>
    %519 = arith.addf %513, %518 : vector<2x1xf32>
    %520 = math.tanh %181 : vector<2x32xf32>
    %521 = vector.broadcast %463 : vector<1x32xf32> to vector<2x32xf32>
    %522 = arith.mulf %520, %521 : vector<2x32xf32>
    %cst_91 = arith.constant dense<0.000000e+00> : vector<2xf32>
    %523 = vector.multi_reduction <add>, %522, %cst_91 [1] : vector<2x32xf32> to vector<2xf32>
    %524 = vector.shape_cast %523 : vector<2xf32> to vector<2x1xf32>
    %525 = math.tanh %321 : vector<2x32xf32>
    %526 = vector.broadcast %464 : vector<1x32xf32> to vector<2x32xf32>
    %527 = arith.mulf %525, %526 : vector<2x32xf32>
    %cst_92 = arith.constant dense<0.000000e+00> : vector<2xf32>
    %528 = vector.multi_reduction <add>, %527, %cst_92 [1] : vector<2x32xf32> to vector<2xf32>
    %529 = vector.shape_cast %528 : vector<2xf32> to vector<2x1xf32>
    %530 = arith.addf %524, %529 : vector<2x1xf32>
    %531 = math.tanh %209 : vector<2x32xf32>
    %532 = vector.broadcast %463 : vector<1x32xf32> to vector<2x32xf32>
    %533 = arith.mulf %531, %532 : vector<2x32xf32>
    %cst_93 = arith.constant dense<0.000000e+00> : vector<2xf32>
    %534 = vector.multi_reduction <add>, %533, %cst_93 [1] : vector<2x32xf32> to vector<2xf32>
    %535 = vector.shape_cast %534 : vector<2xf32> to vector<2x1xf32>
    %536 = math.tanh %293 : vector<2x32xf32>
    %537 = vector.broadcast %464 : vector<1x32xf32> to vector<2x32xf32>
    %538 = arith.mulf %536, %537 : vector<2x32xf32>
    %cst_94 = arith.constant dense<0.000000e+00> : vector<2xf32>
    %539 = vector.multi_reduction <add>, %538, %cst_94 [1] : vector<2x32xf32> to vector<2xf32>
    %540 = vector.shape_cast %539 : vector<2xf32> to vector<2x1xf32>
    %541 = arith.addf %535, %540 : vector<2x1xf32>
    %542 = math.tanh %237 : vector<2x32xf32>
    %543 = vector.broadcast %463 : vector<1x32xf32> to vector<2x32xf32>
    %544 = arith.mulf %542, %543 : vector<2x32xf32>
    %cst_95 = arith.constant dense<0.000000e+00> : vector<2xf32>
    %545 = vector.multi_reduction <add>, %544, %cst_95 [1] : vector<2x32xf32> to vector<2xf32>
    %546 = vector.shape_cast %545 : vector<2xf32> to vector<2x1xf32>
    %547 = math.tanh %265 : vector<2x32xf32>
    %548 = vector.broadcast %464 : vector<1x32xf32> to vector<2x32xf32>
    %549 = arith.mulf %547, %548 : vector<2x32xf32>
    %cst_96 = arith.constant dense<0.000000e+00> : vector<2xf32>
    %550 = vector.multi_reduction <add>, %549, %cst_96 [1] : vector<2x32xf32> to vector<2xf32>
    %551 = vector.shape_cast %550 : vector<2xf32> to vector<2x1xf32>
    %552 = arith.addf %546, %551 : vector<2x1xf32>
    %553 = arith.maximumf %475, %486 : vector<2x1xf32>
    %554 = arith.maximumf %553, %497 : vector<2x1xf32>
    %555 = arith.maximumf %554, %508 : vector<2x1xf32>
    %556 = arith.maximumf %555, %519 : vector<2x1xf32>
    %557 = arith.maximumf %556, %530 : vector<2x1xf32>
    %558 = arith.maximumf %557, %541 : vector<2x1xf32>
    %559 = arith.maximumf %558, %552 : vector<2x1xf32>
    %560 = arith.subf %475, %559 : vector<2x1xf32>
    %561 = math.exp %560 : vector<2x1xf32>
    %562 = arith.subf %486, %559 : vector<2x1xf32>
    %563 = math.exp %562 : vector<2x1xf32>
    %564 = arith.subf %497, %559 : vector<2x1xf32>
    %565 = math.exp %564 : vector<2x1xf32>
    %566 = arith.subf %508, %559 : vector<2x1xf32>
    %567 = math.exp %566 : vector<2x1xf32>
    %568 = arith.subf %519, %559 : vector<2x1xf32>
    %569 = math.exp %568 : vector<2x1xf32>
    %570 = arith.subf %530, %559 : vector<2x1xf32>
    %571 = math.exp %570 : vector<2x1xf32>
    %572 = arith.subf %541, %559 : vector<2x1xf32>
    %573 = math.exp %572 : vector<2x1xf32>
    %574 = arith.subf %552, %559 : vector<2x1xf32>
    %575 = math.exp %574 : vector<2x1xf32>
    %576 = arith.addf %561, %563 : vector<2x1xf32>
    %577 = arith.addf %576, %565 : vector<2x1xf32>
    %578 = arith.addf %577, %567 : vector<2x1xf32>
    %579 = arith.addf %578, %569 : vector<2x1xf32>
    %580 = arith.addf %579, %571 : vector<2x1xf32>
    %581 = arith.addf %580, %573 : vector<2x1xf32>
    %582 = arith.addf %581, %575 : vector<2x1xf32>
    %583 = tpu.reciprocal %582 {approx = true} : vector<2x1xf32> -> vector<2x1xf32>
    %cst_97 = arith.constant 0.000000e+00 : f32
    %584 = vector.broadcast %cst_97 : f32 to vector<2x32xf32>
    %cst_98 = arith.constant 0.000000e+00 : f32
    %585 = vector.broadcast %cst_98 : f32 to vector<2x32xf32>
    %586 = arith.mulf %561, %583 : vector<2x1xf32>
    %587 = vector.broadcast %586 : vector<2x1xf32> to vector<2x32xf32>
    %588 = arith.mulf %587, %41 : vector<2x32xf32>
    %589 = arith.addf %584, %588 : vector<2x32xf32>
    %590 = vector.broadcast %586 : vector<2x1xf32> to vector<2x32xf32>
    %591 = arith.mulf %590, %461 : vector<2x32xf32>
    %592 = arith.addf %585, %591 : vector<2x32xf32>
    %593 = arith.mulf %563, %583 : vector<2x1xf32>
    %594 = vector.broadcast %593 : vector<2x1xf32> to vector<2x32xf32>
    %595 = arith.mulf %594, %69 : vector<2x32xf32>
    %596 = arith.addf %589, %595 : vector<2x32xf32>
    %597 = vector.broadcast %593 : vector<2x1xf32> to vector<2x32xf32>
    %598 = arith.mulf %597, %433 : vector<2x32xf32>
    %599 = arith.addf %592, %598 : vector<2x32xf32>
    %600 = arith.mulf %565, %583 : vector<2x1xf32>
    %601 = vector.broadcast %600 : vector<2x1xf32> to vector<2x32xf32>
    %602 = arith.mulf %601, %97 : vector<2x32xf32>
    %603 = arith.addf %596, %602 : vector<2x32xf32>
    %604 = vector.broadcast %600 : vector<2x1xf32> to vector<2x32xf32>
    %605 = arith.mulf %604, %405 : vector<2x32xf32>
    %606 = arith.addf %599, %605 : vector<2x32xf32>
    %607 = arith.mulf %567, %583 : vector<2x1xf32>
    %608 = vector.broadcast %607 : vector<2x1xf32> to vector<2x32xf32>
    %609 = arith.mulf %608, %125 : vector<2x32xf32>
    %610 = arith.addf %603, %609 : vector<2x32xf32>
    %611 = vector.broadcast %607 : vector<2x1xf32> to vector<2x32xf32>
    %612 = arith.mulf %611, %377 : vector<2x32xf32>
    %613 = arith.addf %606, %612 : vector<2x32xf32>
    %614 = arith.mulf %569, %583 : vector<2x1xf32>
    %615 = vector.broadcast %614 : vector<2x1xf32> to vector<2x32xf32>
    %616 = arith.mulf %615, %153 : vector<2x32xf32>
    %617 = arith.addf %610, %616 : vector<2x32xf32>
    %618 = vector.broadcast %614 : vector<2x1xf32> to vector<2x32xf32>
    %619 = arith.mulf %618, %349 : vector<2x32xf32>
    %620 = arith.addf %613, %619 : vector<2x32xf32>
    %621 = arith.mulf %571, %583 : vector<2x1xf32>
    %622 = vector.broadcast %621 : vector<2x1xf32> to vector<2x32xf32>
    %623 = arith.mulf %622, %181 : vector<2x32xf32>
    %624 = arith.addf %617, %623 : vector<2x32xf32>
    %625 = vector.broadcast %621 : vector<2x1xf32> to vector<2x32xf32>
    %626 = arith.mulf %625, %321 : vector<2x32xf32>
    %627 = arith.addf %620, %626 : vector<2x32xf32>
    %628 = arith.mulf %573, %583 : vector<2x1xf32>
    %629 = vector.broadcast %628 : vector<2x1xf32> to vector<2x32xf32>
    %630 = arith.mulf %629, %209 : vector<2x32xf32>
    %631 = arith.addf %624, %630 : vector<2x32xf32>
    %632 = vector.broadcast %628 : vector<2x1xf32> to vector<2x32xf32>
    %633 = arith.mulf %632, %293 : vector<2x32xf32>
    %634 = arith.addf %627, %633 : vector<2x32xf32>
    %635 = arith.mulf %575, %583 : vector<2x1xf32>
    %636 = vector.broadcast %635 : vector<2x1xf32> to vector<2x32xf32>
    %637 = arith.mulf %636, %237 : vector<2x32xf32>
    %638 = arith.addf %631, %637 : vector<2x32xf32>
    %639 = vector.broadcast %635 : vector<2x1xf32> to vector<2x32xf32>
    %640 = arith.mulf %639, %265 : vector<2x32xf32>
    %641 = arith.addf %634, %640 : vector<2x32xf32>
    %cst_99 = arith.constant 0.000000e+00 : f32
    %642 = vector.broadcast %cst_99 : f32 to vector<2x32xf32>
    %643 = arith.maximumf %638, %642 : vector<2x32xf32>
    %cst_100 = arith.constant 0.000000e+00 : f32
    %644 = vector.broadcast %cst_100 : f32 to vector<2x32xf32>
    %645 = arith.maximumf %641, %644 : vector<2x32xf32>
    %c0_101 = arith.constant 0 : index
    %c0_102 = arith.constant 0 : index
    %646 = vector.load %arg8[%c0_101, %c0_102] : memref<64x64xf32, #tpu.memory_space<vmem>>, vector<64x64xf32>
    %647 = vector.extract_strided_slice %646 {offsets = [0, 0], sizes = [32, 64], strides = [1, 1]} : vector<64x64xf32> to vector<32x64xf32>
    %cst_103 = arith.constant dense<0.000000e+00> : vector<2x64xf32>
    %648 = tpu.matmul %643, %647, %cst_103 {dimension_numbers = #tpu.dot_dimension_numbers<[1], [0], [0], [1], [0, 0, 1, 1], [], []>} : vector<2x32xf32>, vector<32x64xf32>, vector<2x64xf32> -> vector<2x64xf32>
    %649 = vector.extract_strided_slice %646 {offsets = [32, 0], sizes = [32, 64], strides = [1, 1]} : vector<64x64xf32> to vector<32x64xf32>
    %cst_104 = arith.constant dense<0.000000e+00> : vector<2x64xf32>
    %650 = tpu.matmul %645, %649, %cst_104 {dimension_numbers = #tpu.dot_dimension_numbers<[1], [0], [0], [1], [0, 0, 1, 1], [], []>} : vector<2x32xf32>, vector<32x64xf32>, vector<2x64xf32> -> vector<2x64xf32>
    %651 = arith.addf %648, %650 : vector<2x64xf32>
    %c0_105 = arith.constant 0 : index
    %c0_106 = arith.constant 0 : index
    %652 = vector.load %arg9[%c0_105, %c0_106] : memref<1x64xf32, #tpu.memory_space<vmem>>, vector<1x64xf32>
    %653 = vector.broadcast %652 : vector<1x64xf32> to vector<2x64xf32>
    %654 = arith.addf %651, %653 : vector<2x64xf32>
    %c0_107 = arith.constant 0 : index
    %c0_108 = arith.constant 0 : index
    %655 = vector.load %arg10[%c0_107, %c0_108] : memref<64x4xf32, #tpu.memory_space<vmem>>, vector<64x4xf32>
    %cst_109 = arith.constant dense<0.000000e+00> : vector<2x4xf32>
    %656 = tpu.matmul %654, %655, %cst_109 {dimension_numbers = #tpu.dot_dimension_numbers<[1], [0], [0], [1], [0, 0, 1, 1], [], []>} : vector<2x64xf32>, vector<64x4xf32>, vector<2x4xf32> -> vector<2x4xf32>
    %c0_110 = arith.constant 0 : index
    %c0_111 = arith.constant 0 : index
    %657 = vector.load %arg11[%c0_110, %c0_111] : memref<1x4xf32, #tpu.memory_space<vmem>>, vector<1x4xf32>
    %658 = vector.broadcast %657 : vector<1x4xf32> to vector<2x4xf32>
    %659 = arith.addf %656, %658 : vector<2x4xf32>
    %c0_112 = arith.constant 0 : index
    %c0_113 = arith.constant 0 : index
    %660 = vector.load %arg12[%c0_112, %c0_113] : memref<2x4xf32, #tpu.memory_space<vmem>>, vector<2x4xf32>
    tpu.vector_store %arg12[%c0_112, %c0_113], %659 {strides = array<i32>} : memref<2x4xf32, #tpu.memory_space<vmem>>, vector<2x4xf32>,
    return
  }
}

</mosaic_0001>

<llo_original>
// kernel: model_forward.1
$region0: #{model_forward.1}
  #allocation0 [shape = 'u32[]', space=smem, size = 0x4, offset = 0x4, fixed_abs, tag = 'smem constant byte address 0x4 - core index']
  #allocation1 [shape = 'u32[144,128]{1,0:T(1,128)}', space=vmem, size = 0x12000, scoped, tag = 'internal scratch']
  %s0 = inlined_call_operand.vmem [shape: f32[16,32], index: 0, kind: input, shape index: {}]
  %s1 = inlined_call_operand.vmem [shape: f32[32,128], index: 1, kind: input, shape index: {}]
  %s2 = inlined_call_operand.vmem [shape: f32[32,128], index: 2, kind: input, shape index: {}]
  %s3 = inlined_call_operand.vmem [shape: f32[1,128], index: 3, kind: input, shape index: {}]
  %s4 = inlined_call_operand.vmem [shape: f32[32,128], index: 4, kind: input, shape index: {}]
  %s5 = inlined_call_operand.vmem [shape: f32[32,128], index: 5, kind: input, shape index: {}]
  %s6 = inlined_call_operand.vmem [shape: f32[1,128], index: 6, kind: input, shape index: {}]
  %s7 = inlined_call_operand.vmem [shape: f32[1,64], index: 7, kind: input, shape index: {}]
  %s8 = inlined_call_operand.vmem [shape: f32[64,64], index: 8, kind: input, shape index: {}]
  %s9 = inlined_call_operand.vmem [shape: f32[1,64], index: 9, kind: input, shape index: {}]
  %s10 = inlined_call_operand.vmem [shape: f32[64,4], index: 10, kind: input, shape index: {}]
  %s11 = inlined_call_operand.vmem [shape: f32[1,4], index: 11, kind: input, shape index: {}]
  %s12 = inlined_call_operand.hbm [shape: f32[2,4], index: 12, kind: output, shape index: {}]
  %s13 = sld [smem:[#allocation0]]
  $region58: #{model_forward.1} parent=0
    _
  %s15 = ssub.s32 1, %s13
  %s16 = scalar_select 0, %s15, %s13
  $region1: #{model_forward.1} parent=0
    #allocation2 [shape = 'u8[1024]{0}', space=vmem, size = 0x400, scoped, tag = 'output window, operand 0, single buffered']
    #allocation3 [shape = 's32[1]{0}', space=sflag, size = 0x4, scoped, tag = 'scoped memory for model_forward.1']
    %17 = vsyncpa [#allocation3], 0
    // Predicated region
    $region2: #{model_forward.1} parent=1 // pred_check
      _
    $region3: #{model_forward.1} parent=1 // pred_check_branch
      %19 = sbr.rel (0) target = $region5
    $region4: #{model_forward.1} parent=1 // pred_region
      _
    $region5: #{model_forward.1} parent=1 // pred_fallthru
      _
    // Predicated region
    $region6: #{model_forward.1} parent=1 // pred_check
      _
    $region7: #{model_forward.1} parent=1 // pred_check_branch
      %21 = sbr.rel (0) target = $region9
    $region8: #{model_forward.1} parent=1 // pred_region
      _
    $region9: #{model_forward.1} parent=1 // pred_fallthru
      _
    // Predicated region
    $region10: #{model_forward.1} parent=1 // pred_check
      _
    $region11: #{model_forward.1} parent=1 // pred_check_branch
      %23 = sbr.rel (0) target = $region13
    $region12: #{model_forward.1} parent=1 // pred_region
      _
    $region13: #{model_forward.1} parent=1 // pred_fallthru
      _
    // Predicated region
    $region14: #{model_forward.1} parent=1 // pred_check
      _
    $region15: #{model_forward.1} parent=1 // pred_check_branch
      %25 = sbr.rel (0) target = $region17
    $region16: #{model_forward.1} parent=1 // pred_region
      _
    $region17: #{model_forward.1} parent=1 // pred_fallthru
      _
    // Predicated region
    $region18: #{model_forward.1} parent=1 // pred_check
      _
    $region19: #{model_forward.1} parent=1 // pred_check_branch
      %27 = sbr.rel (0) target = $region21
    $region20: #{model_forward.1} parent=1 // pred_region
      _
    $region21: #{model_forward.1} parent=1 // pred_fallthru
      _
    // Predicated region
    $region22: #{model_forward.1} parent=1 // pred_check
      _
    $region23: #{model_forward.1} parent=1 // pred_check_branch
      %29 = sbr.rel (0) target = $region25
    $region24: #{model_forward.1} parent=1 // pred_region
      _
    $region25: #{model_forward.1} parent=1 // pred_fallthru
      _
    // Predicated region
    $region26: #{model_forward.1} parent=1 // pred_check
      _
    $region27: #{model_forward.1} parent=1 // pred_check_branch
      %31 = sbr.rel (0) target = $region29
    $region28: #{model_forward.1} parent=1 // pred_region
      _
    $region29: #{model_forward.1} parent=1 // pred_fallthru
      _
    // Predicated region
    $region30: #{model_forward.1} parent=1 // pred_check
      _
    $region31: #{model_forward.1} parent=1 // pred_check_branch
      %33 = sbr.rel (0) target = $region33
    $region32: #{model_forward.1} parent=1 // pred_region
      _
    $region33: #{model_forward.1} parent=1 // pred_fallthru
      _
    // Predicated region
    $region34: #{model_forward.1} parent=1 // pred_check
      _
    $region35: #{model_forward.1} parent=1 // pred_check_branch
      %35 = sbr.rel (0) target = $region37
    $region36: #{model_forward.1} parent=1 // pred_region
      _
    $region37: #{model_forward.1} parent=1 // pred_fallthru
      _
    // Predicated region
    $region38: #{model_forward.1} parent=1 // pred_check
      _
    $region39: #{model_forward.1} parent=1 // pred_check_branch
      %37 = sbr.rel (0) target = $region41
    $region40: #{model_forward.1} parent=1 // pred_region
      _
    $region41: #{model_forward.1} parent=1 // pred_fallthru
      _
    // Predicated region
    $region42: #{model_forward.1} parent=1 // pred_check
      _
    $region43: #{model_forward.1} parent=1 // pred_check_branch
      %39 = sbr.rel (0) target = $region45
    $region44: #{model_forward.1} parent=1 // pred_region
      _
    $region45: #{model_forward.1} parent=1 // pred_fallthru
      _
    // Predicated region
    $region46: #{model_forward.1} parent=1 // pred_check
      _
    $region47: #{model_forward.1} parent=1 // pred_check_branch
      %41 = sbr.rel (0) target = $region49
    $region48: #{model_forward.1} parent=1 // pred_region
      _
    $region49: #{model_forward.1} parent=1 // pred_fallthru
      _
    %v42 = vld [vmem:[%s0] sm:$0xff]
    %v43 = vld [vmem:[%s0 + $0x8] sm:$0xff]
    %v44 = vld [vmem:[%s1] sm:$0xff]
    %v45 = vld [vmem:[%s1 + $0x8] sm:$0xff]
    %v46 = vld [vmem:[%s1 + $0x10] sm:$0xff]
    %v47 = vld [vmem:[%s1 + $0x18] sm:$0xff]
    %v48 = vld [vmem:[%s3] sm:$0x1]
    %v50 = vlaneseq
    %v51 = vshrl.u32 %v50, 7
    %v52 = vsub.s32 0, %v51
    %v53 = vrot.slane %v48, %v52
    %vm55 = vcmask 261120
    %v57 = vsel %vm55, %v42, 0
    %v60 = vsel %vm55, %v43, 0
    %62 = vmatprep.subr.mxu0 0.0
    %63 = vmatpush1.msra.mxu0 0.0
    %64 = vmatprep.subr.mxu0 0.0
    %65 = vmatpush1.msra.mxu0 0.0
    %66 = vmatprep.subr.mxu0 0.0
    %67 = vmatpush1.msra.mxu0 0.0
    %68 = vmatprep.subr.mxu0 0.0
    %69 = vmatpush1.msra.mxu0 0.0
    %70 = vmatprep.subr.mxu0 0.0
    %71 = vmatpush1.msra.mxu0 0.0
    %72 = vmatprep.subr.mxu0 0.0
    %73 = vmatpush1.msra.mxu0 0.0
    %74 = vmatprep.subr.mxu0 0.0
    %75 = vmatpush1.msra.mxu0 0.0
    %76 = vmatprep.subr.mxu0 0.0
    %77 = vmatpush1.msra.mxu0 0.0
    %78 = vmatprep.subr.mxu0 0.0
    %79 = vmatpush1.msra.mxu0 0.0
    %80 = vmatprep.subr.mxu0 0.0
    %81 = vmatpush1.msra.mxu0 0.0
    %82 = vmatprep.subr.mxu0 0.0
    %83 = vmatpush1.msra.mxu0 0.0
    %84 = vmatprep.subr.mxu0 0.0
    %85 = vmatpush1.msra.mxu0 0.0
    %86 = vmatprep.subr.mxu0 0.0
    %87 = vmatpush1.msra.mxu0 %v47
    %88 = vmatprep.subr.mxu0 0.0
    %89 = vmatpush1.msra.mxu0 %v46
    %90 = vmatprep.subr.mxu0 0.0
    %91 = vmatpush1.msra.mxu0 %v45
    %92 = vmatprep.subr.mxu0 0.0
    %93 = vmatpush1.msra.mxu0 %v44
    %94 = vmatprep.subr.mxu0 0.0
    %95 = vmatpush2.msra.mxu0 0.0
    %96 = vmatprep.subr.mxu0 0.0
    %97 = vmatpush2.msra.mxu0 0.0
    %98 = vmatprep.subr.mxu0 0.0
    %99 = vmatpush2.msra.mxu0 0.0
    %100 = vmatprep.subr.mxu0 0.0
    %101 = vmatpush2.msra.mxu0 0.0
    %102 = vmatprep.subr.mxu0 0.0
    %103 = vmatpush2.msra.mxu0 0.0
    %104 = vmatprep.subr.mxu0 0.0
    %105 = vmatpush2.msra.mxu0 0.0
    %106 = vmatprep.subr.mxu0 0.0
    %107 = vmatpush2.msra.mxu0 0.0
    %108 = vmatprep.subr.mxu0 0.0
    %109 = vmatpush2.msra.mxu0 0.0
    %110 = vmatprep.subr.mxu0 0.0
    %111 = vmatpush2.msra.mxu0 0.0
    %112 = vmatprep.subr.mxu0 0.0
    %113 = vmatpush2.msra.mxu0 0.0
    %114 = vmatprep.subr.mxu0 0.0
    %115 = vmatpush2.msra.mxu0 0.0
    %116 = vmatprep.subr.mxu0 0.0
    %117 = vmatpush2.msra.mxu0 0.0
    %118 = vmatprep.subr.mxu0 0.0
    %119 = vmatpush2.msra.mxu0 0.0
    %120 = vmatprep.subr.mxu0 0.0
    %121 = vmatpush2.msra.mxu0 0.0
    %122 = vmatprep.subr.mxu0 0.0
    %123 = vmatpush2.msra.mxu0 0.0
    %124 = vmatprep.subr.mxu0 0.0
    %125 = vmatpush2.msra.mxu0 0.0
    %126 = vmatprep.mubr.f32.mxu0 0.0
    %127 = vmatmul.mubr.f32.gmra.mxu0 %v57
    %v128 = vpop.f32.mrf.mxu0
    %v129 = vadd.f32 %v53, %v128
    %v130 = vpop.f32.mrf.mxu0
    %131 = vmatprep.mubr.f32.mxu0 0.0
    %132 = vmatmul.mubr.f32.gmra.mxu0 %v60
    %v133 = vpop.f32.mrf.mxu0
    %v134 = vadd.f32 %v53, %v133
    %v135 = vpop.f32.mrf.mxu0
    %136 = vdwg.mxu0
    %v137 = vld [vmem:[%s4] sm:$0xff]
    %v138 = vld [vmem:[%s4 + $0x8] sm:$0xff]
    %v139 = vld [vmem:[%s4 + $0x10] sm:$0xff]
    %v140 = vld [vmem:[%s4 + $0x18] sm:$0xff]
    %v141 = vld [vmem:[%s6] sm:$0x1]
    %v143 = vlaneseq
    %v144 = vshrl.u32 %v143, 7
    %v145 = vsub.s32 0, %v144
    %v146 = vrot.slane %v141, %v145
    %148 = vmatprep.subr.mxu0 0.0
    %149 = vmatpush1.msra.mxu0 0.0
    %150 = vmatprep.subr.mxu0 0.0
    %151 = vmatpush1.msra.mxu0 0.0
    %152 = vmatprep.subr.mxu0 0.0
    %153 = vmatpush1.msra.mxu0 0.0
    %154 = vmatprep.subr.mxu0 0.0
    %155 = vmatpush1.msra.mxu0 0.0
    %156 = vmatprep.subr.mxu0 0.0
    %157 = vmatpush1.msra.mxu0 0.0
    %158 = vmatprep.subr.mxu0 0.0
    %159 = vmatpush1.msra.mxu0 0.0
    %160 = vmatprep.subr.mxu0 0.0
    %161 = vmatpush1.msra.mxu0 0.0
    %162 = vmatprep.subr.mxu0 0.0
    %163 = vmatpush1.msra.mxu0 0.0
    %164 = vmatprep.subr.mxu0 0.0
    %165 = vmatpush1.msra.mxu0 0.0
    %166 = vmatprep.subr.mxu0 0.0
    %167 = vmatpush1.msra.mxu0 0.0
    %168 = vmatprep.subr.mxu0 0.0
    %169 = vmatpush1.msra.mxu0 0.0
    %170 = vmatprep.subr.mxu0 0.0
    %171 = vmatpush1.msra.mxu0 0.0
    %172 = vmatprep.subr.mxu0 0.0
    %173 = vmatpush1.msra.mxu0 %v140
    %174 = vmatprep.subr.mxu0 0.0
    %175 = vmatpush1.msra.mxu0 %v139
    %176 = vmatprep.subr.mxu0 0.0
    %177 = vmatpush1.msra.mxu0 %v138
    %178 = vmatprep.subr.mxu0 0.0
    %179 = vmatpush1.msra.mxu0 %v137
    %180 = vmatprep.subr.mxu0 0.0
    %181 = vmatpush2.msra.mxu0 0.0
    %182 = vmatprep.subr.mxu0 0.0
    %183 = vmatpush2.msra.mxu0 0.0
    %184 = vmatprep.subr.mxu0 0.0
    %185 = vmatpush2.msra.mxu0 0.0
    %186 = vmatprep.subr.mxu0 0.0
    %187 = vmatpush2.msra.mxu0 0.0
    %188 = vmatprep.subr.mxu0 0.0
    %189 = vmatpush2.msra.mxu0 0.0
    %190 = vmatprep.subr.mxu0 0.0
    %191 = vmatpush2.msra.mxu0 0.0
    %192 = vmatprep.subr.mxu0 0.0
    %193 = vmatpush2.msra.mxu0 0.0
    %194 = vmatprep.subr.mxu0 0.0
    %195 = vmatpush2.msra.mxu0 0.0
    %196 = vmatprep.subr.mxu0 0.0
    %197 = vmatpush2.msra.mxu0 0.0
    %198 = vmatprep.subr.mxu0 0.0
    %199 = vmatpush2.msra.mxu0 0.0
    %200 = vmatprep.subr.mxu0 0.0
    %201 = vmatpush2.msra.mxu0 0.0
    %202 = vmatprep.subr.mxu0 0.0
    %203 = vmatpush2.msra.mxu0 0.0
    %204 = vmatprep.subr.mxu0 0.0
    %205 = vmatpush2.msra.mxu0 0.0
    %206 = vmatprep.subr.mxu0 0.0
    %207 = vmatpush2.msra.mxu0 0.0
    %208 = vmatprep.subr.mxu0 0.0
    %209 = vmatpush2.msra.mxu0 0.0
    %210 = vmatprep.subr.mxu0 0.0
    %211 = vmatpush2.msra.mxu0 0.0
    %212 = vmatprep.mubr.f32.mxu0 0.0
    %213 = vmatmul.mubr.f32.gmra.mxu0 %v57
    %v214 = vpop.f32.mrf.mxu0
    %v215 = vadd.f32 %v146, %v214
    %v216 = vpop.f32.mrf.mxu0
    %217 = vmatprep.mubr.f32.mxu0 0.0
    %218 = vmatmul.mubr.f32.gmra.mxu0 %v60
    %v219 = vpop.f32.mrf.mxu0
    %v220 = vadd.f32 %v146, %v219
    %v221 = vpop.f32.mrf.mxu0
    %222 = vdwg.mxu0
    %v223 = vld [vmem:[%s2] sm:$0xff]
    %v224 = vld [vmem:[%s2 + $0x8] sm:$0xff]
    %v225 = vld [vmem:[%s2 + $0x10] sm:$0xff]
    %v226 = vld [vmem:[%s2 + $0x18] sm:$0xff]
    %v227 = vld [vmem:[%s5] sm:$0xff]
    %v228 = vld [vmem:[%s5 + $0x8] sm:$0xff]
    %v229 = vld [vmem:[%s5 + $0x10] sm:$0xff]
    %v230 = vld [vmem:[%s5 + $0x18] sm:$0xff]
    %v232 = vsel %vm55, 0.0, 0
    %234 = vmatprep.subr.mxu0 0.0
    %235 = vmatpush1.msra.mxu0 0.0
    %236 = vmatprep.subr.mxu0 0.0
    %237 = vmatpush1.msra.mxu0 0.0
    %238 = vmatprep.subr.mxu0 0.0
    %239 = vmatpush1.msra.mxu0 0.0
    %240 = vmatprep.subr.mxu0 0.0
    %241 = vmatpush1.msra.mxu0 0.0
    %242 = vmatprep.subr.mxu0 0.0
    %243 = vmatpush1.msra.mxu0 0.0
    %244 = vmatprep.subr.mxu0 0.0
    %245 = vmatpush1.msra.mxu0 0.0
    %246 = vmatprep.subr.mxu0 0.0
    %247 = vmatpush1.msra.mxu0 0.0
    %248 = vmatprep.subr.mxu0 0.0
    %249 = vmatpush1.msra.mxu0 0.0
    %250 = vmatprep.subr.mxu0 0.0
    %251 = vmatpush1.msra.mxu0 0.0
    %252 = vmatprep.subr.mxu0 0.0
    %253 = vmatpush1.msra.mxu0 0.0
    %254 = vmatprep.subr.mxu0 0.0
    %255 = vmatpush1.msra.mxu0 0.0
    %256 = vmatprep.subr.mxu0 0.0
    %257 = vmatpush1.msra.mxu0 0.0
    %258 = vmatprep.subr.mxu0 0.0
    %259 = vmatpush1.msra.mxu0 %v226
    %260 = vmatprep.subr.mxu0 0.0
    %261 = vmatpush1.msra.mxu0 %v225
    %262 = vmatprep.subr.mxu0 0.0
    %263 = vmatpush1.msra.mxu0 %v224
    %264 = vmatprep.subr.mxu0 0.0
    %265 = vmatpush1.msra.mxu0 %v223
    %266 = vmatprep.subr.mxu0 0.0
    %267 = vmatpush2.msra.mxu0 0.0
    %268 = vmatprep.subr.mxu0 0.0
    %269 = vmatpush2.msra.mxu0 0.0
    %270 = vmatprep.subr.mxu0 0.0
    %271 = vmatpush2.msra.mxu0 0.0
    %272 = vmatprep.subr.mxu0 0.0
    %273 = vmatpush2.msra.mxu0 0.0
    %274 = vmatprep.subr.mxu0 0.0
    %275 = vmatpush2.msra.mxu0 0.0
    %276 = vmatprep.subr.mxu0 0.0
    %277 = vmatpush2.msra.mxu0 0.0
    %278 = vmatprep.subr.mxu0 0.0
    %279 = vmatpush2.msra.mxu0 0.0
    %280 = vmatprep.subr.mxu0 0.0
    %281 = vmatpush2.msra.mxu0 0.0
    %282 = vmatprep.subr.mxu0 0.0
    %283 = vmatpush2.msra.mxu0 0.0
    %284 = vmatprep.subr.mxu0 0.0
    %285 = vmatpush2.msra.mxu0 0.0
    %286 = vmatprep.subr.mxu0 0.0
    %287 = vmatpush2.msra.mxu0 0.0
    %288 = vmatprep.subr.mxu0 0.0
    %289 = vmatpush2.msra.mxu0 0.0
    %290 = vmatprep.subr.mxu0 0.0
    %291 = vmatpush2.msra.mxu0 0.0
    %292 = vmatprep.subr.mxu0 0.0
    %293 = vmatpush2.msra.mxu0 0.0
    %294 = vmatprep.subr.mxu0 0.0
    %295 = vmatpush2.msra.mxu0 0.0
    %296 = vmatprep.subr.mxu0 0.0
    %297 = vmatpush2.msra.mxu0 0.0
    %298 = vmatprep.mubr.f32.mxu0 0.0
    %299 = vmatmul.mubr.f32.gmra.mxu0 %v232
    %v300 = vpop.f32.mrf.mxu0
    %v301 = vadd.f32 0.0, %v300
    %v302 = vpop.f32.mrf.mxu0
    %303 = vdwg.mxu0
    %v304 = vadd.f32 %v129, %v301
    %v305 = vxor.u32 %v304, 2147483648
    %v306 = vmul.f32 %v305, 1.442695
    %v307 = vpow.pop %v306
    %v308 = vadd.f32 %v307, 1.0
    %v309 = vrcp.pop %v308
    %v310 = vmul.f32 1.0, %v309
    %v311 = vtanh.pop %v304
    %v312 = vmul.f32 %v310, 0.0
    %314 = vrot.lane.b32.xlu0 %v311, 64
    %v315 = vpop.permute.xlu0 %314
    %v317 = vmul.f32 %v310, %v315
    %319 = vrot.lane.b32.xlu0 %v317, 32
    %v320 = vpop.permute.xlu0 %319
    %v322 = vadd.f32 %v312, %v320
    %v323 = vtanh.pop %v322
    %325 = vrot.lane.b32.xlu0 %v323, 64
    %v326 = vpop.permute.xlu0 %325
    %v328 = vmul.f32 %v310, %v326
    %330 = vrot.lane.b32.xlu0 %v328, 32
    %v331 = vpop.permute.xlu0 %330
    %v332 = vsel %vm55, %v331, 0
    %334 = vmatprep.subr.mxu0 0.0
    %335 = vmatpush1.msra.mxu0 0.0
    %336 = vmatprep.subr.mxu0 0.0
    %337 = vmatpush1.msra.mxu0 0.0
    %338 = vmatprep.subr.mxu0 0.0
    %339 = vmatpush1.msra.mxu0 0.0
    %340 = vmatprep.subr.mxu0 0.0
    %341 = vmatpush1.msra.mxu0 0.0
    %342 = vmatprep.subr.mxu0 0.0
    %343 = vmatpush1.msra.mxu0 0.0
    %344 = vmatprep.subr.mxu0 0.0
    %345 = vmatpush1.msra.mxu0 0.0
    %346 = vmatprep.subr.mxu0 0.0
    %347 = vmatpush1.msra.mxu0 0.0
    %348 = vmatprep.subr.mxu0 0.0
    %349 = vmatpush1.msra.mxu0 0.0
    %350 = vmatprep.subr.mxu0 0.0
    %351 = vmatpush1.msra.mxu0 0.0
    %352 = vmatprep.subr.mxu0 0.0
    %353 = vmatpush1.msra.mxu0 0.0
    %354 = vmatprep.subr.mxu0 0.0
    %355 = vmatpush1.msra.mxu0 0.0
    %356 = vmatprep.subr.mxu0 0.0
    %357 = vmatpush1.msra.mxu0 0.0
    %358 = vmatprep.subr.mxu0 0.0
    %359 = vmatpush1.msra.mxu0 %v226
    %360 = vmatprep.subr.mxu0 0.0
    %361 = vmatpush1.msra.mxu0 %v225
    %362 = vmatprep.subr.mxu0 0.0
    %363 = vmatpush1.msra.mxu0 %v224
    %364 = vmatprep.subr.mxu0 0.0
    %365 = vmatpush1.msra.mxu0 %v223
    %366 = vmatprep.subr.mxu0 0.0
    %367 = vmatpush2.msra.mxu0 0.0
    %368 = vmatprep.subr.mxu0 0.0
    %369 = vmatpush2.msra.mxu0 0.0
    %370 = vmatprep.subr.mxu0 0.0
    %371 = vmatpush2.msra.mxu0 0.0
    %372 = vmatprep.subr.mxu0 0.0
    %373 = vmatpush2.msra.mxu0 0.0
    %374 = vmatprep.subr.mxu0 0.0
    %375 = vmatpush2.msra.mxu0 0.0
    %376 = vmatprep.subr.mxu0 0.0
    %377 = vmatpush2.msra.mxu0 0.0
    %378 = vmatprep.subr.mxu0 0.0
    %379 = vmatpush2.msra.mxu0 0.0
    %380 = vmatprep.subr.mxu0 0.0
    %381 = vmatpush2.msra.mxu0 0.0
    %382 = vmatprep.subr.mxu0 0.0
    %383 = vmatpush2.msra.mxu0 0.0
    %384 = vmatprep.subr.mxu0 0.0
    %385 = vmatpush2.msra.mxu0 0.0
    %386 = vmatprep.subr.mxu0 0.0
    %387 = vmatpush2.msra.mxu0 0.0
    %388 = vmatprep.subr.mxu0 0.0
    %389 = vmatpush2.msra.mxu0 0.0
    %390 = vmatprep.subr.mxu0 0.0
    %391 = vmatpush2.msra.mxu0 0.0
    %392 = vmatprep.subr.mxu0 0.0
    %393 = vmatpush2.msra.mxu0 0.0
    %394 = vmatprep.subr.mxu0 0.0
    %395 = vmatpush2.msra.mxu0 0.0
    %396 = vmatprep.subr.mxu0 0.0
    %397 = vmatpush2.msra.mxu0 0.0
    %398 = vmatprep.mubr.f32.mxu0 0.0
    %399 = vmatmul.mubr.f32.gmra.mxu0 %v332
    %v400 = vpop.f32.mrf.mxu0
    %v401 = vadd.f32 0.0, %v400
    %v402 = vpop.f32.mrf.mxu0
    %403 = vdwg.mxu0
    %v405 = vrot.slane %v401, 6
    %v407 = vadd.f32 %v129, %v405
    %v408 = vxor.u32 %v407, 2147483648
    %v409 = vmul.f32 %v408, 1.442695
    %v410 = vpow.pop %v409
    %v411 = vadd.f32 %v410, 1.0
    %v412 = vrcp.pop %v411
    %v413 = vmul.f32 1.0, %v412
    %v414 = vtanh.pop %v407
    %v416 = vrot.slane %v322, 6
    %v418 = vmul.f32 %v413, %v416
    %420 = vrot.lane.b32.xlu0 %v414, 64
    %v421 = vpop.permute.xlu0 %420
    %v423 = vmul.f32 %v413, %v421
    %425 = vrot.lane.b32.xlu0 %v423, 32
    %v426 = vpop.permute.xlu0 %425
    %v428 = vadd.f32 %v418, %v426
    %v429 = vtanh.pop %v428
    %431 = vrot.lane.b32.xlu0 %v429, 64
    %v432 = vpop.permute.xlu0 %431
    %v434 = vmul.f32 %v413, %v432
    %v436 = vrot.slane %v434, 2
    %437 = vrot.lane.b32.xlu0 %v436, 32
    %v438 = vpop.permute.xlu0 %437
    %v439 = vsel %vm55, %v438, 0
    %441 = vmatprep.subr.mxu0 0.0
    %442 = vmatpush1.msra.mxu0 0.0
    %443 = vmatprep.subr.mxu0 0.0
    %444 = vmatpush1.msra.mxu0 0.0
    %445 = vmatprep.subr.mxu0 0.0
    %446 = vmatpush1.msra.mxu0 0.0
    %447 = vmatprep.subr.mxu0 0.0
    %448 = vmatpush1.msra.mxu0 0.0
    %449 = vmatprep.subr.mxu0 0.0
    %450 = vmatpush1.msra.mxu0 0.0
    %451 = vmatprep.subr.mxu0 0.0
    %452 = vmatpush1.msra.mxu0 0.0
    %453 = vmatprep.subr.mxu0 0.0
    %454 = vmatpush1.msra.mxu0 0.0
    %455 = vmatprep.subr.mxu0 0.0
    %456 = vmatpush1.msra.mxu0 0.0
    %457 = vmatprep.subr.mxu0 0.0
    %458 = vmatpush1.msra.mxu0 0.0
    %459 = vmatprep.subr.mxu0 0.0
    %460 = vmatpush1.msra.mxu0 0.0
    %461 = vmatprep.subr.mxu0 0.0
    %462 = vmatpush1.msra.mxu0 0.0
    %463 = vmatprep.subr.mxu0 0.0
    %464 = vmatpush1.msra.mxu0 0.0
    %465 = vmatprep.subr.mxu0 0.0
    %466 = vmatpush1.msra.mxu0 %v226
    %467 = vmatprep.subr.mxu0 0.0
    %468 = vmatpush1.msra.mxu0 %v225
    %469 = vmatprep.subr.mxu0 0.0
    %470 = vmatpush1.msra.mxu0 %v224
    %471 = vmatprep.subr.mxu0 0.0
    %472 = vmatpush1.msra.mxu0 %v223
    %473 = vmatprep.subr.mxu0 0.0
    %474 = vmatpush2.msra.mxu0 0.0
    %475 = vmatprep.subr.mxu0 0.0
    %476 = vmatpush2.msra.mxu0 0.0
    %477 = vmatprep.subr.mxu0 0.0
    %478 = vmatpush2.msra.mxu0 0.0
    %479 = vmatprep.subr.mxu0 0.0
    %480 = vmatpush2.msra.mxu0 0.0
    %481 = vmatprep.subr.mxu0 0.0
    %482 = vmatpush2.msra.mxu0 0.0
    %483 = vmatprep.subr.mxu0 0.0
    %484 = vmatpush2.msra.mxu0 0.0
    %485 = vmatprep.subr.mxu0 0.0
    %486 = vmatpush2.msra.mxu0 0.0
    %487 = vmatprep.subr.mxu0 0.0
    %488 = vmatpush2.msra.mxu0 0.0
    %489 = vmatprep.subr.mxu0 0.0
    %490 = vmatpush2.msra.mxu0 0.0
    %491 = vmatprep.subr.mxu0 0.0
    %492 = vmatpush2.msra.mxu0 0.0
    %493 = vmatprep.subr.mxu0 0.0
    %494 = vmatpush2.msra.mxu0 0.0
    %495 = vmatprep.subr.mxu0 0.0
    %496 = vmatpush2.msra.mxu0 0.0
    %497 = vmatprep.subr.mxu0 0.0
    %498 = vmatpush2.msra.mxu0 0.0
    %499 = vmatprep.subr.mxu0 0.0
    %500 = vmatpush2.msra.mxu0 0.0
    %501 = vmatprep.subr.mxu0 0.0
    %502 = vmatpush2.msra.mxu0 0.0
    %503 = vmatprep.subr.mxu0 0.0
    %504 = vmatpush2.msra.mxu0 0.0
    %505 = vmatprep.mubr.f32.mxu0 0.0
    %506 = vmatmul.mubr.f32.gmra.mxu0 %v439
    %v507 = vpop.f32.mrf.mxu0
    %v508 = vadd.f32 0.0, %v507
    %v509 = vpop.f32.mrf.mxu0
    %510 = vdwg.mxu0
    %v512 = vrot.slane %v508, 4
    %v514 = vadd.f32 %v129, %v512
    %v515 = vxor.u32 %v514, 2147483648
    %v516 = vmul.f32 %v515, 1.442695
    %v517 = vpow.pop %v516
    %v518 = vadd.f32 %v517, 1.0
    %v519 = vrcp.pop %v518
    %v520 = vmul.f32 1.0, %v519
    %v521 = vtanh.pop %v514
    %v523 = vrot.slane %v428, 6
    %v525 = vmul.f32 %v520, %v523
    %527 = vrot.lane.b32.xlu0 %v521, 64
    %v528 = vpop.permute.xlu0 %527
    %v530 = vmul.f32 %v520, %v528
    %532 = vrot.lane.b32.xlu0 %v530, 32
    %v533 = vpop.permute.xlu0 %532
    %v535 = vadd.f32 %v525, %v533
    %v536 = vtanh.pop %v535
    %538 = vrot.lane.b32.xlu0 %v536, 64
    %v539 = vpop.permute.xlu0 %538
    %v541 = vmul.f32 %v520, %v539
    %v543 = vrot.slane %v541, 4
    %544 = vrot.lane.b32.xlu0 %v543, 32
    %v545 = vpop.permute.xlu0 %544
    %v546 = vsel %vm55, %v545, 0
    %548 = vmatprep.subr.mxu0 0.0
    %549 = vmatpush1.msra.mxu0 0.0
    %550 = vmatprep.subr.mxu0 0.0
    %551 = vmatpush1.msra.mxu0 0.0
    %552 = vmatprep.subr.mxu0 0.0
    %553 = vmatpush1.msra.mxu0 0.0
    %554 = vmatprep.subr.mxu0 0.0
    %555 = vmatpush1.msra.mxu0 0.0
    %556 = vmatprep.subr.mxu0 0.0
    %557 = vmatpush1.msra.mxu0 0.0
    %558 = vmatprep.subr.mxu0 0.0
    %559 = vmatpush1.msra.mxu0 0.0
    %560 = vmatprep.subr.mxu0 0.0
    %561 = vmatpush1.msra.mxu0 0.0
    %562 = vmatprep.subr.mxu0 0.0
    %563 = vmatpush1.msra.mxu0 0.0
    %564 = vmatprep.subr.mxu0 0.0
    %565 = vmatpush1.msra.mxu0 0.0
    %566 = vmatprep.subr.mxu0 0.0
    %567 = vmatpush1.msra.mxu0 0.0
    %568 = vmatprep.subr.mxu0 0.0
    %569 = vmatpush1.msra.mxu0 0.0
    %570 = vmatprep.subr.mxu0 0.0
    %571 = vmatpush1.msra.mxu0 0.0
    %572 = vmatprep.subr.mxu0 0.0
    %573 = vmatpush1.msra.mxu0 %v226
    %574 = vmatprep.subr.mxu0 0.0
    %575 = vmatpush1.msra.mxu0 %v225
    %576 = vmatprep.subr.mxu0 0.0
    %577 = vmatpush1.msra.mxu0 %v224
    %578 = vmatprep.subr.mxu0 0.0
    %579 = vmatpush1.msra.mxu0 %v223
    %580 = vmatprep.subr.mxu0 0.0
    %581 = vmatpush2.msra.mxu0 0.0
    %582 = vmatprep.subr.mxu0 0.0
    %583 = vmatpush2.msra.mxu0 0.0
    %584 = vmatprep.subr.mxu0 0.0
    %585 = vmatpush2.msra.mxu0 0.0
    %586 = vmatprep.subr.mxu0 0.0
    %587 = vmatpush2.msra.mxu0 0.0
    %588 = vmatprep.subr.mxu0 0.0
    %589 = vmatpush2.msra.mxu0 0.0
    %590 = vmatprep.subr.mxu0 0.0
    %591 = vmatpush2.msra.mxu0 0.0
    %592 = vmatprep.subr.mxu0 0.0
    %593 = vmatpush2.msra.mxu0 0.0
    %594 = vmatprep.subr.mxu0 0.0
    %595 = vmatpush2.msra.mxu0 0.0
    %596 = vmatprep.subr.mxu0 0.0
    %597 = vmatpush2.msra.mxu0 0.0
    %598 = vmatprep.subr.mxu0 0.0
    %599 = vmatpush2.msra.mxu0 0.0
    %600 = vmatprep.subr.mxu0 0.0
    %601 = vmatpush2.msra.mxu0 0.0
    %602 = vmatprep.subr.mxu0 0.0
    %603 = vmatpush2.msra.mxu0 0.0
    %604 = vmatprep.subr.mxu0 0.0
    %605 = vmatpush2.msra.mxu0 0.0
    %606 = vmatprep.subr.mxu0 0.0
    %607 = vmatpush2.msra.mxu0 0.0
    %608 = vmatprep.subr.mxu0 0.0
    %609 = vmatpush2.msra.mxu0 0.0
    %610 = vmatprep.subr.mxu0 0.0
    %611 = vmatpush2.msra.mxu0 0.0
    %612 = vmatprep.mubr.f32.mxu0 0.0
    %613 = vmatmul.mubr.f32.gmra.mxu0 %v546
    %v614 = vpop.f32.mrf.mxu0
    %v615 = vadd.f32 0.0, %v614
    %v616 = vpop.f32.mrf.mxu0
    %617 = vdwg.mxu0
    %v619 = vrot.slane %v615, 2
    %v621 = vadd.f32 %v129, %v619
    %v622 = vxor.u32 %v621, 2147483648
    %v623 = vmul.f32 %v622, 1.442695
    %v624 = vpow.pop %v623
    %v625 = vadd.f32 %v624, 1.0
    %v626 = vrcp.pop %v625
    %v627 = vmul.f32 1.0, %v626
    %v628 = vtanh.pop %v621
    %v630 = vrot.slane %v535, 6
    %v632 = vmul.f32 %v627, %v630
    %634 = vrot.lane.b32.xlu0 %v628, 64
    %v635 = vpop.permute.xlu0 %634
    %v637 = vmul.f32 %v627, %v635
    %639 = vrot.lane.b32.xlu0 %v637, 32
    %v640 = vpop.permute.xlu0 %639
    %v642 = vadd.f32 %v632, %v640
    %v643 = vtanh.pop %v642
    %645 = vrot.lane.b32.xlu0 %v643, 64
    %v646 = vpop.permute.xlu0 %645
    %v648 = vmul.f32 %v627, %v646
    %v650 = vrot.slane %v648, 6
    %651 = vrot.lane.b32.xlu0 %v650, 32
    %v652 = vpop.permute.xlu0 %651
    %v653 = vsel %vm55, %v652, 0
    %655 = vmatprep.subr.mxu0 0.0
    %656 = vmatpush1.msra.mxu0 0.0
    %657 = vmatprep.subr.mxu0 0.0
    %658 = vmatpush1.msra.mxu0 0.0
    %659 = vmatprep.subr.mxu0 0.0
    %660 = vmatpush1.msra.mxu0 0.0
    %661 = vmatprep.subr.mxu0 0.0
    %662 = vmatpush1.msra.mxu0 0.0
    %663 = vmatprep.subr.mxu0 0.0
    %664 = vmatpush1.msra.mxu0 0.0
    %665 = vmatprep.subr.mxu0 0.0
    %666 = vmatpush1.msra.mxu0 0.0
    %667 = vmatprep.subr.mxu0 0.0
    %668 = vmatpush1.msra.mxu0 0.0
    %669 = vmatprep.subr.mxu0 0.0
    %670 = vmatpush1.msra.mxu0 0.0
    %671 = vmatprep.subr.mxu0 0.0
    %672 = vmatpush1.msra.mxu0 0.0
    %673 = vmatprep.subr.mxu0 0.0
    %674 = vmatpush1.msra.mxu0 0.0
    %675 = vmatprep.subr.mxu0 0.0
    %676 = vmatpush1.msra.mxu0 0.0
    %677 = vmatprep.subr.mxu0 0.0
    %678 = vmatpush1.msra.mxu0 0.0
    %679 = vmatprep.subr.mxu0 0.0
    %680 = vmatpush1.msra.mxu0 %v226
    %681 = vmatprep.subr.mxu0 0.0
    %682 = vmatpush1.msra.mxu0 %v225
    %683 = vmatprep.subr.mxu0 0.0
    %684 = vmatpush1.msra.mxu0 %v224
    %685 = vmatprep.subr.mxu0 0.0
    %686 = vmatpush1.msra.mxu0 %v223
    %687 = vmatprep.subr.mxu0 0.0
    %688 = vmatpush2.msra.mxu0 0.0
    %689 = vmatprep.subr.mxu0 0.0
    %690 = vmatpush2.msra.mxu0 0.0
    %691 = vmatprep.subr.mxu0 0.0
    %692 = vmatpush2.msra.mxu0 0.0
    %693 = vmatprep.subr.mxu0 0.0
    %694 = vmatpush2.msra.mxu0 0.0
    %695 = vmatprep.subr.mxu0 0.0
    %696 = vmatpush2.msra.mxu0 0.0
    %697 = vmatprep.subr.mxu0 0.0
    %698 = vmatpush2.msra.mxu0 0.0
    %699 = vmatprep.subr.mxu0 0.0
    %700 = vmatpush2.msra.mxu0 0.0
    %701 = vmatprep.subr.mxu0 0.0
    %702 = vmatpush2.msra.mxu0 0.0
    %703 = vmatprep.subr.mxu0 0.0
    %704 = vmatpush2.msra.mxu0 0.0
    %705 = vmatprep.subr.mxu0 0.0
    %706 = vmatpush2.msra.mxu0 0.0
    %707 = vmatprep.subr.mxu0 0.0
    %708 = vmatpush2.msra.mxu0 0.0
    %709 = vmatprep.subr.mxu0 0.0
    %710 = vmatpush2.msra.mxu0 0.0
    %711 = vmatprep.subr.mxu0 0.0
    %712 = vmatpush2.msra.mxu0 0.0
    %713 = vmatprep.subr.mxu0 0.0
    %714 = vmatpush2.msra.mxu0 0.0
    %715 = vmatprep.subr.mxu0 0.0
    %716 = vmatpush2.msra.mxu0 0.0
    %717 = vmatprep.subr.mxu0 0.0
    %718 = vmatpush2.msra.mxu0 0.0
    %719 = vmatprep.mubr.f32.mxu0 0.0
    %720 = vmatmul.mubr.f32.gmra.mxu0 %v653
    %v721 = vpop.f32.mrf.mxu0
    %v722 = vadd.f32 0.0, %v721
    %v723 = vpop.f32.mrf.mxu0
    %724 = vdwg.mxu0
    %v725 = vadd.f32 %v134, %v722
    %v726 = vxor.u32 %v725, 2147483648
    %v727 = vmul.f32 %v726, 1.442695
    %v728 = vpow.pop %v727
    %v729 = vadd.f32 %v728, 1.0
    %v730 = vrcp.pop %v729
    %v731 = vmul.f32 1.0, %v730
    %v732 = vtanh.pop %v725
    %v734 = vrot.slane %v642, 6
    %v736 = vmul.f32 %v731, %v734
    %738 = vrot.lane.b32.xlu0 %v732, 64
    %v739 = vpop.permute.xlu0 %738
    %v741 = vmul.f32 %v731, %v739
    %743 = vrot.lane.b32.xlu0 %v741, 32
    %v744 = vpop.permute.xlu0 %743
    %v746 = vadd.f32 %v736, %v744
    %v747 = vtanh.pop %v746
    %749 = vrot.lane.b32.xlu0 %v747, 64
    %v750 = vpop.permute.xlu0 %749
    %v752 = vmul.f32 %v731, %v750
    %754 = vrot.lane.b32.xlu0 %v752, 32
    %v755 = vpop.permute.xlu0 %754
    %v756 = vsel %vm55, %v755, 0
    %758 = vmatprep.subr.mxu0 0.0
    %759 = vmatpush1.msra.mxu0 0.0
    %760 = vmatprep.subr.mxu0 0.0
    %761 = vmatpush1.msra.mxu0 0.0
    %762 = vmatprep.subr.mxu0 0.0
    %763 = vmatpush1.msra.mxu0 0.0
    %764 = vmatprep.subr.mxu0 0.0
    %765 = vmatpush1.msra.mxu0 0.0
    %766 = vmatprep.subr.mxu0 0.0
    %767 = vmatpush1.msra.mxu0 0.0
    %768 = vmatprep.subr.mxu0 0.0
    %769 = vmatpush1.msra.mxu0 0.0
    %770 = vmatprep.subr.mxu0 0.0
    %771 = vmatpush1.msra.mxu0 0.0
    %772 = vmatprep.subr.mxu0 0.0
    %773 = vmatpush1.msra.mxu0 0.0
    %774 = vmatprep.subr.mxu0 0.0
    %775 = vmatpush1.msra.mxu0 0.0
    %776 = vmatprep.subr.mxu0 0.0
    %777 = vmatpush1.msra.mxu0 0.0
    %778 = vmatprep.subr.mxu0 0.0
    %779 = vmatpush1.msra.mxu0 0.0
    %780 = vmatprep.subr.mxu0 0.0
    %781 = vmatpush1.msra.mxu0 0.0
    %782 = vmatprep.subr.mxu0 0.0
    %783 = vmatpush1.msra.mxu0 %v226
    %784 = vmatprep.subr.mxu0 0.0
    %785 = vmatpush1.msra.mxu0 %v225
    %786 = vmatprep.subr.mxu0 0.0
    %787 = vmatpush1.msra.mxu0 %v224
    %788 = vmatprep.subr.mxu0 0.0
    %789 = vmatpush1.msra.mxu0 %v223
    %790 = vmatprep.subr.mxu0 0.0
    %791 = vmatpush2.msra.mxu0 0.0
    %792 = vmatprep.subr.mxu0 0.0
    %793 = vmatpush2.msra.mxu0 0.0
    %794 = vmatprep.subr.mxu0 0.0
    %795 = vmatpush2.msra.mxu0 0.0
    %796 = vmatprep.subr.mxu0 0.0
    %797 = vmatpush2.msra.mxu0 0.0
    %798 = vmatprep.subr.mxu0 0.0
    %799 = vmatpush2.msra.mxu0 0.0
    %800 = vmatprep.subr.mxu0 0.0
    %801 = vmatpush2.msra.mxu0 0.0
    %802 = vmatprep.subr.mxu0 0.0
    %803 = vmatpush2.msra.mxu0 0.0
    %804 = vmatprep.subr.mxu0 0.0
    %805 = vmatpush2.msra.mxu0 0.0
    %806 = vmatprep.subr.mxu0 0.0
    %807 = vmatpush2.msra.mxu0 0.0
    %808 = vmatprep.subr.mxu0 0.0
    %809 = vmatpush2.msra.mxu0 0.0
    %810 = vmatprep.subr.mxu0 0.0
    %811 = vmatpush2.msra.mxu0 0.0
    %812 = vmatprep.subr.mxu0 0.0
    %813 = vmatpush2.msra.mxu0 0.0
    %814 = vmatprep.subr.mxu0 0.0
    %815 = vmatpush2.msra.mxu0 0.0
    %816 = vmatprep.subr.mxu0 0.0
    %817 = vmatpush2.msra.mxu0 0.0
    %818 = vmatprep.subr.mxu0 0.0
    %819 = vmatpush2.msra.mxu0 0.0
    %820 = vmatprep.subr.mxu0 0.0
    %821 = vmatpush2.msra.mxu0 0.0
    %822 = vmatprep.mubr.f32.mxu0 0.0
    %823 = vmatmul.mubr.f32.gmra.mxu0 %v756
    %v824 = vpop.f32.mrf.mxu0
    %v825 = vadd.f32 0.0, %v824
    %v826 = vpop.f32.mrf.mxu0
    %827 = vdwg.mxu0
    %v829 = vrot.slane %v825, 6
    %v831 = vadd.f32 %v134, %v829
    %v832 = vxor.u32 %v831, 2147483648
    %v833 = vmul.f32 %v832, 1.442695
    %v834 = vpow.pop %v833
    %v835 = vadd.f32 %v834, 1.0
    %v836 = vrcp.pop %v835
    %v837 = vmul.f32 1.0, %v836
    %v838 = vtanh.pop %v831
    %v840 = vrot.slane %v746, 6
    %v842 = vmul.f32 %v837, %v840
    %844 = vrot.lane.b32.xlu0 %v838, 64
    %v845 = vpop.permute.xlu0 %844
    %v847 = vmul.f32 %v837, %v845
    %849 = vrot.lane.b32.xlu0 %v847, 32
    %v850 = vpop.permute.xlu0 %849
    %v852 = vadd.f32 %v842, %v850
    %v853 = vtanh.pop %v852
    %855 = vrot.lane.b32.xlu0 %v853, 64
    %v856 = vpop.permute.xlu0 %855
    %v858 = vmul.f32 %v837, %v856
    %v860 = vrot.slane %v858, 2
    %861 = vrot.lane.b32.xlu0 %v860, 32
    %v862 = vpop.permute.xlu0 %861
    %v863 = vsel %vm55, %v862, 0
    %865 = vmatprep.subr.mxu0 0.0
    %866 = vmatpush1.msra.mxu0 0.0
    %867 = vmatprep.subr.mxu0 0.0
    %868 = vmatpush1.msra.mxu0 0.0
    %869 = vmatprep.subr.mxu0 0.0
    %870 = vmatpush1.msra.mxu0 0.0
    %871 = vmatprep.subr.mxu0 0.0
    %872 = vmatpush1.msra.mxu0 0.0
    %873 = vmatprep.subr.mxu0 0.0
    %874 = vmatpush1.msra.mxu0 0.0
    %875 = vmatprep.subr.mxu0 0.0
    %876 = vmatpush1.msra.mxu0 0.0
    %877 = vmatprep.subr.mxu0 0.0
    %878 = vmatpush1.msra.mxu0 0.0
    %879 = vmatprep.subr.mxu0 0.0
    %880 = vmatpush1.msra.mxu0 0.0
    %881 = vmatprep.subr.mxu0 0.0
    %882 = vmatpush1.msra.mxu0 0.0
    %883 = vmatprep.subr.mxu0 0.0
    %884 = vmatpush1.msra.mxu0 0.0
    %885 = vmatprep.subr.mxu0 0.0
    %886 = vmatpush1.msra.mxu0 0.0
    %887 = vmatprep.subr.mxu0 0.0
    %888 = vmatpush1.msra.mxu0 0.0
    %889 = vmatprep.subr.mxu0 0.0
    %890 = vmatpush1.msra.mxu0 %v226
    %891 = vmatprep.subr.mxu0 0.0
    %892 = vmatpush1.msra.mxu0 %v225
    %893 = vmatprep.subr.mxu0 0.0
    %894 = vmatpush1.msra.mxu0 %v224
    %895 = vmatprep.subr.mxu0 0.0
    %896 = vmatpush1.msra.mxu0 %v223
    %897 = vmatprep.subr.mxu0 0.0
    %898 = vmatpush2.msra.mxu0 0.0
    %899 = vmatprep.subr.mxu0 0.0
    %900 = vmatpush2.msra.mxu0 0.0
    %901 = vmatprep.subr.mxu0 0.0
    %902 = vmatpush2.msra.mxu0 0.0
    %903 = vmatprep.subr.mxu0 0.0
    %904 = vmatpush2.msra.mxu0 0.0
    %905 = vmatprep.subr.mxu0 0.0
    %906 = vmatpush2.msra.mxu0 0.0
    %907 = vmatprep.subr.mxu0 0.0
    %908 = vmatpush2.msra.mxu0 0.0
    %909 = vmatprep.subr.mxu0 0.0
    %910 = vmatpush2.msra.mxu0 0.0
    %911 = vmatprep.subr.mxu0 0.0
    %912 = vmatpush2.msra.mxu0 0.0
    %913 = vmatprep.subr.mxu0 0.0
    %914 = vmatpush2.msra.mxu0 0.0
    %915 = vmatprep.subr.mxu0 0.0
    %916 = vmatpush2.msra.mxu0 0.0
    %917 = vmatprep.subr.mxu0 0.0
    %918 = vmatpush2.msra.mxu0 0.0
    %919 = vmatprep.subr.mxu0 0.0
    %920 = vmatpush2.msra.mxu0 0.0
    %921 = vmatprep.subr.mxu0 0.0
    %922 = vmatpush2.msra.mxu0 0.0
    %923 = vmatprep.subr.mxu0 0.0
    %924 = vmatpush2.msra.mxu0 0.0
    %925 = vmatprep.subr.mxu0 0.0
    %926 = vmatpush2.msra.mxu0 0.0
    %927 = vmatprep.subr.mxu0 0.0
    %928 = vmatpush2.msra.mxu0 0.0
    %929 = vmatprep.mubr.f32.mxu0 0.0
    %930 = vmatmul.mubr.f32.gmra.mxu0 %v863
    %v931 = vpop.f32.mrf.mxu0
    %v932 = vadd.f32 0.0, %v931
    %v933 = vpop.f32.mrf.mxu0
    %934 = vdwg.mxu0
    %v936 = vrot.slane %v932, 4
    %v938 = vadd.f32 %v134, %v936
    %v939 = vxor.u32 %v938, 2147483648
    %v940 = vmul.f32 %v939, 1.442695
    %v941 = vpow.pop %v940
    %v942 = vadd.f32 %v941, 1.0
    %v943 = vrcp.pop %v942
    %v944 = vmul.f32 1.0, %v943
    %v945 = vtanh.pop %v938
    %v947 = vrot.slane %v852, 6
    %v949 = vmul.f32 %v944, %v947
    %951 = vrot.lane.b32.xlu0 %v945, 64
    %v952 = vpop.permute.xlu0 %951
    %v954 = vmul.f32 %v944, %v952
    %956 = vrot.lane.b32.xlu0 %v954, 32
    %v957 = vpop.permute.xlu0 %956
    %v959 = vadd.f32 %v949, %v957
    %v960 = vtanh.pop %v959
    %962 = vrot.lane.b32.xlu0 %v960, 64
    %v963 = vpop.permute.xlu0 %962
    %v965 = vmul.f32 %v944, %v963
    %v967 = vrot.slane %v965, 4
    %968 = vrot.lane.b32.xlu0 %v967, 32
    %v969 = vpop.permute.xlu0 %968
    %v970 = vsel %vm55, %v969, 0
    %972 = vmatprep.subr.mxu0 0.0
    %973 = vmatpush1.msra.mxu0 0.0
    %974 = vmatprep.subr.mxu0 0.0
    %975 = vmatpush1.msra.mxu0 0.0
    %976 = vmatprep.subr.mxu0 0.0
    %977 = vmatpush1.msra.mxu0 0.0
    %978 = vmatprep.subr.mxu0 0.0
    %979 = vmatpush1.msra.mxu0 0.0
    %980 = vmatprep.subr.mxu0 0.0
    %981 = vmatpush1.msra.mxu0 0.0
    %982 = vmatprep.subr.mxu0 0.0
    %983 = vmatpush1.msra.mxu0 0.0
    %984 = vmatprep.subr.mxu0 0.0
    %985 = vmatpush1.msra.mxu0 0.0
    %986 = vmatprep.subr.mxu0 0.0
    %987 = vmatpush1.msra.mxu0 0.0
    %988 = vmatprep.subr.mxu0 0.0
    %989 = vmatpush1.msra.mxu0 0.0
    %990 = vmatprep.subr.mxu0 0.0
    %991 = vmatpush1.msra.mxu0 0.0
    %992 = vmatprep.subr.mxu0 0.0
    %993 = vmatpush1.msra.mxu0 0.0
    %994 = vmatprep.subr.mxu0 0.0
    %995 = vmatpush1.msra.mxu0 0.0
    %996 = vmatprep.subr.mxu0 0.0
    %997 = vmatpush1.msra.mxu0 %v226
    %998 = vmatprep.subr.mxu0 0.0
    %999 = vmatpush1.msra.mxu0 %v225
    %1000 = vmatprep.subr.mxu0 0.0
    %1001 = vmatpush1.msra.mxu0 %v224
    %1002 = vmatprep.subr.mxu0 0.0
    %1003 = vmatpush1.msra.mxu0 %v223
    %1004 = vmatprep.subr.mxu0 0.0
    %1005 = vmatpush2.msra.mxu0 0.0
    %1006 = vmatprep.subr.mxu0 0.0
    %1007 = vmatpush2.msra.mxu0 0.0
    %1008 = vmatprep.subr.mxu0 0.0
    %1009 = vmatpush2.msra.mxu0 0.0
    %1010 = vmatprep.subr.mxu0 0.0
    %1011 = vmatpush2.msra.mxu0 0.0
    %1012 = vmatprep.subr.mxu0 0.0
    %1013 = vmatpush2.msra.mxu0 0.0
    %1014 = vmatprep.subr.mxu0 0.0
    %1015 = vmatpush2.msra.mxu0 0.0
    %1016 = vmatprep.subr.mxu0 0.0
    %1017 = vmatpush2.msra.mxu0 0.0
    %1018 = vmatprep.subr.mxu0 0.0
    %1019 = vmatpush2.msra.mxu0 0.0
    %1020 = vmatprep.subr.mxu0 0.0
    %1021 = vmatpush2.msra.mxu0 0.0
    %1022 = vmatprep.subr.mxu0 0.0
    %1023 = vmatpush2.msra.mxu0 0.0
    %1024 = vmatprep.subr.mxu0 0.0
    %1025 = vmatpush2.msra.mxu0 0.0
    %1026 = vmatprep.subr.mxu0 0.0
    %1027 = vmatpush2.msra.mxu0 0.0
    %1028 = vmatprep.subr.mxu0 0.0
    %1029 = vmatpush2.msra.mxu0 0.0
    %1030 = vmatprep.subr.mxu0 0.0
    %1031 = vmatpush2.msra.mxu0 0.0
    %1032 = vmatprep.subr.mxu0 0.0
    %1033 = vmatpush2.msra.mxu0 0.0
    %1034 = vmatprep.subr.mxu0 0.0
    %1035 = vmatpush2.msra.mxu0 0.0
    %1036 = vmatprep.mubr.f32.mxu0 0.0
    %1037 = vmatmul.mubr.f32.gmra.mxu0 %v970
    %v1038 = vpop.f32.mrf.mxu0
    %v1039 = vadd.f32 0.0, %v1038
    %v1040 = vpop.f32.mrf.mxu0
    %1041 = vdwg.mxu0
    %v1043 = vrot.slane %v1039, 2
    %v1045 = vadd.f32 %v134, %v1043
    %v1046 = vxor.u32 %v1045, 2147483648
    %v1047 = vmul.f32 %v1046, 1.442695
    %v1048 = vpow.pop %v1047
    %v1049 = vadd.f32 %v1048, 1.0
    %v1050 = vrcp.pop %v1049
    %v1051 = vmul.f32 1.0, %v1050
    %v1052 = vtanh.pop %v1045
    %v1054 = vrot.slane %v959, 6
    %v1056 = vmul.f32 %v1051, %v1054
    %1058 = vrot.lane.b32.xlu0 %v1052, 64
    %v1059 = vpop.permute.xlu0 %1058
    %v1061 = vmul.f32 %v1051, %v1059
    %1063 = vrot.lane.b32.xlu0 %v1061, 32
    %v1064 = vpop.permute.xlu0 %1063
    %v1066 = vadd.f32 %v1056, %v1064
    %v1067 = vtanh.pop %v1066
    %1069 = vrot.lane.b32.xlu0 %v1067, 64
    %v1070 = vpop.permute.xlu0 %1069
    %v1072 = vmul.f32 %v1051, %v1070
    %1073 = vmatprep.subr.mxu0 0.0
    %1074 = vmatpush1.msra.mxu0 0.0
    %1075 = vmatprep.subr.mxu0 0.0
    %1076 = vmatpush1.msra.mxu0 0.0
    %1077 = vmatprep.subr.mxu0 0.0
    %1078 = vmatpush1.msra.mxu0 0.0
    %1079 = vmatprep.subr.mxu0 0.0
    %1080 = vmatpush1.msra.mxu0 0.0
    %1081 = vmatprep.subr.mxu0 0.0
    %1082 = vmatpush1.msra.mxu0 0.0
    %1083 = vmatprep.subr.mxu0 0.0
    %1084 = vmatpush1.msra.mxu0 0.0
    %1085 = vmatprep.subr.mxu0 0.0
    %1086 = vmatpush1.msra.mxu0 0.0
    %1087 = vmatprep.subr.mxu0 0.0
    %1088 = vmatpush1.msra.mxu0 0.0
    %1089 = vmatprep.subr.mxu0 0.0
    %1090 = vmatpush1.msra.mxu0 0.0
    %1091 = vmatprep.subr.mxu0 0.0
    %1092 = vmatpush1.msra.mxu0 0.0
    %1093 = vmatprep.subr.mxu0 0.0
    %1094 = vmatpush1.msra.mxu0 0.0
    %1095 = vmatprep.subr.mxu0 0.0
    %1096 = vmatpush1.msra.mxu0 0.0
    %1097 = vmatprep.subr.mxu0 0.0
    %1098 = vmatpush1.msra.mxu0 %v230
    %1099 = vmatprep.subr.mxu0 0.0
    %1100 = vmatpush1.msra.mxu0 %v229
    %1101 = vmatprep.subr.mxu0 0.0
    %1102 = vmatpush1.msra.mxu0 %v228
    %1103 = vmatprep.subr.mxu0 0.0
    %1104 = vmatpush1.msra.mxu0 %v227
    %1105 = vmatprep.subr.mxu0 0.0
    %1106 = vmatpush2.msra.mxu0 0.0
    %1107 = vmatprep.subr.mxu0 0.0
    %1108 = vmatpush2.msra.mxu0 0.0
    %1109 = vmatprep.subr.mxu0 0.0
    %1110 = vmatpush2.msra.mxu0 0.0
    %1111 = vmatprep.subr.mxu0 0.0
    %1112 = vmatpush2.msra.mxu0 0.0
    %1113 = vmatprep.subr.mxu0 0.0
    %1114 = vmatpush2.msra.mxu0 0.0
    %1115 = vmatprep.subr.mxu0 0.0
    %1116 = vmatpush2.msra.mxu0 0.0
    %1117 = vmatprep.subr.mxu0 0.0
    %1118 = vmatpush2.msra.mxu0 0.0
    %1119 = vmatprep.subr.mxu0 0.0
    %1120 = vmatpush2.msra.mxu0 0.0
    %1121 = vmatprep.subr.mxu0 0.0
    %1122 = vmatpush2.msra.mxu0 0.0
    %1123 = vmatprep.subr.mxu0 0.0
    %1124 = vmatpush2.msra.mxu0 0.0
    %1125 = vmatprep.subr.mxu0 0.0
    %1126 = vmatpush2.msra.mxu0 0.0
    %1127 = vmatprep.subr.mxu0 0.0
    %1128 = vmatpush2.msra.mxu0 0.0
    %1129 = vmatprep.subr.mxu0 0.0
    %1130 = vmatpush2.msra.mxu0 0.0
    %1131 = vmatprep.subr.mxu0 0.0
    %1132 = vmatpush2.msra.mxu0 0.0
    %1133 = vmatprep.subr.mxu0 0.0
    %1134 = vmatpush2.msra.mxu0 0.0
    %1135 = vmatprep.subr.mxu0 0.0
    %1136 = vmatpush2.msra.mxu0 0.0
    %1137 = vmatprep.mubr.f32.mxu0 0.0
    %1138 = vmatmul.mubr.f32.gmra.mxu0 %v232
    %v1139 = vpop.f32.mrf.mxu0
    %v1140 = vadd.f32 0.0, %v1139
    %v1141 = vpop.f32.mrf.mxu0
    %1142 = vdwg.mxu0
    %v1144 = vrot.slane %v1140, 2
    %v1146 = vadd.f32 %v220, %v1144
    %v1147 = vxor.u32 %v1146, 2147483648
    %v1148 = vmul.f32 %v1147, 1.442695
    %v1149 = vpow.pop %v1148
    %v1150 = vadd.f32 %v1149, 1.0
    %v1151 = vrcp.pop %v1150
    %v1152 = vmul.f32 1.0, %v1151
    %v1153 = vtanh.pop %v1146
    %v1154 = vmul.f32 %v1152, 0.0
    %1156 = vrot.lane.b32.xlu0 %v1153, 64
    %v1157 = vpop.permute.xlu0 %1156
    %v1159 = vmul.f32 %v1152, %v1157
    %1161 = vrot.lane.b32.xlu0 %v1159, 32
    %v1162 = vpop.permute.xlu0 %1161
    %v1164 = vadd.f32 %v1154, %v1162
    %v1165 = vtanh.pop %v1164
    %1167 = vrot.lane.b32.xlu0 %v1165, 64
    %v1168 = vpop.permute.xlu0 %1167
    %v1170 = vmul.f32 %v1152, %v1168
    %v1172 = vrot.slane %v1170, 6
    %1173 = vrot.lane.b32.xlu0 %v1172, 32
    %v1174 = vpop.permute.xlu0 %1173
    %v1175 = vsel %vm55, %v1174, 0
    %1177 = vmatprep.subr.mxu0 0.0
    %1178 = vmatpush1.msra.mxu0 0.0
    %1179 = vmatprep.subr.mxu0 0.0
    %1180 = vmatpush1.msra.mxu0 0.0
    %1181 = vmatprep.subr.mxu0 0.0
    %1182 = vmatpush1.msra.mxu0 0.0
    %1183 = vmatprep.subr.mxu0 0.0
    %1184 = vmatpush1.msra.mxu0 0.0
    %1185 = vmatprep.subr.mxu0 0.0
    %1186 = vmatpush1.msra.mxu0 0.0
    %1187 = vmatprep.subr.mxu0 0.0
    %1188 = vmatpush1.msra.mxu0 0.0
    %1189 = vmatprep.subr.mxu0 0.0
    %1190 = vmatpush1.msra.mxu0 0.0
    %1191 = vmatprep.subr.mxu0 0.0
    %1192 = vmatpush1.msra.mxu0 0.0
    %1193 = vmatprep.subr.mxu0 0.0
    %1194 = vmatpush1.msra.mxu0 0.0
    %1195 = vmatprep.subr.mxu0 0.0
    %1196 = vmatpush1.msra.mxu0 0.0
    %1197 = vmatprep.subr.mxu0 0.0
    %1198 = vmatpush1.msra.mxu0 0.0
    %1199 = vmatprep.subr.mxu0 0.0
    %1200 = vmatpush1.msra.mxu0 0.0
    %1201 = vmatprep.subr.mxu0 0.0
    %1202 = vmatpush1.msra.mxu0 %v230
    %1203 = vmatprep.subr.mxu0 0.0
    %1204 = vmatpush1.msra.mxu0 %v229
    %1205 = vmatprep.subr.mxu0 0.0
    %1206 = vmatpush1.msra.mxu0 %v228
    %1207 = vmatprep.subr.mxu0 0.0
    %1208 = vmatpush1.msra.mxu0 %v227
    %1209 = vmatprep.subr.mxu0 0.0
    %1210 = vmatpush2.msra.mxu0 0.0
    %1211 = vmatprep.subr.mxu0 0.0
    %1212 = vmatpush2.msra.mxu0 0.0
    %1213 = vmatprep.subr.mxu0 0.0
    %1214 = vmatpush2.msra.mxu0 0.0
    %1215 = vmatprep.subr.mxu0 0.0
    %1216 = vmatpush2.msra.mxu0 0.0
    %1217 = vmatprep.subr.mxu0 0.0
    %1218 = vmatpush2.msra.mxu0 0.0
    %1219 = vmatprep.subr.mxu0 0.0
    %1220 = vmatpush2.msra.mxu0 0.0
    %1221 = vmatprep.subr.mxu0 0.0
    %1222 = vmatpush2.msra.mxu0 0.0
    %1223 = vmatprep.subr.mxu0 0.0
    %1224 = vmatpush2.msra.mxu0 0.0
    %1225 = vmatprep.subr.mxu0 0.0
    %1226 = vmatpush2.msra.mxu0 0.0
    %1227 = vmatprep.subr.mxu0 0.0
    %1228 = vmatpush2.msra.mxu0 0.0
    %1229 = vmatprep.subr.mxu0 0.0
    %1230 = vmatpush2.msra.mxu0 0.0
    %1231 = vmatprep.subr.mxu0 0.0
    %1232 = vmatpush2.msra.mxu0 0.0
    %1233 = vmatprep.subr.mxu0 0.0
    %1234 = vmatpush2.msra.mxu0 0.0
    %1235 = vmatprep.subr.mxu0 0.0
    %1236 = vmatpush2.msra.mxu0 0.0
    %1237 = vmatprep.subr.mxu0 0.0
    %1238 = vmatpush2.msra.mxu0 0.0
    %1239 = vmatprep.subr.mxu0 0.0
    %1240 = vmatpush2.msra.mxu0 0.0
    %1241 = vmatprep.mubr.f32.mxu0 0.0
    %1242 = vmatmul.mubr.f32.gmra.mxu0 %v1175
    %v1243 = vpop.f32.mrf.mxu0
    %v1244 = vadd.f32 0.0, %v1243
    %v1245 = vpop.f32.mrf.mxu0
    %1246 = vdwg.mxu0
    %v1248 = vrot.slane %v1244, 4
    %v1250 = vadd.f32 %v220, %v1248
    %v1251 = vxor.u32 %v1250, 2147483648
    %v1252 = vmul.f32 %v1251, 1.442695
    %v1253 = vpow.pop %v1252
    %v1254 = vadd.f32 %v1253, 1.0
    %v1255 = vrcp.pop %v1254
    %v1256 = vmul.f32 1.0, %v1255
    %v1257 = vtanh.pop %v1250
    %v1259 = vrot.slane %v1164, 2
    %v1261 = vmul.f32 %v1256, %v1259
    %1263 = vrot.lane.b32.xlu0 %v1257, 64
    %v1264 = vpop.permute.xlu0 %1263
    %v1266 = vmul.f32 %v1256, %v1264
    %1268 = vrot.lane.b32.xlu0 %v1266, 32
    %v1269 = vpop.permute.xlu0 %1268
    %v1271 = vadd.f32 %v1261, %v1269
    %v1272 = vtanh.pop %v1271
    %1274 = vrot.lane.b32.xlu0 %v1272, 64
    %v1275 = vpop.permute.xlu0 %1274
    %v1277 = vmul.f32 %v1256, %v1275
    %v1279 = vrot.slane %v1277, 4
    %1280 = vrot.lane.b32.xlu0 %v1279, 32
    %v1281 = vpop.permute.xlu0 %1280
    %v1282 = vsel %vm55, %v1281, 0
    %1284 = vmatprep.subr.mxu0 0.0
    %1285 = vmatpush1.msra.mxu0 0.0
    %1286 = vmatprep.subr.mxu0 0.0
    %1287 = vmatpush1.msra.mxu0 0.0
    %1288 = vmatprep.subr.mxu0 0.0
    %1289 = vmatpush1.msra.mxu0 0.0
    %1290 = vmatprep.subr.mxu0 0.0
    %1291 = vmatpush1.msra.mxu0 0.0
    %1292 = vmatprep.subr.mxu0 0.0
    %1293 = vmatpush1.msra.mxu0 0.0
    %1294 = vmatprep.subr.mxu0 0.0
    %1295 = vmatpush1.msra.mxu0 0.0
    %1296 = vmatprep.subr.mxu0 0.0
    %1297 = vmatpush1.msra.mxu0 0.0
    %1298 = vmatprep.subr.mxu0 0.0
    %1299 = vmatpush1.msra.mxu0 0.0
    %1300 = vmatprep.subr.mxu0 0.0
    %1301 = vmatpush1.msra.mxu0 0.0
    %1302 = vmatprep.subr.mxu0 0.0
    %1303 = vmatpush1.msra.mxu0 0.0
    %1304 = vmatprep.subr.mxu0 0.0
    %1305 = vmatpush1.msra.mxu0 0.0
    %1306 = vmatprep.subr.mxu0 0.0
    %1307 = vmatpush1.msra.mxu0 0.0
    %1308 = vmatprep.subr.mxu0 0.0
    %1309 = vmatpush1.msra.mxu0 %v230
    %1310 = vmatprep.subr.mxu0 0.0
    %1311 = vmatpush1.msra.mxu0 %v229
    %1312 = vmatprep.subr.mxu0 0.0
    %1313 = vmatpush1.msra.mxu0 %v228
    %1314 = vmatprep.subr.mxu0 0.0
    %1315 = vmatpush1.msra.mxu0 %v227
    %1316 = vmatprep.subr.mxu0 0.0
    %1317 = vmatpush2.msra.mxu0 0.0
    %1318 = vmatprep.subr.mxu0 0.0
    %1319 = vmatpush2.msra.mxu0 0.0
    %1320 = vmatprep.subr.mxu0 0.0
    %1321 = vmatpush2.msra.mxu0 0.0
    %1322 = vmatprep.subr.mxu0 0.0
    %1323 = vmatpush2.msra.mxu0 0.0
    %1324 = vmatprep.subr.mxu0 0.0
    %1325 = vmatpush2.msra.mxu0 0.0
    %1326 = vmatprep.subr.mxu0 0.0
    %1327 = vmatpush2.msra.mxu0 0.0
    %1328 = vmatprep.subr.mxu0 0.0
    %1329 = vmatpush2.msra.mxu0 0.0
    %1330 = vmatprep.subr.mxu0 0.0
    %1331 = vmatpush2.msra.mxu0 0.0
    %1332 = vmatprep.subr.mxu0 0.0
    %1333 = vmatpush2.msra.mxu0 0.0
    %1334 = vmatprep.subr.mxu0 0.0
    %1335 = vmatpush2.msra.mxu0 0.0
    %1336 = vmatprep.subr.mxu0 0.0
    %1337 = vmatpush2.msra.mxu0 0.0
    %1338 = vmatprep.subr.mxu0 0.0
    %1339 = vmatpush2.msra.mxu0 0.0
    %1340 = vmatprep.subr.mxu0 0.0
    %1341 = vmatpush2.msra.mxu0 0.0
    %1342 = vmatprep.subr.mxu0 0.0
    %1343 = vmatpush2.msra.mxu0 0.0
    %1344 = vmatprep.subr.mxu0 0.0
    %1345 = vmatpush2.msra.mxu0 0.0
    %1346 = vmatprep.subr.mxu0 0.0
    %1347 = vmatpush2.msra.mxu0 0.0
    %1348 = vmatprep.mubr.f32.mxu0 0.0
    %1349 = vmatmul.mubr.f32.gmra.mxu0 %v1282
    %v1350 = vpop.f32.mrf.mxu0
    %v1351 = vadd.f32 0.0, %v1350
    %v1352 = vpop.f32.mrf.mxu0
    %1353 = vdwg.mxu0
    %v1355 = vrot.slane %v1351, 6
    %v1357 = vadd.f32 %v220, %v1355
    %v1358 = vxor.u32 %v1357, 2147483648
    %v1359 = vmul.f32 %v1358, 1.442695
    %v1360 = vpow.pop %v1359
    %v1361 = vadd.f32 %v1360, 1.0
    %v1362 = vrcp.pop %v1361
    %v1363 = vmul.f32 1.0, %v1362
    %v1364 = vtanh.pop %v1357
    %v1366 = vrot.slane %v1271, 2
    %v1368 = vmul.f32 %v1363, %v1366
    %1370 = vrot.lane.b32.xlu0 %v1364, 64
    %v1371 = vpop.permute.xlu0 %1370
    %v1373 = vmul.f32 %v1363, %v1371
    %1375 = vrot.lane.b32.xlu0 %v1373, 32
    %v1376 = vpop.permute.xlu0 %1375
    %v1378 = vadd.f32 %v1368, %v1376
    %v1379 = vtanh.pop %v1378
    %1381 = vrot.lane.b32.xlu0 %v1379, 64
    %v1382 = vpop.permute.xlu0 %1381
    %v1384 = vmul.f32 %v1363, %v1382
    %v1386 = vrot.slane %v1384, 2
    %1387 = vrot.lane.b32.xlu0 %v1386, 32
    %v1388 = vpop.permute.xlu0 %1387
    %v1389 = vsel %vm55, %v1388, 0
    %1391 = vmatprep.subr.mxu0 0.0
    %1392 = vmatpush1.msra.mxu0 0.0
    %1393 = vmatprep.subr.mxu0 0.0
    %1394 = vmatpush1.msra.mxu0 0.0
    %1395 = vmatprep.subr.mxu0 0.0
    %1396 = vmatpush1.msra.mxu0 0.0
    %1397 = vmatprep.subr.mxu0 0.0
    %1398 = vmatpush1.msra.mxu0 0.0
    %1399 = vmatprep.subr.mxu0 0.0
    %1400 = vmatpush1.msra.mxu0 0.0
    %1401 = vmatprep.subr.mxu0 0.0
    %1402 = vmatpush1.msra.mxu0 0.0
    %1403 = vmatprep.subr.mxu0 0.0
    %1404 = vmatpush1.msra.mxu0 0.0
    %1405 = vmatprep.subr.mxu0 0.0
    %1406 = vmatpush1.msra.mxu0 0.0
    %1407 = vmatprep.subr.mxu0 0.0
    %1408 = vmatpush1.msra.mxu0 0.0
    %1409 = vmatprep.subr.mxu0 0.0
    %1410 = vmatpush1.msra.mxu0 0.0
    %1411 = vmatprep.subr.mxu0 0.0
    %1412 = vmatpush1.msra.mxu0 0.0
    %1413 = vmatprep.subr.mxu0 0.0
    %1414 = vmatpush1.msra.mxu0 0.0
    %1415 = vmatprep.subr.mxu0 0.0
    %1416 = vmatpush1.msra.mxu0 %v230
    %1417 = vmatprep.subr.mxu0 0.0
    %1418 = vmatpush1.msra.mxu0 %v229
    %1419 = vmatprep.subr.mxu0 0.0
    %1420 = vmatpush1.msra.mxu0 %v228
    %1421 = vmatprep.subr.mxu0 0.0
    %1422 = vmatpush1.msra.mxu0 %v227
    %1423 = vmatprep.subr.mxu0 0.0
    %1424 = vmatpush2.msra.mxu0 0.0
    %1425 = vmatprep.subr.mxu0 0.0
    %1426 = vmatpush2.msra.mxu0 0.0
    %1427 = vmatprep.subr.mxu0 0.0
    %1428 = vmatpush2.msra.mxu0 0.0
    %1429 = vmatprep.subr.mxu0 0.0
    %1430 = vmatpush2.msra.mxu0 0.0
    %1431 = vmatprep.subr.mxu0 0.0
    %1432 = vmatpush2.msra.mxu0 0.0
    %1433 = vmatprep.subr.mxu0 0.0
    %1434 = vmatpush2.msra.mxu0 0.0
    %1435 = vmatprep.subr.mxu0 0.0
    %1436 = vmatpush2.msra.mxu0 0.0
    %1437 = vmatprep.subr.mxu0 0.0
    %1438 = vmatpush2.msra.mxu0 0.0
    %1439 = vmatprep.subr.mxu0 0.0
    %1440 = vmatpush2.msra.mxu0 0.0
    %1441 = vmatprep.subr.mxu0 0.0
    %1442 = vmatpush2.msra.mxu0 0.0
    %1443 = vmatprep.subr.mxu0 0.0
    %1444 = vmatpush2.msra.mxu0 0.0
    %1445 = vmatprep.subr.mxu0 0.0
    %1446 = vmatpush2.msra.mxu0 0.0
    %1447 = vmatprep.subr.mxu0 0.0
    %1448 = vmatpush2.msra.mxu0 0.0
    %1449 = vmatprep.subr.mxu0 0.0
    %1450 = vmatpush2.msra.mxu0 0.0
    %1451 = vmatprep.subr.mxu0 0.0
    %1452 = vmatpush2.msra.mxu0 0.0
    %1453 = vmatprep.subr.mxu0 0.0
    %1454 = vmatpush2.msra.mxu0 0.0
    %1455 = vmatprep.mubr.f32.mxu0 0.0
    %1456 = vmatmul.mubr.f32.gmra.mxu0 %v1389
    %v1457 = vpop.f32.mrf.mxu0
    %v1458 = vadd.f32 0.0, %v1457
    %v1459 = vpop.f32.mrf.mxu0
    %1460 = vdwg.mxu0
    %v1461 = vadd.f32 %v220, %v1458
    %v1462 = vxor.u32 %v1461, 2147483648
    %v1463 = vmul.f32 %v1462, 1.442695
    %v1464 = vpow.pop %v1463
    %v1465 = vadd.f32 %v1464, 1.0
    %v1466 = vrcp.pop %v1465
    %v1467 = vmul.f32 1.0, %v1466
    %v1468 = vtanh.pop %v1461
    %v1470 = vrot.slane %v1378, 2
    %v1472 = vmul.f32 %v1467, %v1470
    %1474 = vrot.lane.b32.xlu0 %v1468, 64
    %v1475 = vpop.permute.xlu0 %1474
    %v1477 = vmul.f32 %v1467, %v1475
    %1479 = vrot.lane.b32.xlu0 %v1477, 32
    %v1480 = vpop.permute.xlu0 %1479
    %v1482 = vadd.f32 %v1472, %v1480
    %v1483 = vtanh.pop %v1482
    %1485 = vrot.lane.b32.xlu0 %v1483, 64
    %v1486 = vpop.permute.xlu0 %1485
    %v1488 = vmul.f32 %v1467, %v1486
    %1490 = vrot.lane.b32.xlu0 %v1488, 32
    %v1491 = vpop.permute.xlu0 %1490
    %v1492 = vsel %vm55, %v1491, 0
    %1494 = vmatprep.subr.mxu0 0.0
    %1495 = vmatpush1.msra.mxu0 0.0
    %1496 = vmatprep.subr.mxu0 0.0
    %1497 = vmatpush1.msra.mxu0 0.0
    %1498 = vmatprep.subr.mxu0 0.0
    %1499 = vmatpush1.msra.mxu0 0.0
    %1500 = vmatprep.subr.mxu0 0.0
    %1501 = vmatpush1.msra.mxu0 0.0
    %1502 = vmatprep.subr.mxu0 0.0
    %1503 = vmatpush1.msra.mxu0 0.0
    %1504 = vmatprep.subr.mxu0 0.0
    %1505 = vmatpush1.msra.mxu0 0.0
    %1506 = vmatprep.subr.mxu0 0.0
    %1507 = vmatpush1.msra.mxu0 0.0
    %1508 = vmatprep.subr.mxu0 0.0
    %1509 = vmatpush1.msra.mxu0 0.0
    %1510 = vmatprep.subr.mxu0 0.0
    %1511 = vmatpush1.msra.mxu0 0.0
    %1512 = vmatprep.subr.mxu0 0.0
    %1513 = vmatpush1.msra.mxu0 0.0
    %1514 = vmatprep.subr.mxu0 0.0
    %1515 = vmatpush1.msra.mxu0 0.0
    %1516 = vmatprep.subr.mxu0 0.0
    %1517 = vmatpush1.msra.mxu0 0.0
    %1518 = vmatprep.subr.mxu0 0.0
    %1519 = vmatpush1.msra.mxu0 %v230
    %1520 = vmatprep.subr.mxu0 0.0
    %1521 = vmatpush1.msra.mxu0 %v229
    %1522 = vmatprep.subr.mxu0 0.0
    %1523 = vmatpush1.msra.mxu0 %v228
    %1524 = vmatprep.subr.mxu0 0.0
    %1525 = vmatpush1.msra.mxu0 %v227
    %1526 = vmatprep.subr.mxu0 0.0
    %1527 = vmatpush2.msra.mxu0 0.0
    %1528 = vmatprep.subr.mxu0 0.0
    %1529 = vmatpush2.msra.mxu0 0.0
    %1530 = vmatprep.subr.mxu0 0.0
    %1531 = vmatpush2.msra.mxu0 0.0
    %1532 = vmatprep.subr.mxu0 0.0
    %1533 = vmatpush2.msra.mxu0 0.0
    %1534 = vmatprep.subr.mxu0 0.0
    %1535 = vmatpush2.msra.mxu0 0.0
    %1536 = vmatprep.subr.mxu0 0.0
    %1537 = vmatpush2.msra.mxu0 0.0
    %1538 = vmatprep.subr.mxu0 0.0
    %1539 = vmatpush2.msra.mxu0 0.0
    %1540 = vmatprep.subr.mxu0 0.0
    %1541 = vmatpush2.msra.mxu0 0.0
    %1542 = vmatprep.subr.mxu0 0.0
    %1543 = vmatpush2.msra.mxu0 0.0
    %1544 = vmatprep.subr.mxu0 0.0
    %1545 = vmatpush2.msra.mxu0 0.0
    %1546 = vmatprep.subr.mxu0 0.0
    %1547 = vmatpush2.msra.mxu0 0.0
    %1548 = vmatprep.subr.mxu0 0.0
    %1549 = vmatpush2.msra.mxu0 0.0
    %1550 = vmatprep.subr.mxu0 0.0
    %1551 = vmatpush2.msra.mxu0 0.0
    %1552 = vmatprep.subr.mxu0 0.0
    %1553 = vmatpush2.msra.mxu0 0.0
    %1554 = vmatprep.subr.mxu0 0.0
    %1555 = vmatpush2.msra.mxu0 0.0
    %1556 = vmatprep.subr.mxu0 0.0
    %1557 = vmatpush2.msra.mxu0 0.0
    %1558 = vmatprep.mubr.f32.mxu0 0.0
    %1559 = vmatmul.mubr.f32.gmra.mxu0 %v1492
    %v1560 = vpop.f32.mrf.mxu0
    %v1561 = vadd.f32 0.0, %v1560
    %v1562 = vpop.f32.mrf.mxu0
    %1563 = vdwg.mxu0
    %v1565 = vrot.slane %v1561, 2
    %v1567 = vadd.f32 %v215, %v1565
    %v1568 = vxor.u32 %v1567, 2147483648
    %v1569 = vmul.f32 %v1568, 1.442695
    %v1570 = vpow.pop %v1569
    %v1571 = vadd.f32 %v1570, 1.0
    %v1572 = vrcp.pop %v1571
    %v1573 = vmul.f32 1.0, %v1572
    %v1574 = vtanh.pop %v1567
    %v1576 = vrot.slane %v1482, 2
    %v1578 = vmul.f32 %v1573, %v1576
    %1580 = vrot.lane.b32.xlu0 %v1574, 64
    %v1581 = vpop.permute.xlu0 %1580
    %v1583 = vmul.f32 %v1573, %v1581
    %1585 = vrot.lane.b32.xlu0 %v1583, 32
    %v1586 = vpop.permute.xlu0 %1585
    %v1588 = vadd.f32 %v1578, %v1586
    %v1589 = vtanh.pop %v1588
    %1591 = vrot.lane.b32.xlu0 %v1589, 64
    %v1592 = vpop.permute.xlu0 %1591
    %v1594 = vmul.f32 %v1573, %v1592
    %v1596 = vrot.slane %v1594, 6
    %1597 = vrot.lane.b32.xlu0 %v1596, 32
    %v1598 = vpop.permute.xlu0 %1597
    %v1599 = vsel %vm55, %v1598, 0
    %1601 = vmatprep.subr.mxu0 0.0
    %1602 = vmatpush1.msra.mxu0 0.0
    %1603 = vmatprep.subr.mxu0 0.0
    %1604 = vmatpush1.msra.mxu0 0.0
    %1605 = vmatprep.subr.mxu0 0.0
    %1606 = vmatpush1.msra.mxu0 0.0
    %1607 = vmatprep.subr.mxu0 0.0
    %1608 = vmatpush1.msra.mxu0 0.0
    %1609 = vmatprep.subr.mxu0 0.0
    %1610 = vmatpush1.msra.mxu0 0.0
    %1611 = vmatprep.subr.mxu0 0.0
    %1612 = vmatpush1.msra.mxu0 0.0
    %1613 = vmatprep.subr.mxu0 0.0
    %1614 = vmatpush1.msra.mxu0 0.0
    %1615 = vmatprep.subr.mxu0 0.0
    %1616 = vmatpush1.msra.mxu0 0.0
    %1617 = vmatprep.subr.mxu0 0.0
    %1618 = vmatpush1.msra.mxu0 0.0
    %1619 = vmatprep.subr.mxu0 0.0
    %1620 = vmatpush1.msra.mxu0 0.0
    %1621 = vmatprep.subr.mxu0 0.0
    %1622 = vmatpush1.msra.mxu0 0.0
    %1623 = vmatprep.subr.mxu0 0.0
    %1624 = vmatpush1.msra.mxu0 0.0
    %1625 = vmatprep.subr.mxu0 0.0
    %1626 = vmatpush1.msra.mxu0 %v230
    %1627 = vmatprep.subr.mxu0 0.0
    %1628 = vmatpush1.msra.mxu0 %v229
    %1629 = vmatprep.subr.mxu0 0.0
    %1630 = vmatpush1.msra.mxu0 %v228
    %1631 = vmatprep.subr.mxu0 0.0
    %1632 = vmatpush1.msra.mxu0 %v227
    %1633 = vmatprep.subr.mxu0 0.0
    %1634 = vmatpush2.msra.mxu0 0.0
    %1635 = vmatprep.subr.mxu0 0.0
    %1636 = vmatpush2.msra.mxu0 0.0
    %1637 = vmatprep.subr.mxu0 0.0
    %1638 = vmatpush2.msra.mxu0 0.0
    %1639 = vmatprep.subr.mxu0 0.0
    %1640 = vmatpush2.msra.mxu0 0.0
    %1641 = vmatprep.subr.mxu0 0.0
    %1642 = vmatpush2.msra.mxu0 0.0
    %1643 = vmatprep.subr.mxu0 0.0
    %1644 = vmatpush2.msra.mxu0 0.0
    %1645 = vmatprep.subr.mxu0 0.0
    %1646 = vmatpush2.msra.mxu0 0.0
    %1647 = vmatprep.subr.mxu0 0.0
    %1648 = vmatpush2.msra.mxu0 0.0
    %1649 = vmatprep.subr.mxu0 0.0
    %1650 = vmatpush2.msra.mxu0 0.0
    %1651 = vmatprep.subr.mxu0 0.0
    %1652 = vmatpush2.msra.mxu0 0.0
    %1653 = vmatprep.subr.mxu0 0.0
    %1654 = vmatpush2.msra.mxu0 0.0
    %1655 = vmatprep.subr.mxu0 0.0
    %1656 = vmatpush2.msra.mxu0 0.0
    %1657 = vmatprep.subr.mxu0 0.0
    %1658 = vmatpush2.msra.mxu0 0.0
    %1659 = vmatprep.subr.mxu0 0.0
    %1660 = vmatpush2.msra.mxu0 0.0
    %1661 = vmatprep.subr.mxu0 0.0
    %1662 = vmatpush2.msra.mxu0 0.0
    %1663 = vmatprep.subr.mxu0 0.0
    %1664 = vmatpush2.msra.mxu0 0.0
    %1665 = vmatprep.mubr.f32.mxu0 0.0
    %1666 = vmatmul.mubr.f32.gmra.mxu0 %v1599
    %v1667 = vpop.f32.mrf.mxu0
    %v1668 = vadd.f32 0.0, %v1667
    %v1669 = vpop.f32.mrf.mxu0
    %1670 = vdwg.mxu0
    %v1672 = vrot.slane %v1668, 4
    %v1674 = vadd.f32 %v215, %v1672
    %v1675 = vxor.u32 %v1674, 2147483648
    %v1676 = vmul.f32 %v1675, 1.442695
    %v1677 = vpow.pop %v1676
    %v1678 = vadd.f32 %v1677, 1.0
    %v1679 = vrcp.pop %v1678
    %v1680 = vmul.f32 1.0, %v1679
    %v1681 = vtanh.pop %v1674
    %v1683 = vrot.slane %v1588, 2
    %v1685 = vmul.f32 %v1680, %v1683
    %1687 = vrot.lane.b32.xlu0 %v1681, 64
    %v1688 = vpop.permute.xlu0 %1687
    %v1690 = vmul.f32 %v1680, %v1688
    %1692 = vrot.lane.b32.xlu0 %v1690, 32
    %v1693 = vpop.permute.xlu0 %1692
    %v1695 = vadd.f32 %v1685, %v1693
    %v1696 = vtanh.pop %v1695
    %1698 = vrot.lane.b32.xlu0 %v1696, 64
    %v1699 = vpop.permute.xlu0 %1698
    %v1701 = vmul.f32 %v1680, %v1699
    %v1703 = vrot.slane %v1701, 4
    %1704 = vrot.lane.b32.xlu0 %v1703, 32
    %v1705 = vpop.permute.xlu0 %1704
    %v1706 = vsel %vm55, %v1705, 0
    %1708 = vmatprep.subr.mxu0 0.0
    %1709 = vmatpush1.msra.mxu0 0.0
    %1710 = vmatprep.subr.mxu0 0.0
    %1711 = vmatpush1.msra.mxu0 0.0
    %1712 = vmatprep.subr.mxu0 0.0
    %1713 = vmatpush1.msra.mxu0 0.0
    %1714 = vmatprep.subr.mxu0 0.0
    %1715 = vmatpush1.msra.mxu0 0.0
    %1716 = vmatprep.subr.mxu0 0.0
    %1717 = vmatpush1.msra.mxu0 0.0
    %1718 = vmatprep.subr.mxu0 0.0
    %1719 = vmatpush1.msra.mxu0 0.0
    %1720 = vmatprep.subr.mxu0 0.0
    %1721 = vmatpush1.msra.mxu0 0.0
    %1722 = vmatprep.subr.mxu0 0.0
    %1723 = vmatpush1.msra.mxu0 0.0
    %1724 = vmatprep.subr.mxu0 0.0
    %1725 = vmatpush1.msra.mxu0 0.0
    %1726 = vmatprep.subr.mxu0 0.0
    %1727 = vmatpush1.msra.mxu0 0.0
    %1728 = vmatprep.subr.mxu0 0.0
    %1729 = vmatpush1.msra.mxu0 0.0
    %1730 = vmatprep.subr.mxu0 0.0
    %1731 = vmatpush1.msra.mxu0 0.0
    %1732 = vmatprep.subr.mxu0 0.0
    %1733 = vmatpush1.msra.mxu0 %v230
    %1734 = vmatprep.subr.mxu0 0.0
    %1735 = vmatpush1.msra.mxu0 %v229
    %1736 = vmatprep.subr.mxu0 0.0
    %1737 = vmatpush1.msra.mxu0 %v228
    %1738 = vmatprep.subr.mxu0 0.0
    %1739 = vmatpush1.msra.mxu0 %v227
    %1740 = vmatprep.subr.mxu0 0.0
    %1741 = vmatpush2.msra.mxu0 0.0
    %1742 = vmatprep.subr.mxu0 0.0
    %1743 = vmatpush2.msra.mxu0 0.0
    %1744 = vmatprep.subr.mxu0 0.0
    %1745 = vmatpush2.msra.mxu0 0.0
    %1746 = vmatprep.subr.mxu0 0.0
    %1747 = vmatpush2.msra.mxu0 0.0
    %1748 = vmatprep.subr.mxu0 0.0
    %1749 = vmatpush2.msra.mxu0 0.0
    %1750 = vmatprep.subr.mxu0 0.0
    %1751 = vmatpush2.msra.mxu0 0.0
    %1752 = vmatprep.subr.mxu0 0.0
    %1753 = vmatpush2.msra.mxu0 0.0
    %1754 = vmatprep.subr.mxu0 0.0
    %1755 = vmatpush2.msra.mxu0 0.0
    %1756 = vmatprep.subr.mxu0 0.0
    %1757 = vmatpush2.msra.mxu0 0.0
    %1758 = vmatprep.subr.mxu0 0.0
    %1759 = vmatpush2.msra.mxu0 0.0
    %1760 = vmatprep.subr.mxu0 0.0
    %1761 = vmatpush2.msra.mxu0 0.0
    %1762 = vmatprep.subr.mxu0 0.0
    %1763 = vmatpush2.msra.mxu0 0.0
    %1764 = vmatprep.subr.mxu0 0.0
    %1765 = vmatpush2.msra.mxu0 0.0
    %1766 = vmatprep.subr.mxu0 0.0
    %1767 = vmatpush2.msra.mxu0 0.0
    %1768 = vmatprep.subr.mxu0 0.0
    %1769 = vmatpush2.msra.mxu0 0.0
    %1770 = vmatprep.subr.mxu0 0.0
    %1771 = vmatpush2.msra.mxu0 0.0
    %1772 = vmatprep.mubr.f32.mxu0 0.0
    %1773 = vmatmul.mubr.f32.gmra.mxu0 %v1706
    %v1774 = vpop.f32.mrf.mxu0
    %v1775 = vadd.f32 0.0, %v1774
    %v1776 = vpop.f32.mrf.mxu0
    %1777 = vdwg.mxu0
    %v1779 = vrot.slane %v1775, 6
    %v1781 = vadd.f32 %v215, %v1779
    %v1782 = vxor.u32 %v1781, 2147483648
    %v1783 = vmul.f32 %v1782, 1.442695
    %v1784 = vpow.pop %v1783
    %v1785 = vadd.f32 %v1784, 1.0
    %v1786 = vrcp.pop %v1785
    %v1787 = vmul.f32 1.0, %v1786
    %v1788 = vtanh.pop %v1781
    %v1790 = vrot.slane %v1695, 2
    %v1792 = vmul.f32 %v1787, %v1790
    %1794 = vrot.lane.b32.xlu0 %v1788, 64
    %v1795 = vpop.permute.xlu0 %1794
    %v1797 = vmul.f32 %v1787, %v1795
    %1799 = vrot.lane.b32.xlu0 %v1797, 32
    %v1800 = vpop.permute.xlu0 %1799
    %v1802 = vadd.f32 %v1792, %v1800
    %v1803 = vtanh.pop %v1802
    %1805 = vrot.lane.b32.xlu0 %v1803, 64
    %v1806 = vpop.permute.xlu0 %1805
    %v1808 = vmul.f32 %v1787, %v1806
    %v1810 = vrot.slane %v1808, 2
    %1811 = vrot.lane.b32.xlu0 %v1810, 32
    %v1812 = vpop.permute.xlu0 %1811
    %v1813 = vsel %vm55, %v1812, 0
    %1815 = vmatprep.subr.mxu0 0.0
    %1816 = vmatpush1.msra.mxu0 0.0
    %1817 = vmatprep.subr.mxu0 0.0
    %1818 = vmatpush1.msra.mxu0 0.0
    %1819 = vmatprep.subr.mxu0 0.0
    %1820 = vmatpush1.msra.mxu0 0.0
    %1821 = vmatprep.subr.mxu0 0.0
    %1822 = vmatpush1.msra.mxu0 0.0
    %1823 = vmatprep.subr.mxu0 0.0
    %1824 = vmatpush1.msra.mxu0 0.0
    %1825 = vmatprep.subr.mxu0 0.0
    %1826 = vmatpush1.msra.mxu0 0.0
    %1827 = vmatprep.subr.mxu0 0.0
    %1828 = vmatpush1.msra.mxu0 0.0
    %1829 = vmatprep.subr.mxu0 0.0
    %1830 = vmatpush1.msra.mxu0 0.0
    %1831 = vmatprep.subr.mxu0 0.0
    %1832 = vmatpush1.msra.mxu0 0.0
    %1833 = vmatprep.subr.mxu0 0.0
    %1834 = vmatpush1.msra.mxu0 0.0
    %1835 = vmatprep.subr.mxu0 0.0
    %1836 = vmatpush1.msra.mxu0 0.0
    %1837 = vmatprep.subr.mxu0 0.0
    %1838 = vmatpush1.msra.mxu0 0.0
    %1839 = vmatprep.subr.mxu0 0.0
    %1840 = vmatpush1.msra.mxu0 %v230
    %1841 = vmatprep.subr.mxu0 0.0
    %1842 = vmatpush1.msra.mxu0 %v229
    %1843 = vmatprep.subr.mxu0 0.0
    %1844 = vmatpush1.msra.mxu0 %v228
    %1845 = vmatprep.subr.mxu0 0.0
    %1846 = vmatpush1.msra.mxu0 %v227
    %1847 = vmatprep.subr.mxu0 0.0
    %1848 = vmatpush2.msra.mxu0 0.0
    %1849 = vmatprep.subr.mxu0 0.0
    %1850 = vmatpush2.msra.mxu0 0.0
    %1851 = vmatprep.subr.mxu0 0.0
    %1852 = vmatpush2.msra.mxu0 0.0
    %1853 = vmatprep.subr.mxu0 0.0
    %1854 = vmatpush2.msra.mxu0 0.0
    %1855 = vmatprep.subr.mxu0 0.0
    %1856 = vmatpush2.msra.mxu0 0.0
    %1857 = vmatprep.subr.mxu0 0.0
    %1858 = vmatpush2.msra.mxu0 0.0
    %1859 = vmatprep.subr.mxu0 0.0
    %1860 = vmatpush2.msra.mxu0 0.0
    %1861 = vmatprep.subr.mxu0 0.0
    %1862 = vmatpush2.msra.mxu0 0.0
    %1863 = vmatprep.subr.mxu0 0.0
    %1864 = vmatpush2.msra.mxu0 0.0
    %1865 = vmatprep.subr.mxu0 0.0
    %1866 = vmatpush2.msra.mxu0 0.0
    %1867 = vmatprep.subr.mxu0 0.0
    %1868 = vmatpush2.msra.mxu0 0.0
    %1869 = vmatprep.subr.mxu0 0.0
    %1870 = vmatpush2.msra.mxu0 0.0
    %1871 = vmatprep.subr.mxu0 0.0
    %1872 = vmatpush2.msra.mxu0 0.0
    %1873 = vmatprep.subr.mxu0 0.0
    %1874 = vmatpush2.msra.mxu0 0.0
    %1875 = vmatprep.subr.mxu0 0.0
    %1876 = vmatpush2.msra.mxu0 0.0
    %1877 = vmatprep.subr.mxu0 0.0
    %1878 = vmatpush2.msra.mxu0 0.0
    %1879 = vmatprep.mubr.f32.mxu0 0.0
    %1880 = vmatmul.mubr.f32.gmra.mxu0 %v1813
    %v1881 = vpop.f32.mrf.mxu0
    %v1882 = vadd.f32 0.0, %v1881
    %v1883 = vpop.f32.mrf.mxu0
    %1884 = vdwg.mxu0
    %v1885 = vadd.f32 %v215, %v1882
    %v1886 = vxor.u32 %v1885, 2147483648
    %v1887 = vmul.f32 %v1886, 1.442695
    %v1888 = vpow.pop %v1887
    %v1889 = vadd.f32 %v1888, 1.0
    %v1890 = vrcp.pop %v1889
    %v1891 = vmul.f32 1.0, %v1890
    %v1892 = vtanh.pop %v1885
    %v1894 = vrot.slane %v1802, 2
    %v1896 = vmul.f32 %v1891, %v1894
    %1898 = vrot.lane.b32.xlu0 %v1892, 64
    %v1899 = vpop.permute.xlu0 %1898
    %v1901 = vmul.f32 %v1891, %v1899
    %1903 = vrot.lane.b32.xlu0 %v1901, 32
    %v1904 = vpop.permute.xlu0 %1903
    %v1906 = vadd.f32 %v1896, %v1904
    %v1907 = vtanh.pop %v1906
    %1909 = vrot.lane.b32.xlu0 %v1907, 64
    %v1910 = vpop.permute.xlu0 %1909
    %v1912 = vmul.f32 %v1891, %v1910
    %v1913 = vld [vmem:[%s7] sm:$0x1]
    %v1914 = vtanh.pop %v328
    %v1916 = vlaneseq
    %v1917 = vshrl.u32 %v1916, 7
    %v1918 = vsub.s32 0, %v1917
    %v1919 = vrot.slane %v1913, %v1918
    %1920 = vrot.lane.b32.xlu0 %v1919, 96
    %v1921 = vpop.permute.xlu0 %1920
    %v1923 = vmul.f32 %v1914, %v1921
    %1925 = vrot.lane.b32.xlu0 %v1923, 32
    %v1926 = vpop.permute.xlu0 %1925
    %vm1928 = vcmask 254976
    %v1929 = vsel %vm1928, %v1926, 0.0
    %1930 = vadd.xlane.f32.xlu0 %v1929
    %v1931 = vpop.xlane.xlu0 %1930
    %v1932 = vtanh.pop %v1912
    %1933 = vrot.lane.b32.xlu0 %v1919, 64
    %v1934 = vpop.permute.xlu0 %1933
    %v1936 = vmul.f32 %v1932, %v1934
    %1938 = vrot.lane.b32.xlu0 %v1936, 32
    %v1939 = vpop.permute.xlu0 %1938
    %v1941 = vsel %vm1928, %v1939, 0.0
    %1942 = vadd.xlane.f32.xlu0 %v1941
    %v1943 = vpop.xlane.xlu0 %1942
    %v1944 = vadd.f32 %v1931, %v1943
    %v1945 = vtanh.pop %v434
    %v1946 = vmul.f32 %v1945, %v1921
    %1948 = vrot.lane.b32.xlu0 %v1946, 32
    %v1949 = vpop.permute.xlu0 %1948
    %vm1951 = vcmask 257026
    %v1952 = vsel %vm1951, %v1949, 0.0
    %1953 = vadd.xlane.f32.xlu0 %v1952
    %v1954 = vpop.xlane.xlu0 %1953
    %v1955 = vtanh.pop %v1808
    %v1956 = vmul.f32 %v1955, %v1934
    %1958 = vrot.lane.b32.xlu0 %v1956, 32
    %v1959 = vpop.permute.xlu0 %1958
    %v1961 = vsel %vm1951, %v1959, 0.0
    %1962 = vadd.xlane.f32.xlu0 %v1961
    %v1963 = vpop.xlane.xlu0 %1962
    %v1964 = vadd.f32 %v1954, %v1963
    %v1965 = vtanh.pop %v541
    %v1966 = vmul.f32 %v1965, %v1921
    %1968 = vrot.lane.b32.xlu0 %v1966, 32
    %v1969 = vpop.permute.xlu0 %1968
    %vm1971 = vcmask 259076
    %v1972 = vsel %vm1971, %v1969, 0.0
    %1973 = vadd.xlane.f32.xlu0 %v1972
    %v1974 = vpop.xlane.xlu0 %1973
    %v1975 = vtanh.pop %v1701
    %v1976 = vmul.f32 %v1975, %v1934
    %1978 = vrot.lane.b32.xlu0 %v1976, 32
    %v1979 = vpop.permute.xlu0 %1978
    %v1981 = vsel %vm1971, %v1979, 0.0
    %1982 = vadd.xlane.f32.xlu0 %v1981
    %v1983 = vpop.xlane.xlu0 %1982
    %v1984 = vadd.f32 %v1974, %v1983
    %v1985 = vtanh.pop %v648
    %v1986 = vmul.f32 %v1985, %v1921
    %1988 = vrot.lane.b32.xlu0 %v1986, 32
    %v1989 = vpop.permute.xlu0 %1988
    %vm1991 = vcmask 261126
    %v1992 = vsel %vm1991, %v1989, 0.0
    %1993 = vadd.xlane.f32.xlu0 %v1992
    %v1994 = vpop.xlane.xlu0 %1993
    %v1995 = vtanh.pop %v1594
    %v1996 = vmul.f32 %v1995, %v1934
    %1998 = vrot.lane.b32.xlu0 %v1996, 32
    %v1999 = vpop.permute.xlu0 %1998
    %v2001 = vsel %vm1991, %v1999, 0.0
    %2002 = vadd.xlane.f32.xlu0 %v2001
    %v2003 = vpop.xlane.xlu0 %2002
    %v2004 = vadd.f32 %v1994, %v2003
    %v2005 = vtanh.pop %v752
    %v2006 = vmul.f32 %v2005, %v1921
    %2008 = vrot.lane.b32.xlu0 %v2006, 32
    %v2009 = vpop.permute.xlu0 %2008
    %v2011 = vsel %vm1928, %v2009, 0.0
    %2012 = vadd.xlane.f32.xlu0 %v2011
    %v2013 = vpop.xlane.xlu0 %2012
    %v2014 = vtanh.pop %v1488
    %v2015 = vmul.f32 %v2014, %v1934
    %2017 = vrot.lane.b32.xlu0 %v2015, 32
    %v2018 = vpop.permute.xlu0 %2017
    %v2020 = vsel %vm1928, %v2018, 0.0
    %2021 = vadd.xlane.f32.xlu0 %v2020
    %v2022 = vpop.xlane.xlu0 %2021
    %v2023 = vadd.f32 %v2013, %v2022
    %v2024 = vtanh.pop %v858
    %v2025 = vmul.f32 %v2024, %v1921
    %2027 = vrot.lane.b32.xlu0 %v2025, 32
    %v2028 = vpop.permute.xlu0 %2027
    %v2030 = vsel %vm1951, %v2028, 0.0
    %2031 = vadd.xlane.f32.xlu0 %v2030
    %v2032 = vpop.xlane.xlu0 %2031
    %v2033 = vtanh.pop %v1384
    %v2034 = vmul.f32 %v2033, %v1934
    %2036 = vrot.lane.b32.xlu0 %v2034, 32
    %v2037 = vpop.permute.xlu0 %2036
    %v2039 = vsel %vm1951, %v2037, 0.0
    %2040 = vadd.xlane.f32.xlu0 %v2039
    %v2041 = vpop.xlane.xlu0 %2040
    %v2042 = vadd.f32 %v2032, %v2041
    %v2043 = vtanh.pop %v965
    %v2044 = vmul.f32 %v2043, %v1921
    %2046 = vrot.lane.b32.xlu0 %v2044, 32
    %v2047 = vpop.permute.xlu0 %2046
    %v2049 = vsel %vm1971, %v2047, 0.0
    %2050 = vadd.xlane.f32.xlu0 %v2049
    %v2051 = vpop.xlane.xlu0 %2050
    %v2052 = vtanh.pop %v1277
    %v2053 = vmul.f32 %v2052, %v1934
    %2055 = vrot.lane.b32.xlu0 %v2053, 32
    %v2056 = vpop.permute.xlu0 %2055
    %v2058 = vsel %vm1971, %v2056, 0.0
    %2059 = vadd.xlane.f32.xlu0 %v2058
    %v2060 = vpop.xlane.xlu0 %2059
    %v2061 = vadd.f32 %v2051, %v2060
    %v2062 = vtanh.pop %v1072
    %v2063 = vmul.f32 %v2062, %v1921
    %2065 = vrot.lane.b32.xlu0 %v2063, 32
    %v2066 = vpop.permute.xlu0 %2065
    %v2068 = vsel %vm1991, %v2066, 0.0
    %2069 = vadd.xlane.f32.xlu0 %v2068
    %v2070 = vpop.xlane.xlu0 %2069
    %v2071 = vtanh.pop %v1170
    %v2072 = vmul.f32 %v2071, %v1934
    %2074 = vrot.lane.b32.xlu0 %v2072, 32
    %v2075 = vpop.permute.xlu0 %2074
    %v2077 = vsel %vm1991, %v2075, 0.0
    %2078 = vadd.xlane.f32.xlu0 %v2077
    %v2079 = vpop.xlane.xlu0 %2078
    %v2080 = vadd.f32 %v2070, %v2079
    %v2082 = vrot.slane %v1964, 2
    %v2084 = vmax.f32 %v1944, %v2082
    %v2086 = vrot.slane %v1984, 4
    %v2088 = vmax.f32 %v2084, %v2086
    %v2090 = vrot.slane %v2004, 6
    %v2092 = vmax.f32 %v2088, %v2090
    %v2093 = vmax.f32 %v2092, %v2023
    %v2095 = vrot.slane %v2042, 2
    %v2097 = vmax.f32 %v2093, %v2095
    %v2099 = vrot.slane %v2061, 4
    %v2101 = vmax.f32 %v2097, %v2099
    %v2103 = vrot.slane %v2080, 6
    %v2105 = vmax.f32 %v2101, %v2103
    %v2106 = vsub.f32 %v1944, %v2105
    %v2107 = vmul.f32 %v2106, 1.442695
    %v2108 = vpow.pop %v2107
    %v2110 = vrot.slane %v2105, 6
    %v2112 = vsub.f32 %v1964, %v2110
    %v2113 = vmul.f32 %v2112, 1.442695
    %v2114 = vpow.pop %v2113
    %v2115 = vrot.slane %v2105, 4
    %v2117 = vsub.f32 %v1984, %v2115
    %v2118 = vmul.f32 %v2117, 1.442695
    %v2119 = vpow.pop %v2118
    %v2120 = vrot.slane %v2105, 2
    %v2122 = vsub.f32 %v2004, %v2120
    %v2123 = vmul.f32 %v2122, 1.442695
    %v2124 = vpow.pop %v2123
    %v2125 = vsub.f32 %v2023, %v2105
    %v2126 = vmul.f32 %v2125, 1.442695
    %v2127 = vpow.pop %v2126
    %v2128 = vsub.f32 %v2042, %v2110
    %v2129 = vmul.f32 %v2128, 1.442695
    %v2130 = vpow.pop %v2129
    %v2131 = vsub.f32 %v2061, %v2115
    %v2132 = vmul.f32 %v2131, 1.442695
    %v2133 = vpow.pop %v2132
    %v2134 = vsub.f32 %v2080, %v2120
    %v2135 = vmul.f32 %v2134, 1.442695
    %v2136 = vpow.pop %v2135
    %v2138 = vrot.slane %v2114, 2
    %v2140 = vadd.f32 %v2108, %v2138
    %v2142 = vrot.slane %v2119, 4
    %v2144 = vadd.f32 %v2140, %v2142
    %v2146 = vrot.slane %v2124, 6
    %v2148 = vadd.f32 %v2144, %v2146
    %v2149 = vadd.f32 %v2148, %v2127
    %v2151 = vrot.slane %v2130, 2
    %v2153 = vadd.f32 %v2149, %v2151
    %v2155 = vrot.slane %v2133, 4
    %v2157 = vadd.f32 %v2153, %v2155
    %v2159 = vrot.slane %v2136, 6
    %v2161 = vadd.f32 %v2157, %v2159
    %v2162 = vrcp.pop %v2161
    %v2163 = vmul.f32 %v2108, %v2162
    %2165 = vset.pattern.permute.xlu0 0
    %2166 = vperm.xlu0 %2165, %v2163
    %v2167 = vpop.permute.xlu0 %2166
    %v2169 = vmul.f32 %v2167, %v328
    %v2170 = vadd.f32 %v2169, 0.0
    %v2171 = vmul.f32 %v2167, %v1912
    %v2172 = vadd.f32 %v2171, 0.0
    %v2174 = vrot.slane %v2162, 6
    %v2176 = vmul.f32 %v2114, %v2174
    %2178 = vset.pattern.permute.xlu0 0
    %2179 = vperm.xlu0 %2178, %v2176
    %v2180 = vpop.permute.xlu0 %2179
    %v2182 = vmul.f32 %v2180, %v434
    %v2184 = vrot.slane %v2182, 2
    %v2186 = vadd.f32 %v2170, %v2184
    %v2187 = vmul.f32 %v2180, %v1808
    %v2189 = vrot.slane %v2187, 2
    %v2191 = vadd.f32 %v2172, %v2189
    %v2192 = vrot.slane %v2162, 4
    %v2194 = vmul.f32 %v2119, %v2192
    %2196 = vset.pattern.permute.xlu0 0
    %2197 = vperm.xlu0 %2196, %v2194
    %v2198 = vpop.permute.xlu0 %2197
    %v2200 = vmul.f32 %v2198, %v541
    %v2202 = vrot.slane %v2200, 4
    %v2204 = vadd.f32 %v2186, %v2202
    %v2205 = vmul.f32 %v2198, %v1701
    %v2207 = vrot.slane %v2205, 4
    %v2209 = vadd.f32 %v2191, %v2207
    %v2210 = vrot.slane %v2162, 2
    %v2212 = vmul.f32 %v2124, %v2210
    %2214 = vset.pattern.permute.xlu0 0
    %2215 = vperm.xlu0 %2214, %v2212
    %v2216 = vpop.permute.xlu0 %2215
    %v2218 = vmul.f32 %v2216, %v648
    %v2220 = vrot.slane %v2218, 6
    %v2222 = vadd.f32 %v2204, %v2220
    %v2223 = vmul.f32 %v2216, %v1594
    %v2225 = vrot.slane %v2223, 6
    %v2227 = vadd.f32 %v2209, %v2225
    %v2228 = vmul.f32 %v2127, %v2162
    %2230 = vset.pattern.permute.xlu0 0
    %2231 = vperm.xlu0 %2230, %v2228
    %v2232 = vpop.permute.xlu0 %2231
    %v2234 = vmul.f32 %v2232, %v752
    %v2235 = vadd.f32 %v2222, %v2234
    %v2236 = vmul.f32 %v2232, %v1488
    %v2237 = vadd.f32 %v2227, %v2236
    %v2238 = vmul.f32 %v2130, %v2174
    %2240 = vset.pattern.permute.xlu0 0
    %2241 = vperm.xlu0 %2240, %v2238
    %v2242 = vpop.permute.xlu0 %2241
    %v2244 = vmul.f32 %v2242, %v858
    %v2246 = vrot.slane %v2244, 2
    %v2248 = vadd.f32 %v2235, %v2246
    %v2249 = vmul.f32 %v2242, %v1384
    %v2251 = vrot.slane %v2249, 2
    %v2253 = vadd.f32 %v2237, %v2251
    %v2254 = vmul.f32 %v2133, %v2192
    %2256 = vset.pattern.permute.xlu0 0
    %2257 = vperm.xlu0 %2256, %v2254
    %v2258 = vpop.permute.xlu0 %2257
    %v2260 = vmul.f32 %v2258, %v965
    %v2262 = vrot.slane %v2260, 4
    %v2264 = vadd.f32 %v2248, %v2262
    %v2265 = vmul.f32 %v2258, %v1277
    %v2267 = vrot.slane %v2265, 4
    %v2269 = vadd.f32 %v2253, %v2267
    %v2270 = vmul.f32 %v2136, %v2210
    %2272 = vset.pattern.permute.xlu0 0
    %2273 = vperm.xlu0 %2272, %v2270
    %v2274 = vpop.permute.xlu0 %2273
    %v2276 = vmul.f32 %v2274, %v1072
    %v2278 = vrot.slane %v2276, 6
    %v2280 = vadd.f32 %v2264, %v2278
    %v2281 = vmul.f32 %v2274, %v1170
    %v2283 = vrot.slane %v2281, 6
    %v2285 = vadd.f32 %v2269, %v2283
    %v2286 = vmax.f32 %v2280, 0.0
    %v2287 = vmax.f32 %v2285, 0.0
    %v2288 = vld [vmem:[%s8] sm:$0xff]
    %v2289 = vld [vmem:[%s8 + $0x8] sm:$0xff]
    %v2290 = vld [vmem:[%s8 + $0x10] sm:$0xff]
    %v2291 = vld [vmem:[%s8 + $0x18] sm:$0xff]
    %v2292 = vld [vmem:[%s8 + $0x20] sm:$0xff]
    %v2293 = vld [vmem:[%s8 + $0x28] sm:$0xff]
    %v2294 = vld [vmem:[%s8 + $0x30] sm:$0xff]
    %v2295 = vld [vmem:[%s8 + $0x38] sm:$0xff]
    %2297 = vrot.lane.b32.xlu0 %v2287, 32
    %v2298 = vpop.permute.xlu0 %2297
    %v2299 = vsel %vm55, %v2298, 0
    %2301 = vmatprep.subr.mxu0 0.0
    %2302 = vmatpush1.msra.mxu0 0.0
    %2303 = vmatprep.subr.mxu0 0.0
    %2304 = vmatpush1.msra.mxu0 0.0
    %2305 = vmatprep.subr.mxu0 0.0
    %2306 = vmatpush1.msra.mxu0 0.0
    %2307 = vmatprep.subr.mxu0 0.0
    %2308 = vmatpush1.msra.mxu0 0.0
    %2309 = vmatprep.subr.mxu0 0.0
    %2310 = vmatpush1.msra.mxu0 0.0
    %2311 = vmatprep.subr.mxu0 0.0
    %2312 = vmatpush1.msra.mxu0 0.0
    %2313 = vmatprep.subr.mxu0 0.0
    %2314 = vmatpush1.msra.mxu0 0.0
    %2315 = vmatprep.subr.mxu0 0.0
    %2316 = vmatpush1.msra.mxu0 0.0
    %2317 = vmatprep.subr.mxu0 0.0
    %2318 = vmatpush1.msra.mxu0 0.0
    %2319 = vmatprep.subr.mxu0 0.0
    %2320 = vmatpush1.msra.mxu0 0.0
    %2321 = vmatprep.subr.mxu0 0.0
    %2322 = vmatpush1.msra.mxu0 0.0
    %2323 = vmatprep.subr.mxu0 0.0
    %2324 = vmatpush1.msra.mxu0 0.0
    %2325 = vmatprep.subr.mxu0 0.0
    %2326 = vmatpush1.msra.mxu0 %v2295
    %2327 = vmatprep.subr.mxu0 0.0
    %2328 = vmatpush1.msra.mxu0 %v2294
    %2329 = vmatprep.subr.mxu0 0.0
    %2330 = vmatpush1.msra.mxu0 %v2293
    %2331 = vmatprep.subr.mxu0 0.0
    %2332 = vmatpush1.msra.mxu0 %v2292
    %2333 = vmatprep.subr.mxu0 0.0
    %2334 = vmatpush2.msra.mxu0 0.0
    %2335 = vmatprep.subr.mxu0 0.0
    %2336 = vmatpush2.msra.mxu0 0.0
    %2337 = vmatprep.subr.mxu0 0.0
    %2338 = vmatpush2.msra.mxu0 0.0
    %2339 = vmatprep.subr.mxu0 0.0
    %2340 = vmatpush2.msra.mxu0 0.0
    %2341 = vmatprep.subr.mxu0 0.0
    %2342 = vmatpush2.msra.mxu0 0.0
    %2343 = vmatprep.subr.mxu0 0.0
    %2344 = vmatpush2.msra.mxu0 0.0
    %2345 = vmatprep.subr.mxu0 0.0
    %2346 = vmatpush2.msra.mxu0 0.0
    %2347 = vmatprep.subr.mxu0 0.0
    %2348 = vmatpush2.msra.mxu0 0.0
    %2349 = vmatprep.subr.mxu0 0.0
    %2350 = vmatpush2.msra.mxu0 0.0
    %2351 = vmatprep.subr.mxu0 0.0
    %2352 = vmatpush2.msra.mxu0 0.0
    %2353 = vmatprep.subr.mxu0 0.0
    %2354 = vmatpush2.msra.mxu0 0.0
    %2355 = vmatprep.subr.mxu0 0.0
    %2356 = vmatpush2.msra.mxu0 0.0
    %2357 = vmatprep.subr.mxu0 0.0
    %2358 = vmatpush2.msra.mxu0 0.0
    %2359 = vmatprep.subr.mxu0 0.0
    %2360 = vmatpush2.msra.mxu0 0.0
    %2361 = vmatprep.subr.mxu0 0.0
    %2362 = vmatpush2.msra.mxu0 0.0
    %2363 = vmatprep.subr.mxu0 0.0
    %2364 = vmatpush2.msra.mxu0 0.0
    %2365 = vmatprep.mubr.f32.mxu0 0.0
    %2366 = vmatmul.mubr.f32.gmra.mxu0 %v2299
    %v2367 = vpop.f32.mrf.mxu0
    %v2368 = vadd.f32 0.0, %v2367
    %v2369 = vpop.f32.mrf.mxu0
    %2370 = vdwg.mxu0
    %2372 = vrot.lane.b32.xlu0 %v2286, 32
    %v2373 = vpop.permute.xlu0 %2372
    %v2374 = vsel %vm55, %v2373, 0
    %2376 = vmatprep.subr.mxu0 0.0
    %2377 = vmatpush1.msra.mxu0 0.0
    %2378 = vmatprep.subr.mxu0 0.0
    %2379 = vmatpush1.msra.mxu0 0.0
    %2380 = vmatprep.subr.mxu0 0.0
    %2381 = vmatpush1.msra.mxu0 0.0
    %2382 = vmatprep.subr.mxu0 0.0
    %2383 = vmatpush1.msra.mxu0 0.0
    %2384 = vmatprep.subr.mxu0 0.0
    %2385 = vmatpush1.msra.mxu0 0.0
    %2386 = vmatprep.subr.mxu0 0.0
    %2387 = vmatpush1.msra.mxu0 0.0
    %2388 = vmatprep.subr.mxu0 0.0
    %2389 = vmatpush1.msra.mxu0 0.0
    %2390 = vmatprep.subr.mxu0 0.0
    %2391 = vmatpush1.msra.mxu0 0.0
    %2392 = vmatprep.subr.mxu0 0.0
    %2393 = vmatpush1.msra.mxu0 0.0
    %2394 = vmatprep.subr.mxu0 0.0
    %2395 = vmatpush1.msra.mxu0 0.0
    %2396 = vmatprep.subr.mxu0 0.0
    %2397 = vmatpush1.msra.mxu0 0.0
    %2398 = vmatprep.subr.mxu0 0.0
    %2399 = vmatpush1.msra.mxu0 0.0
    %2400 = vmatprep.subr.mxu0 0.0
    %2401 = vmatpush1.msra.mxu0 %v2291
    %2402 = vmatprep.subr.mxu0 0.0
    %2403 = vmatpush1.msra.mxu0 %v2290
    %2404 = vmatprep.subr.mxu0 0.0
    %2405 = vmatpush1.msra.mxu0 %v2289
    %2406 = vmatprep.subr.mxu0 0.0
    %2407 = vmatpush1.msra.mxu0 %v2288
    %2408 = vmatprep.subr.mxu0 0.0
    %2409 = vmatpush2.msra.mxu0 0.0
    %2410 = vmatprep.subr.mxu0 0.0
    %2411 = vmatpush2.msra.mxu0 0.0
    %2412 = vmatprep.subr.mxu0 0.0
    %2413 = vmatpush2.msra.mxu0 0.0
    %2414 = vmatprep.subr.mxu0 0.0
    %2415 = vmatpush2.msra.mxu0 0.0
    %2416 = vmatprep.subr.mxu0 0.0
    %2417 = vmatpush2.msra.mxu0 0.0
    %2418 = vmatprep.subr.mxu0 0.0
    %2419 = vmatpush2.msra.mxu0 0.0
    %2420 = vmatprep.subr.mxu0 0.0
    %2421 = vmatpush2.msra.mxu0 0.0
    %2422 = vmatprep.subr.mxu0 0.0
    %2423 = vmatpush2.msra.mxu0 0.0
    %2424 = vmatprep.subr.mxu0 0.0
    %2425 = vmatpush2.msra.mxu0 0.0
    %2426 = vmatprep.subr.mxu0 0.0
    %2427 = vmatpush2.msra.mxu0 0.0
    %2428 = vmatprep.subr.mxu0 0.0
    %2429 = vmatpush2.msra.mxu0 0.0
    %2430 = vmatprep.subr.mxu0 0.0
    %2431 = vmatpush2.msra.mxu0 0.0
    %2432 = vmatprep.subr.mxu0 0.0
    %2433 = vmatpush2.msra.mxu0 0.0
    %2434 = vmatprep.subr.mxu0 0.0
    %2435 = vmatpush2.msra.mxu0 0.0
    %2436 = vmatprep.subr.mxu0 0.0
    %2437 = vmatpush2.msra.mxu0 0.0
    %2438 = vmatprep.subr.mxu0 0.0
    %2439 = vmatpush2.msra.mxu0 0.0
    %2440 = vmatprep.mubr.f32.mxu0 0.0
    %2441 = vmatmul.mubr.f32.gmra.mxu0 %v2374
    %v2442 = vpop.f32.mrf.mxu0
    %v2443 = vadd.f32 %v2368, %v2442
    %v2444 = vpop.f32.mrf.mxu0
    %2445 = vdwg.mxu0
    %v2446 = vld [vmem:[%s9] sm:$0x1]
    %v2448 = vlaneseq
    %v2449 = vshrl.u32 %v2448, 7
    %v2450 = vsub.s32 0, %v2449
    %v2451 = vrot.slane %v2446, %v2450
    %v2453 = vadd.f32 %v2443, %v2451
    %v2454 = vld [vmem:[%s10] sm:$0xff]
    %v2455 = vld [vmem:[%s10 + $0x8] sm:$0xff]
    %v2456 = vld [vmem:[%s10 + $0x10] sm:$0xff]
    %v2457 = vld [vmem:[%s10 + $0x18] sm:$0xff]
    %v2458 = vld [vmem:[%s10 + $0x20] sm:$0xff]
    %v2459 = vld [vmem:[%s10 + $0x28] sm:$0xff]
    %v2460 = vld [vmem:[%s10 + $0x30] sm:$0xff]
    %v2461 = vld [vmem:[%s10 + $0x38] sm:$0xff]
    %v2462 = vld [vmem:[%s11] sm:$0x1]
    %v2464 = vlaneseq
    %v2465 = vshrl.u32 %v2464, 7
    %v2466 = vsub.s32 0, %v2465
    %v2467 = vrot.slane %v2462, %v2466
    %vm2469 = vcmask 523264
    %v2471 = vsel %vm2469, %v2453, 0
    %2473 = vmatprep.subr.mxu0 0.0
    %2474 = vmatpush1.msra.mxu0 0.0
    %2475 = vmatprep.subr.mxu0 0.0
    %2476 = vmatpush1.msra.mxu0 0.0
    %2477 = vmatprep.subr.mxu0 0.0
    %2478 = vmatpush1.msra.mxu0 0.0
    %2479 = vmatprep.subr.mxu0 0.0
    %2480 = vmatpush1.msra.mxu0 0.0
    %2481 = vmatprep.subr.mxu0 0.0
    %2482 = vmatpush1.msra.mxu0 0.0
    %2483 = vmatprep.subr.mxu0 0.0
    %2484 = vmatpush1.msra.mxu0 0.0
    %2485 = vmatprep.subr.mxu0 0.0
    %2486 = vmatpush1.msra.mxu0 0.0
    %2487 = vmatprep.subr.mxu0 0.0
    %2488 = vmatpush1.msra.mxu0 0.0
    %2489 = vmatprep.subr.mxu0 0.0
    %2490 = vmatpush1.msra.mxu0 %v2461
    %2491 = vmatprep.subr.mxu0 0.0
    %2492 = vmatpush1.msra.mxu0 %v2460
    %2493 = vmatprep.subr.mxu0 0.0
    %2494 = vmatpush1.msra.mxu0 %v2459
    %2495 = vmatprep.subr.mxu0 0.0
    %2496 = vmatpush1.msra.mxu0 %v2458
    %2497 = vmatprep.subr.mxu0 0.0
    %2498 = vmatpush1.msra.mxu0 %v2457
    %2499 = vmatprep.subr.mxu0 0.0
    %2500 = vmatpush1.msra.mxu0 %v2456
    %2501 = vmatprep.subr.mxu0 0.0
    %2502 = vmatpush1.msra.mxu0 %v2455
    %2503 = vmatprep.subr.mxu0 0.0
    %2504 = vmatpush1.msra.mxu0 %v2454
    %2505 = vmatprep.subr.mxu0 0.0
    %2506 = vmatpush2.msra.mxu0 0.0
    %2507 = vmatprep.subr.mxu0 0.0
    %2508 = vmatpush2.msra.mxu0 0.0
    %2509 = vmatprep.subr.mxu0 0.0
    %2510 = vmatpush2.msra.mxu0 0.0
    %2511 = vmatprep.subr.mxu0 0.0
    %2512 = vmatpush2.msra.mxu0 0.0
    %2513 = vmatprep.subr.mxu0 0.0
    %2514 = vmatpush2.msra.mxu0 0.0
    %2515 = vmatprep.subr.mxu0 0.0
    %2516 = vmatpush2.msra.mxu0 0.0
    %2517 = vmatprep.subr.mxu0 0.0
    %2518 = vmatpush2.msra.mxu0 0.0
    %2519 = vmatprep.subr.mxu0 0.0
    %2520 = vmatpush2.msra.mxu0 0.0
    %2521 = vmatprep.subr.mxu0 0.0
    %2522 = vmatpush2.msra.mxu0 0.0
    %2523 = vmatprep.subr.mxu0 0.0
    %2524 = vmatpush2.msra.mxu0 0.0
    %2525 = vmatprep.subr.mxu0 0.0
    %2526 = vmatpush2.msra.mxu0 0.0
    %2527 = vmatprep.subr.mxu0 0.0
    %2528 = vmatpush2.msra.mxu0 0.0
    %2529 = vmatprep.subr.mxu0 0.0
    %2530 = vmatpush2.msra.mxu0 0.0
    %2531 = vmatprep.subr.mxu0 0.0
    %2532 = vmatpush2.msra.mxu0 0.0
    %2533 = vmatprep.subr.mxu0 0.0
    %2534 = vmatpush2.msra.mxu0 0.0
    %2535 = vmatprep.subr.mxu0 0.0
    %2536 = vmatpush2.msra.mxu0 0.0
    %2537 = vmatprep.mubr.f32.mxu0 0.0
    %2538 = vmatmul.mubr.f32.gmra.mxu0 %v2471
    %v2539 = vpop.f32.mrf.mxu0
    %v2540 = vadd.f32 %v2467, %v2539
    %v2541 = vpop.f32.mrf.mxu0
    %2542 = vdwg.mxu0
    %vm2543 = vcmask 25600
    %2544 = vst.msk [vmem:[#allocation2] sm:$0x3] %vm2543, %v2540
    // Predicated region
    $region50: #{model_forward.1} parent=1 // pred_check
      _
    $region51: #{model_forward.1} parent=1 // pred_check_branch
      %2546 = sbr.rel (0) target = $region53
    $region52: #{model_forward.1} parent=1 // pred_region
      %s2548 = ssub.s32 32, 32
      %2549 = vsyncadd [#allocation3], %s2548
      %s2551 = sshll.u32 [#allocation2], 4
      %s2552 = int_to_ptr.vmem [resolvable:$true] %s2551
      %2554 = dma.vmem_to_hbm [thread:$0]  %s2552, 32, %s12, [#allocation3]
    $region53: #{model_forward.1} parent=1 // pred_fallthru
      _
    // Predicated region
    $region54: #{model_forward.1} parent=1 // pred_check
      _
    $region55: #{model_forward.1} parent=1 // pred_check_branch
      %2556 = sbr.rel (0) target = $region57
    $region56: #{model_forward.1} parent=1 // pred_region
      %2557 = dma.done [#allocation3], 32
    $region57: #{model_forward.1} parent=1 // pred_fallthru
      _
    %2558 = vsyncpa [#allocation3], 1

</llo_original>
